<compile_context>
chip_gen: v6e
topology: v6e:2x2x1
jax: 0.10.0
libtpu: 0.0.40
codegen_flags: <defaults>
</compile_context>

<pallas_src>
from functools import partial

import jax
import jax.numpy as jnp
from jax.experimental import pallas as pl
from jax.experimental.pallas import tpu as pltpu

_BN_EPS = 1e-5
_ALIGN = 8  # sublane-aligned offset at which the un-padded image is written


# ----------------------------------------------------------------------------
# Kernel
# ----------------------------------------------------------------------------
def _make_block_kernel(h, w, cin, c1, c2, stride, has_shortcut):
    """Builds the fused BasicBlock kernel for one image per grid step."""
    ho = (h - 1) // stride + 1
    wo = (w - 1) // stride + 1
    p = ho * wo  # number of output pixels

    def pad_and_im2col(pad_ref, img, hh, ww, c):
        # Zero-pad `img` (hh, ww, c) by 1 using an aligned VMEM scratch and
        # return the (hh*ww, 9*c) im2col patch matrix of a stride-1 3x3 conv.
        pad_ref[...] = jnp.zeros_like(pad_ref)
        pad_ref[_ALIGN:_ALIGN + hh, _ALIGN:_ALIGN + ww, :] = img
        xp = pad_ref[...]
        o = _ALIGN - 1  # conceptual padded-image origin inside the scratch
        taps = [xp[o + kh:o + kh + hh, o + kw:o + kw + ww, :]
                for kh in range(3) for kw in range(3)]
        return jnp.concatenate(taps, axis=-1).reshape(hh * ww, 9 * c)

    def kernel(*refs):
        if has_shortcut:
            (x_ref, w1_ref, s1_ref, b1_ref, w2_ref, s2_ref, b2_ref,
             ws_ref, ss_ref, bs_ref, o_ref, *scratch) = refs
        else:
            (x_ref, w1_ref, s1_ref, b1_ref, w2_ref, s2_ref, b2_ref,
             o_ref, *scratch) = refs
            ws_ref = ss_ref = bs_ref = None
        if stride == 1:
            pad1_ref, pad2_ref = scratch
        else:
            (pad2_ref,) = scratch

        # ---- conv1 (3x3, stride) + bn1 + relu: one im2col matmul ------------
        if stride == 1:
            x = x_ref[0].astype(jnp.float32)            # (h, w, cin)
            patches1 = pad_and_im2col(pad1_ref, x, h, w, cin)
            x_sc = x                                    # shortcut input
        else:
            # x_ref holds the 4 polyphase slabs of the zero-padded image, so
            # only the strided output pixels are ever computed:
            #   phases[2*(r%2) + (c%2)][i, j] == xpad[2*i + r%2, 2*j + c%2]
            phases = x_ref[...].astype(jnp.float32)     # (4, ho+1, wo+1, cin)
            taps = [phases[2 * (kh % 2) + (kw % 2),
                           kh // 2:kh // 2 + ho, kw // 2:kw // 2 + wo, :]
                    for kh in range(3) for kw in range(3)]
            patches1 = jnp.concatenate(taps, axis=-1).reshape(p, 9 * cin)
            # x[::2, ::2] (input of the strided 1x1 shortcut) is phase (1, 1).
            x_sc = phases[3, 0:ho, 0:wo, :]

        h1 = jnp.dot(patches1, w1_ref[...], preferred_element_type=jnp.float32)
        h1 = jnp.maximum(h1 * s1_ref[...] + b1_ref[...], 0.0)       # (p, c1)

        # ---- conv2 (3x3, stride 1) + bn2 ------------------------------------
        patches2 = pad_and_im2col(pad2_ref, h1.reshape(ho, wo, c1), ho, wo, c1)
        out = jnp.dot(patches2, w2_ref[...], preferred_element_type=jnp.float32)
        out = out * s2_ref[...] + b2_ref[...]                        # (p, c2)

        # ---- shortcut + residual add + final relu ---------------------------
        if has_shortcut:
            sc = jnp.dot(x_sc.reshape(p, cin), ws_ref[...],
                         preferred_element_type=jnp.float32)
            sc = sc * ss_ref[...] + bs_ref[...]
        else:
            sc = x_sc.reshape(p, cin)                                # cin == c2
        out = jnp.maximum(out + sc, 0.0)

        # Lane-dense NCHW store: (c2, ho*wo) with the pixel axis on lanes.
        o_ref[0] = out.T.astype(o_ref.dtype)

    return kernel


# ----------------------------------------------------------------------------
# Wrapper
# ----------------------------------------------------------------------------
def _first_axis_map(ndim):
    return lambda b, _n=ndim: (b,) + (0,) * (_n - 1)


def _whole_array_spec(shape):
    n = len(shape)
    return pl.BlockSpec(shape, lambda b, _n=n: (0,) * _n)


@partial(jax.jit, static_argnames=("stride", "has_shortcut"))
def _basic_block_fwd(x_nchw, w1_2d, s1, b1, w2_2d, s2, b2, ws, ss, bs, *,
                     stride, has_shortcut):
    n, cin, h, w = x_nchw.shape
    c1 = w1_2d.shape[1]
    c2 = w2_2d.shape[1]
    ho = (h - 1) // stride + 1
    wo = (w - 1) // stride + 1

    x = jnp.transpose(x_nchw, (0, 2, 3, 1)).astype(jnp.float32)  # NCHW -> NHWC
    if stride == 1:
        xin = x
        x_block = (1, h, w, cin)
    else:
        assert stride == 2 and h % 2 == 0 and w % 2 == 0, (stride, h, w)
        xpad = jnp.pad(x, ((0, 0), (1, 1), (1, 1), (0, 0)))
        # 4 polyphase slabs of the padded image, folded into the batch axis:
        # xin[4*b + 2*pp + qq] = xpad[b, pp::2, qq::2, :]
        xin = jnp.stack([xpad[:, pp::2, qq::2, :]
                         for pp in (0, 1) for qq in (0, 1)],
                        axis=1).reshape(n * 4, ho + 1, wo + 1, cin)
        x_block = (4, ho + 1, wo + 1, cin)

    args = [xin, w1_2d, s1.reshape(1, c1), b1.reshape(1, c1),
            w2_2d, s2.reshape(1, c2), b2.reshape(1, c2)]
    in_specs = [pl.BlockSpec(x_block, _first_axis_map(len(x_block)))]
    in_specs += [_whole_array_spec(a.shape) for a in args[1:]]
    if has_shortcut:
        extra = [ws, ss.reshape(1, c2), bs.reshape(1, c2)]
        args += extra
        in_specs += [_whole_array_spec(a.shape) for a in extra]

    scratch_shapes = []
    if stride == 1:
        scratch_shapes.append(
            pltpu.VMEM((h + _ALIGN + 1, w + _ALIGN + 1, cin), jnp.float32))
    scratch_shapes.append(
        pltpu.VMEM((ho + _ALIGN + 1, wo + _ALIGN + 1, c1), jnp.float32))

    kernel = _make_block_kernel(h, w, cin, c1, c2, stride, has_shortcut)
    out = pl.pallas_call(
        kernel,
        grid=(n,),
        in_specs=in_specs,
        out_specs=pl.BlockSpec((1, c2, ho * wo), lambda b: (b, 0, 0)),
        out_shape=jax.ShapeDtypeStruct((n, c2, ho * wo), jnp.float32),
        scratch_shapes=scratch_shapes,
        compiler_params=pltpu.CompilerParams(
            dimension_semantics=("parallel",)),  # both TensorCores on v7x
    )(*args)
    return out.reshape(n, c2, ho, wo)            # already NCHW-ordered


# ----------------------------------------------------------------------------
# Parameters (eval-mode BatchNorm folded to scale/bias)
# ----------------------------------------------------------------------------
def _fold_bn(gamma, beta, mean, var):
    scale = gamma / jnp.sqrt(var + _BN_EPS)
    return scale, beta - mean * scale


def _init_bn(key, c):
    k1, k2, k3, k4 = jax.random.split(key, 4)
    gamma = 1.0 + 0.1 * jax.random.normal(k1, (c,), jnp.float32)
    beta = 0.1 * jax.random.normal(k2, (c,), jnp.float32)
    mean = 0.1 * jax.random.normal(k3, (c,), jnp.float32)
    var = jax.random.uniform(k4, (c,), jnp.float32, minval=0.5, maxval=1.5)
    return _fold_bn(gamma, beta, mean, var)


class BasicBlockPallas:
    expansion = 1

    def __init__(self, in_planes, planes, stride=1, *, key):
        keys = jax.random.split(key, 6)
        self.stride = stride
        self.in_planes = in_planes
        self.planes = planes
        self.w1 = 0.1 * jax.random.normal(keys[0], (3, 3, in_planes, planes), jnp.float32)
        self.s1, self.b1 = _init_bn(keys[1], planes)
        self.w2 = 0.1 * jax.random.normal(keys[2], (3, 3, planes, planes), jnp.float32)
        self.s2, self.b2 = _init_bn(keys[3], planes)
        self.has_shortcut = stride != 1 or in_planes != self.expansion * planes
        if self.has_shortcut:
            self.ws = 0.1 * jax.random.normal(
                keys[4], (in_planes, self.expansion * planes), jnp.float32)
            self.ss, self.bs = _init_bn(keys[5], self.expansion * planes)
        else:
            self.ws = self.ss = self.bs = None

    def __call__(self, x_nchw):
        cin, c1 = self.in_planes, self.planes
        c2 = self.expansion * self.planes
        return _basic_block_fwd(
            x_nchw,
            self.w1.reshape(9 * cin, c1), self.s1, self.b1,
            self.w2.reshape(9 * c1, c2), self.s2, self.b2,
            self.ws, self.ss, self.bs,
            stride=self.stride, has_shortcut=self.has_shortcut)


# ----------------------------------------------------------------------------
# Pure-JAX (XLA conv) reference for correctness checking
# ----------------------------------------------------------------------------
def _ref_forward(block, x_nchw):
    x = jnp.transpose(x_nchw, (0, 2, 3, 1))

    def conv3x3(inp, w, s):
        return jax.lax.conv_general_dilated(
            inp, w, window_strides=(s, s), padding=((1, 1), (1, 1)),
            dimension_numbers=("NHWC", "HWIO", "NHWC"))

    out = conv3x3(x, block.w1, block.stride) * block.s1 + block.b1
    out = jnp.maximum(out, 0.0)
    out = conv3x3(out, block.w2, 1) * block.s2 + block.b2
    if block.has_shortcut:
        sc = jax.lax.conv_general_dilated(
            x, block.ws.reshape(1, 1, *block.ws.shape),
            window_strides=(block.stride, block.stride), padding="VALID",
            dimension_numbers=("NHWC", "HWIO", "NHWC"))
        sc = sc * block.ss + block.bs
    else:
        sc = x
    out = jnp.maximum(out + sc, 0.0)
    return jnp.transpose(out, (0, 3, 1, 2))


if __name__ == "__main__":
    key = jax.random.PRNGKey(0)
    kx, kb1, kb2 = jax.random.split(key, 3)
    x = jax.random.normal(kx, (2, 4, 16, 16), jnp.float32)   # NCHW like PyTorch

    # identity-shortcut block: BasicBlock(4, 4, stride=1)
    blk1 = BasicBlockPallas(4, 4, stride=1, key=kb1)
    y1 = jax.block_until_ready(blk1(x))
    # projection-shortcut block: BasicBlock(4, 8, stride=2)
    blk2 = BasicBlockPallas(4, 8, stride=2, key=kb2)
    y2 = jax.block_until_ready(blk2(x))

    assert y1.shape == (2, 4, 16, 16), y1.shape
    assert y2.shape == (2, 8, 8, 8), y2.shape

    r1 = _ref_forward(blk1, x)
    r2 = _ref_forward(blk2, x)
    assert jnp.allclose(y1, r1, atol=1e-2, rtol=1e-2), float(jnp.max(jnp.abs(y1 - r1)))
    assert jnp.allclose(y2, r2, atol=1e-2, rtol=1e-2), float(jnp.max(jnp.abs(y2 - r2)))

    print("KERNEL_OK")
</pallas_src>

<mosaic_0001>
module attributes {stable_mosaic.version = 11 : i64} {
  func.func @kernel(%arg0: i32, %arg1: memref<1x16x16x4xf32, #tpu.memory_space<vmem>>, %arg2: memref<36x4xf32, #tpu.memory_space<vmem>>, %arg3: memref<1x4xf32, #tpu.memory_space<vmem>>, %arg4: memref<1x4xf32, #tpu.memory_space<vmem>>, %arg5: memref<36x4xf32, #tpu.memory_space<vmem>>, %arg6: memref<1x4xf32, #tpu.memory_space<vmem>>, %arg7: memref<1x4xf32, #tpu.memory_space<vmem>>, %arg8: memref<1x4x256xf32, #tpu.memory_space<vmem>>, %arg9: memref<25x25x4xf32, #tpu.memory_space<vmem>>, %arg10: memref<25x25x4xf32, #tpu.memory_space<vmem>>) attributes {dimension_semantics = [#tpu.dimension_semantics<parallel>], iteration_bounds = array<i64: 2>, scalar_prefetch = 0 : i64, scratch_operands = 2 : i64, tpu.core_type = #tpu.core_type<tc>, window_params = [{transform_indices = @transform_0, window_bounds = array<i64: 1, 16, 16, 4>}, {pipeline_mode = #tpu.pipeline_mode<synchronous>, transform_indices = @transform_1, window_bounds = array<i64: 36, 4>}, {pipeline_mode = #tpu.pipeline_mode<synchronous>, transform_indices = @transform_2, window_bounds = array<i64: 1, 4>}, {pipeline_mode = #tpu.pipeline_mode<synchronous>, transform_indices = @transform_3, window_bounds = array<i64: 1, 4>}, {pipeline_mode = #tpu.pipeline_mode<synchronous>, transform_indices = @transform_4, window_bounds = array<i64: 36, 4>}, {pipeline_mode = #tpu.pipeline_mode<synchronous>, transform_indices = @transform_5, window_bounds = array<i64: 1, 4>}, {pipeline_mode = #tpu.pipeline_mode<synchronous>, transform_indices = @transform_6, window_bounds = array<i64: 1, 4>}, {transform_indices = @transform_7, window_bounds = array<i64: 1, 4, 256>}]} {
    %c0 = arith.constant 0 : index
    %c0_0 = arith.constant 0 : index
    %c0_1 = arith.constant 0 : index
    %c0_2 = arith.constant 0 : index
    %0 = vector.load %arg1[%c0, %c0_0, %c0_1, %c0_2] : memref<1x16x16x4xf32, #tpu.memory_space<vmem>>, vector<1x16x16x4xf32>
    %1 = vector.shape_cast %0 : vector<1x16x16x4xf32> to vector<16x16x4xf32>
    %cst = arith.constant 0.000000e+00 : f32
    %2 = vector.broadcast %cst : f32 to vector<25x25x4xf32>
    %c0_3 = arith.constant 0 : index
    %c0_4 = arith.constant 0 : index
    %c0_5 = arith.constant 0 : index
    %3 = vector.load %arg9[%c0_3, %c0_4, %c0_5] : memref<25x25x4xf32, #tpu.memory_space<vmem>>, vector<25x25x4xf32>
    tpu.vector_store %arg9[%c0_3, %c0_4, %c0_5], %2 {strides = array<i32>} : memref<25x25x4xf32, #tpu.memory_space<vmem>>, vector<25x25x4xf32>,
    %c8 = arith.constant 8 : index
    %c8_6 = arith.constant 8 : index
    %c0_7 = arith.constant 0 : index
    %4 = vector.load %arg9[%c8, %c8_6, %c0_7] : memref<25x25x4xf32, #tpu.memory_space<vmem>>, vector<16x16x4xf32>
    tpu.vector_store %arg9[%c8, %c8_6, %c0_7], %1 {strides = array<i32>} : memref<25x25x4xf32, #tpu.memory_space<vmem>>, vector<16x16x4xf32>,
    %c0_8 = arith.constant 0 : index
    %c0_9 = arith.constant 0 : index
    %c0_10 = arith.constant 0 : index
    %5 = vector.load %arg9[%c0_8, %c0_9, %c0_10] : memref<25x25x4xf32, #tpu.memory_space<vmem>>, vector<25x25x4xf32>
    %6 = vector.extract_strided_slice %5 {offsets = [7, 7, 0], sizes = [16, 16, 4], strides = [1, 1, 1]} : vector<25x25x4xf32> to vector<16x16x4xf32>
    %7 = vector.extract_strided_slice %5 {offsets = [7, 8, 0], sizes = [16, 16, 4], strides = [1, 1, 1]} : vector<25x25x4xf32> to vector<16x16x4xf32>
    %8 = vector.extract_strided_slice %5 {offsets = [7, 9, 0], sizes = [16, 16, 4], strides = [1, 1, 1]} : vector<25x25x4xf32> to vector<16x16x4xf32>
    %9 = vector.extract_strided_slice %5 {offsets = [8, 7, 0], sizes = [16, 16, 4], strides = [1, 1, 1]} : vector<25x25x4xf32> to vector<16x16x4xf32>
    %10 = vector.extract_strided_slice %5 {offsets = [8, 8, 0], sizes = [16, 16, 4], strides = [1, 1, 1]} : vector<25x25x4xf32> to vector<16x16x4xf32>
    %11 = vector.extract_strided_slice %5 {offsets = [8, 9, 0], sizes = [16, 16, 4], strides = [1, 1, 1]} : vector<25x25x4xf32> to vector<16x16x4xf32>
    %12 = vector.extract_strided_slice %5 {offsets = [9, 7, 0], sizes = [16, 16, 4], strides = [1, 1, 1]} : vector<25x25x4xf32> to vector<16x16x4xf32>
    %13 = vector.extract_strided_slice %5 {offsets = [9, 8, 0], sizes = [16, 16, 4], strides = [1, 1, 1]} : vector<25x25x4xf32> to vector<16x16x4xf32>
    %14 = vector.extract_strided_slice %5 {offsets = [9, 9, 0], sizes = [16, 16, 4], strides = [1, 1, 1]} : vector<25x25x4xf32> to vector<16x16x4xf32>
    %15 = tpu.concatenate %6, %7, %8, %9, %10, %11, %12, %13, %14 in 2 : vector<16x16x4xf32>, vector<16x16x4xf32>, vector<16x16x4xf32>, vector<16x16x4xf32>, vector<16x16x4xf32>, vector<16x16x4xf32>, vector<16x16x4xf32>, vector<16x16x4xf32>, vector<16x16x4xf32> -> vector<16x16x36xf32>
    %16 = vector.shape_cast %15 : vector<16x16x36xf32> to vector<256x36xf32>
    %c0_11 = arith.constant 0 : index
    %c0_12 = arith.constant 0 : index
    %17 = vector.load %arg2[%c0_11, %c0_12] : memref<36x4xf32, #tpu.memory_space<vmem>>, vector<36x4xf32>
    %cst_13 = arith.constant dense<0.000000e+00> : vector<256x4xf32>
    %18 = tpu.matmul %16, %17, %cst_13 {dimension_numbers = #tpu.dot_dimension_numbers<[1], [0], [0], [1], [0, 0, 1, 1], [], []>} : vector<256x36xf32>, vector<36x4xf32>, vector<256x4xf32> -> vector<256x4xf32>
    %c0_14 = arith.constant 0 : index
    %c0_15 = arith.constant 0 : index
    %19 = vector.load %arg3[%c0_14, %c0_15] : memref<1x4xf32, #tpu.memory_space<vmem>>, vector<1x4xf32>
    %20 = vector.broadcast %19 : vector<1x4xf32> to vector<256x4xf32>
    %21 = arith.mulf %18, %20 : vector<256x4xf32>
    %c0_16 = arith.constant 0 : index
    %c0_17 = arith.constant 0 : index
    %22 = vector.load %arg4[%c0_16, %c0_17] : memref<1x4xf32, #tpu.memory_space<vmem>>, vector<1x4xf32>
    %23 = vector.broadcast %22 : vector<1x4xf32> to vector<256x4xf32>
    %24 = arith.addf %21, %23 : vector<256x4xf32>
    %cst_18 = arith.constant 0.000000e+00 : f32
    %25 = vector.broadcast %cst_18 : f32 to vector<256x4xf32>
    %26 = arith.maximumf %24, %25 : vector<256x4xf32>
    %27 = vector.shape_cast %26 : vector<256x4xf32> to vector<16x16x4xf32>
    %cst_19 = arith.constant 0.000000e+00 : f32
    %28 = vector.broadcast %cst_19 : f32 to vector<25x25x4xf32>
    %c0_20 = arith.constant 0 : index
    %c0_21 = arith.constant 0 : index
    %c0_22 = arith.constant 0 : index
    %29 = vector.load %arg10[%c0_20, %c0_21, %c0_22] : memref<25x25x4xf32, #tpu.memory_space<vmem>>, vector<25x25x4xf32>
    tpu.vector_store %arg10[%c0_20, %c0_21, %c0_22], %28 {strides = array<i32>} : memref<25x25x4xf32, #tpu.memory_space<vmem>>, vector<25x25x4xf32>,
    %c8_23 = arith.constant 8 : index
    %c8_24 = arith.constant 8 : index
    %c0_25 = arith.constant 0 : index
    %30 = vector.load %arg10[%c8_23, %c8_24, %c0_25] : memref<25x25x4xf32, #tpu.memory_space<vmem>>, vector<16x16x4xf32>
    tpu.vector_store %arg10[%c8_23, %c8_24, %c0_25], %27 {strides = array<i32>} : memref<25x25x4xf32, #tpu.memory_space<vmem>>, vector<16x16x4xf32>,
    %c0_26 = arith.constant 0 : index
    %c0_27 = arith.constant 0 : index
    %c0_28 = arith.constant 0 : index
    %31 = vector.load %arg10[%c0_26, %c0_27, %c0_28] : memref<25x25x4xf32, #tpu.memory_space<vmem>>, vector<25x25x4xf32>
    %32 = vector.extract_strided_slice %31 {offsets = [7, 7, 0], sizes = [16, 16, 4], strides = [1, 1, 1]} : vector<25x25x4xf32> to vector<16x16x4xf32>
    %33 = vector.extract_strided_slice %31 {offsets = [7, 8, 0], sizes = [16, 16, 4], strides = [1, 1, 1]} : vector<25x25x4xf32> to vector<16x16x4xf32>
    %34 = vector.extract_strided_slice %31 {offsets = [7, 9, 0], sizes = [16, 16, 4], strides = [1, 1, 1]} : vector<25x25x4xf32> to vector<16x16x4xf32>
    %35 = vector.extract_strided_slice %31 {offsets = [8, 7, 0], sizes = [16, 16, 4], strides = [1, 1, 1]} : vector<25x25x4xf32> to vector<16x16x4xf32>
    %36 = vector.extract_strided_slice %31 {offsets = [8, 8, 0], sizes = [16, 16, 4], strides = [1, 1, 1]} : vector<25x25x4xf32> to vector<16x16x4xf32>
    %37 = vector.extract_strided_slice %31 {offsets = [8, 9, 0], sizes = [16, 16, 4], strides = [1, 1, 1]} : vector<25x25x4xf32> to vector<16x16x4xf32>
    %38 = vector.extract_strided_slice %31 {offsets = [9, 7, 0], sizes = [16, 16, 4], strides = [1, 1, 1]} : vector<25x25x4xf32> to vector<16x16x4xf32>
    %39 = vector.extract_strided_slice %31 {offsets = [9, 8, 0], sizes = [16, 16, 4], strides = [1, 1, 1]} : vector<25x25x4xf32> to vector<16x16x4xf32>
    %40 = vector.extract_strided_slice %31 {offsets = [9, 9, 0], sizes = [16, 16, 4], strides = [1, 1, 1]} : vector<25x25x4xf32> to vector<16x16x4xf32>
    %41 = tpu.concatenate %32, %33, %34, %35, %36, %37, %38, %39, %40 in 2 : vector<16x16x4xf32>, vector<16x16x4xf32>, vector<16x16x4xf32>, vector<16x16x4xf32>, vector<16x16x4xf32>, vector<16x16x4xf32>, vector<16x16x4xf32>, vector<16x16x4xf32>, vector<16x16x4xf32> -> vector<16x16x36xf32>
    %42 = vector.shape_cast %41 : vector<16x16x36xf32> to vector<256x36xf32>
    %c0_29 = arith.constant 0 : index
    %c0_30 = arith.constant 0 : index
    %43 = vector.load %arg5[%c0_29, %c0_30] : memref<36x4xf32, #tpu.memory_space<vmem>>, vector<36x4xf32>
    %cst_31 = arith.constant dense<0.000000e+00> : vector<256x4xf32>
    %44 = tpu.matmul %42, %43, %cst_31 {dimension_numbers = #tpu.dot_dimension_numbers<[1], [0], [0], [1], [0, 0, 1, 1], [], []>} : vector<256x36xf32>, vector<36x4xf32>, vector<256x4xf32> -> vector<256x4xf32>
    %c0_32 = arith.constant 0 : index
    %c0_33 = arith.constant 0 : index
    %45 = vector.load %arg6[%c0_32, %c0_33] : memref<1x4xf32, #tpu.memory_space<vmem>>, vector<1x4xf32>
    %46 = vector.broadcast %45 : vector<1x4xf32> to vector<256x4xf32>
    %47 = arith.mulf %44, %46 : vector<256x4xf32>
    %c0_34 = arith.constant 0 : index
    %c0_35 = arith.constant 0 : index
    %48 = vector.load %arg7[%c0_34, %c0_35] : memref<1x4xf32, #tpu.memory_space<vmem>>, vector<1x4xf32>
    %49 = vector.broadcast %48 : vector<1x4xf32> to vector<256x4xf32>
    %50 = arith.addf %47, %49 : vector<256x4xf32>
    %51 = vector.shape_cast %1 : vector<16x16x4xf32> to vector<256x4xf32>
    %52 = arith.addf %50, %51 : vector<256x4xf32>
    %cst_36 = arith.constant 0.000000e+00 : f32
    %53 = vector.broadcast %cst_36 : f32 to vector<256x4xf32>
    %54 = arith.maximumf %52, %53 : vector<256x4xf32>
    %55 = tpu.transpose %54, [1, 0] : vector<256x4xf32> -> vector<4x256xf32>
    %c0_37 = arith.constant 0 : index
    %c0_38 = arith.constant 0 : index
    %c0_39 = arith.constant 0 : index
    %56 = vector.load %arg8[%c0_37, %c0_38, %c0_39] : memref<1x4x256xf32, #tpu.memory_space<vmem>>, vector<1x4x256xf32>
    %57 = vector.shape_cast %56 : vector<1x4x256xf32> to vector<4x256xf32>
    %58 = vector.shape_cast %55 : vector<4x256xf32> to vector<1x4x256xf32>
    tpu.vector_store %arg8[%c0_37, %c0_38, %c0_39], %58 {strides = array<i32>} : memref<1x4x256xf32, #tpu.memory_space<vmem>>, vector<1x4x256xf32>,
    return
  }
  func.func @transform_0(%arg0: i32) -> (i32, i32, i32, i32) {
    %c0_i32 = arith.constant 0 : i32
    %c0_i32_0 = arith.constant 0 : i32
    %c0_i32_1 = arith.constant 0 : i32
    %c0_i32_2 = arith.constant 0 : i32
    return %arg0, %c0_i32, %c0_i32_0, %c0_i32_1 : i32, i32, i32, i32
  }
  func.func @transform_1(%arg0: i32) -> (i32, i32) {
    %c0_i32 = arith.constant 0 : i32
    %c0_i32_0 = arith.constant 0 : i32
    %c0_i32_1 = arith.constant 0 : i32
    return %c0_i32, %c0_i32_0 : i32, i32
  }
  func.func @transform_2(%arg0: i32) -> (i32, i32) {
    %c0_i32 = arith.constant 0 : i32
    %c0_i32_0 = arith.constant 0 : i32
    %c0_i32_1 = arith.constant 0 : i32
    return %c0_i32, %c0_i32_0 : i32, i32
  }
  func.func @transform_3(%arg0: i32) -> (i32, i32) {
    %c0_i32 = arith.constant 0 : i32
    %c0_i32_0 = arith.constant 0 : i32
    %c0_i32_1 = arith.constant 0 : i32
    return %c0_i32, %c0_i32_0 : i32, i32
  }
  func.func @transform_4(%arg0: i32) -> (i32, i32) {
    %c0_i32 = arith.constant 0 : i32
    %c0_i32_0 = arith.constant 0 : i32
    %c0_i32_1 = arith.constant 0 : i32
    return %c0_i32, %c0_i32_0 : i32, i32
  }
  func.func @transform_5(%arg0: i32) -> (i32, i32) {
    %c0_i32 = arith.constant 0 : i32
    %c0_i32_0 = arith.constant 0 : i32
    %c0_i32_1 = arith.constant 0 : i32
    return %c0_i32, %c0_i32_0 : i32, i32
  }
  func.func @transform_6(%arg0: i32) -> (i32, i32) {
    %c0_i32 = arith.constant 0 : i32
    %c0_i32_0 = arith.constant 0 : i32
    %c0_i32_1 = arith.constant 0 : i32
    return %c0_i32, %c0_i32_0 : i32, i32
  }
  func.func @transform_7(%arg0: i32) -> (i32, i32, i32) {
    %c0_i32 = arith.constant 0 : i32
    %c0_i32_0 = arith.constant 0 : i32
    %c0_i32_1 = arith.constant 0 : i32
    return %arg0, %c0_i32, %c0_i32_0 : i32, i32, i32
  }
}

</mosaic_0001>

<llo_original>
// kernel: _basic_block_fwd.1
$region0: #{_basic_block_fwd.1}
  #allocation0 [shape = 'u32[]', space=smem, size = 0x4, offset = 0x4, fixed_abs, tag = 'smem constant byte address 0x4 - core index']
  #allocation1 [shape = 'u32[144,128]{1,0:T(1,128)}', space=vmem, size = 0x12000, scoped, tag = 'internal scratch']
  #allocation2 [shape = 'f32[25,25,4]{2,1,0:T(8,128)}', space=vmem, size = 0x64000, scoped, tag = 'scratch operand']
  #allocation3 [shape = 'f32[25,25,4]{2,1,0:T(8,128)}', space=vmem, size = 0x64000, scoped, tag = 'scratch operand']
  %s0 = inlined_call_operand.vmem [shape: f32[2,16,16,4], index: 0, kind: input, shape index: {}]
  %s1 = inlined_call_operand.vmem [shape: f32[36,4], index: 1, kind: input, shape index: {}]
  %s2 = inlined_call_operand.vmem [shape: f32[1,4], index: 2, kind: input, shape index: {}]
  %s3 = inlined_call_operand.vmem [shape: f32[1,4], index: 3, kind: input, shape index: {}]
  %s4 = inlined_call_operand.vmem [shape: f32[36,4], index: 4, kind: input, shape index: {}]
  %s5 = inlined_call_operand.vmem [shape: f32[1,4], index: 5, kind: input, shape index: {}]
  %s6 = inlined_call_operand.vmem [shape: f32[1,4], index: 6, kind: input, shape index: {}]
  %s7 = inlined_call_operand.vmem [shape: f32[2,4,256], index: 7, kind: output, shape index: {}]
  %s8 = sld [smem:[#allocation0]]
  $region61: #{_basic_block_fwd.1} parent=0
    _
  %s10 = ssub.s32 1, %s8
  %s11 = scalar_select 0, %s10, %s8
  loop: start=0, step=1, limit=4
  $region2: #{_basic_block_fwd.1} parent=0 // loop_pre_header
    _
  $region3: #{_basic_block_fwd.1} parent=0 // loop_header
    %s13 = sphi 0, %s17
    %p14 = scmp.ge.s32.totalorder %s13, 4
    %s23 = sphi 0, %s25
    %s26 = sphi 0, %s23
    %s27 = sphi 0, %s26
    %s43 = sphi 0, %s27
    %s47 = sphi 0, %s47
    %s49 = sphi 0, %s47
    %s50 = sphi 0, %s49
    %s64 = sphi 0, %s50
    %s68 = sphi 0, %s68
    %s70 = sphi 0, %s68
    %s71 = sphi 0, %s70
    %s85 = sphi 0, %s71
    %s89 = sphi 0, %s89
    %s91 = sphi 0, %s89
    %s92 = sphi 0, %s91
    %s106 = sphi 0, %s92
    %s110 = sphi 0, %s110
    %s112 = sphi 0, %s110
    %s113 = sphi 0, %s112
    %s127 = sphi 0, %s113
    %s131 = sphi 0, %s131
    %s133 = sphi 0, %s131
    %s134 = sphi 0, %s133
    %s148 = sphi 0, %s134
    %s152 = sphi 0, %s152
    %s154 = sphi 0, %s152
    %s155 = sphi 0, %s154
    %s169 = sphi 0, %s155
    %s175 = sphi 0, %s177
    %s178 = sphi 0, %s175
    %s179 = sphi 0, %s178
    %s195 = sphi 0, %s179
  $region4: #{_basic_block_fwd.1} parent=0 // loop_header_branch
    %16 = sbr.rel (%p14) target = $region8
  $region5: #{_basic_block_fwd.1} parent=0 // loop_body
    %s18 = ssub.s32 %s13, 1
    %s19 = ssub.s32 %s13, 2
    %s20 = sadd.s32 %s13, 1
    %s21 = ssub.s32 %s13, %s20
    %p22 = scmp.eq.s32.totalorder %s21, 0
    %s24 = sadd.s32 %s23, 1
    %s25 = scalar_select %p22, %s23, %s24
    %p28 = pneg %p22
    %p29 = scmp.eq.s32.totalorder %s13, 1
    %p30 = por %p28, %p29
    %p31 = scmp.ne.s32.totalorder %s23, %s26
    %p32 = scmp.eq.s32.totalorder %s13, 0
    %p33 = por %p31, %p32
    %p34 = scmp.ne.s32.totalorder %s23, %s26
    %p35 = scmp.eq.s32.totalorder %s18, 1
    %p36 = por %p34, %p35
    %p37 = scmp.ne.s32.totalorder %s26, %s27
    %p38 = scmp.eq.s32.totalorder %s18, 0
    %p39 = por %p37, %p38
    %p40 = scmp.ne.s32.totalorder %s26, %s27
    %p41 = scmp.eq.s32.totalorder %s19, 1
    %p42 = por %p40, %p41
    %p44 = scmp.ne.s32.totalorder %s27, %s43
    %p45 = scmp.eq.s32.totalorder %s19, 0
    %p46 = por %p44, %p45
    %s48 = sadd.s32 %s47, 1
    %p51 = scmp.eq.s32.totalorder %s13, 1
    %p52 = scmp.ne.s32.totalorder %s47, %s49
    %p53 = scmp.eq.s32.totalorder %s13, 0
    %p54 = por %p52, %p53
    %p55 = scmp.ne.s32.totalorder %s47, %s49
    %p56 = scmp.eq.s32.totalorder %s18, 1
    %p57 = por %p55, %p56
    %p58 = scmp.ne.s32.totalorder %s49, %s50
    %p59 = scmp.eq.s32.totalorder %s18, 0
    %p60 = por %p58, %p59
    %p61 = scmp.ne.s32.totalorder %s49, %s50
    %p62 = scmp.eq.s32.totalorder %s19, 1
    %p63 = por %p61, %p62
    %p65 = scmp.ne.s32.totalorder %s50, %s64
    %p66 = scmp.eq.s32.totalorder %s19, 0
    %p67 = por %p65, %p66
    %s69 = sadd.s32 %s68, 1
    %p72 = scmp.eq.s32.totalorder %s13, 1
    %p73 = scmp.ne.s32.totalorder %s68, %s70
    %p74 = scmp.eq.s32.totalorder %s13, 0
    %p75 = por %p73, %p74
    %p76 = scmp.ne.s32.totalorder %s68, %s70
    %p77 = scmp.eq.s32.totalorder %s18, 1
    %p78 = por %p76, %p77
    %p79 = scmp.ne.s32.totalorder %s70, %s71
    %p80 = scmp.eq.s32.totalorder %s18, 0
    %p81 = por %p79, %p80
    %p82 = scmp.ne.s32.totalorder %s70, %s71
    %p83 = scmp.eq.s32.totalorder %s19, 1
    %p84 = por %p82, %p83
    %p86 = scmp.ne.s32.totalorder %s71, %s85
    %p87 = scmp.eq.s32.totalorder %s19, 0
    %p88 = por %p86, %p87
    %s90 = sadd.s32 %s89, 1
    %p93 = scmp.eq.s32.totalorder %s13, 1
    %p94 = scmp.ne.s32.totalorder %s89, %s91
    %p95 = scmp.eq.s32.totalorder %s13, 0
    %p96 = por %p94, %p95
    %p97 = scmp.ne.s32.totalorder %s89, %s91
    %p98 = scmp.eq.s32.totalorder %s18, 1
    %p99 = por %p97, %p98
    %p100 = scmp.ne.s32.totalorder %s91, %s92
    %p101 = scmp.eq.s32.totalorder %s18, 0
    %p102 = por %p100, %p101
    %p103 = scmp.ne.s32.totalorder %s91, %s92
    %p104 = scmp.eq.s32.totalorder %s19, 1
    %p105 = por %p103, %p104
    %p107 = scmp.ne.s32.totalorder %s92, %s106
    %p108 = scmp.eq.s32.totalorder %s19, 0
    %p109 = por %p107, %p108
    %s111 = sadd.s32 %s110, 1
    %p114 = scmp.eq.s32.totalorder %s13, 1
    %p115 = scmp.ne.s32.totalorder %s110, %s112
    %p116 = scmp.eq.s32.totalorder %s13, 0
    %p117 = por %p115, %p116
    %p118 = scmp.ne.s32.totalorder %s110, %s112
    %p119 = scmp.eq.s32.totalorder %s18, 1
    %p120 = por %p118, %p119
    %p121 = scmp.ne.s32.totalorder %s112, %s113
    %p122 = scmp.eq.s32.totalorder %s18, 0
    %p123 = por %p121, %p122
    %p124 = scmp.ne.s32.totalorder %s112, %s113
    %p125 = scmp.eq.s32.totalorder %s19, 1
    %p126 = por %p124, %p125
    %p128 = scmp.ne.s32.totalorder %s113, %s127
    %p129 = scmp.eq.s32.totalorder %s19, 0
    %p130 = por %p128, %p129
    %s132 = sadd.s32 %s131, 1
    %p135 = scmp.eq.s32.totalorder %s13, 1
    %p136 = scmp.ne.s32.totalorder %s131, %s133
    %p137 = scmp.eq.s32.totalorder %s13, 0
    %p138 = por %p136, %p137
    %p139 = scmp.ne.s32.totalorder %s131, %s133
    %p140 = scmp.eq.s32.totalorder %s18, 1
    %p141 = por %p139, %p140
    %p142 = scmp.ne.s32.totalorder %s133, %s134
    %p143 = scmp.eq.s32.totalorder %s18, 0
    %p144 = por %p142, %p143
    %p145 = scmp.ne.s32.totalorder %s133, %s134
    %p146 = scmp.eq.s32.totalorder %s19, 1
    %p147 = por %p145, %p146
    %p149 = scmp.ne.s32.totalorder %s134, %s148
    %p150 = scmp.eq.s32.totalorder %s19, 0
    %p151 = por %p149, %p150
    %s153 = sadd.s32 %s152, 1
    %p156 = scmp.eq.s32.totalorder %s13, 1
    %p157 = scmp.ne.s32.totalorder %s152, %s154
    %p158 = scmp.eq.s32.totalorder %s13, 0
    %p159 = por %p157, %p158
    %p160 = scmp.ne.s32.totalorder %s152, %s154
    %p161 = scmp.eq.s32.totalorder %s18, 1
    %p162 = por %p160, %p161
    %p163 = scmp.ne.s32.totalorder %s154, %s155
    %p164 = scmp.eq.s32.totalorder %s18, 0
    %p165 = por %p163, %p164
    %p166 = scmp.ne.s32.totalorder %s154, %s155
    %p167 = scmp.eq.s32.totalorder %s19, 1
    %p168 = por %p166, %p167
    %p170 = scmp.ne.s32.totalorder %s155, %s169
    %p171 = scmp.eq.s32.totalorder %s19, 0
    %p172 = por %p170, %p171
    %s173 = ssub.s32 %s13, %s20
    %p174 = scmp.eq.s32.totalorder %s173, 0
    %s176 = sadd.s32 %s175, 1
    %s177 = scalar_select %p174, %s175, %s176
    %p180 = pneg %p174
    %p181 = scmp.eq.s32.totalorder %s13, 1
    %p182 = por %p180, %p181
    %p183 = scmp.ne.s32.totalorder %s175, %s178
    %p184 = scmp.eq.s32.totalorder %s13, 0
    %p185 = por %p183, %p184
    %p186 = scmp.ne.s32.totalorder %s175, %s178
    %p187 = scmp.eq.s32.totalorder %s18, 1
    %p188 = por %p186, %p187
    %p189 = scmp.ne.s32.totalorder %s178, %s179
    %p190 = scmp.eq.s32.totalorder %s18, 0
    %p191 = por %p189, %p190
    %p192 = scmp.ne.s32.totalorder %s178, %s179
    %p193 = scmp.eq.s32.totalorder %s19, 1
    %p194 = por %p192, %p193
    %p196 = scmp.ne.s32.totalorder %s179, %s195
    %p197 = scmp.eq.s32.totalorder %s19, 0
    %p198 = por %p196, %p197
    %p199 = scmp.le.s32.totalorder 1, %s13
    %p200 = scmp.lt.s32.totalorder %s13, 3
    %p201 = pnand %p199, %p200
    %p202 = pneg %p201
    // Predicated region
    $region9: #{_basic_block_fwd.1} parent=5 // pred_check
      _
    $region10: #{_basic_block_fwd.1} parent=5 // pred_check_branch
      %204 = sbr.rel (%p201) target = $region12
    $region11: #{_basic_block_fwd.1} parent=5 // pred_region
      %s205 = ssub.s32 %s13, 1
      // Predicated region
      $region13: #{_basic_block_fwd.1} parent=11 // pred_check
        %p206 = pneg %p60
      $region14: #{_basic_block_fwd.1} parent=11 // pred_check_branch
        %208 = sbr.rel (%p206) target = $region16
      $region15: #{_basic_block_fwd.1} parent=11 // pred_region
        _
      $region16: #{_basic_block_fwd.1} parent=11 // pred_fallthru
        _
      // Predicated region
      $region17: #{_basic_block_fwd.1} parent=11 // pred_check
        %p209 = pneg %p81
      $region18: #{_basic_block_fwd.1} parent=11 // pred_check_branch
        %211 = sbr.rel (%p209) target = $region20
      $region19: #{_basic_block_fwd.1} parent=11 // pred_region
        _
      $region20: #{_basic_block_fwd.1} parent=11 // pred_fallthru
        _
      // Predicated region
      $region21: #{_basic_block_fwd.1} parent=11 // pred_check
        %p212 = pneg %p102
      $region22: #{_basic_block_fwd.1} parent=11 // pred_check_branch
        %214 = sbr.rel (%p212) target = $region24
      $region23: #{_basic_block_fwd.1} parent=11 // pred_region
        _
      $region24: #{_basic_block_fwd.1} parent=11 // pred_fallthru
        _
      // Predicated region
      $region25: #{_basic_block_fwd.1} parent=11 // pred_check
        %p215 = pneg %p123
      $region26: #{_basic_block_fwd.1} parent=11 // pred_check_branch
        %217 = sbr.rel (%p215) target = $region28
      $region27: #{_basic_block_fwd.1} parent=11 // pred_region
        _
      $region28: #{_basic_block_fwd.1} parent=11 // pred_fallthru
        _
      // Predicated region
      $region29: #{_basic_block_fwd.1} parent=11 // pred_check
        %p218 = pneg %p144
      $region30: #{_basic_block_fwd.1} parent=11 // pred_check_branch
        %220 = sbr.rel (%p218) target = $region32
      $region31: #{_basic_block_fwd.1} parent=11 // pred_region
        _
      $region32: #{_basic_block_fwd.1} parent=11 // pred_fallthru
        _
      // Predicated region
      $region33: #{_basic_block_fwd.1} parent=11 // pred_check
        %p221 = pneg %p165
      $region34: #{_basic_block_fwd.1} parent=11 // pred_check_branch
        %223 = sbr.rel (%p221) target = $region36
      $region35: #{_basic_block_fwd.1} parent=11 // pred_region
        _
      $region36: #{_basic_block_fwd.1} parent=11 // pred_fallthru
        _
    $region12: #{_basic_block_fwd.1} parent=5 // pred_fallthru
      _
    %p224 = scmp.lt.s32.totalorder %s13, 2
    // Predicated region
    $region37: #{_basic_block_fwd.1} parent=5 // pred_check
      %p225 = pneg %p224
    $region38: #{_basic_block_fwd.1} parent=5 // pred_check_branch
      %227 = sbr.rel (%p225) target = $region40
    $region39: #{_basic_block_fwd.1} parent=5 // pred_region
      // Predicated region
      $region41: #{_basic_block_fwd.1} parent=39 // pred_check
        %p228 = pneg %p33
      $region42: #{_basic_block_fwd.1} parent=39 // pred_check_branch
        %230 = sbr.rel (%p228) target = $region44
      $region43: #{_basic_block_fwd.1} parent=39 // pred_region
        %p231 = scmp.lt.s32.totalorder %s13, 1
        %s232 = scalar_select %p231, %s13, 1
        %s233 = smul.addr %s232, 32
        %s234 = smul.addr %s233, 8
        %s235 = scalar_lea.vmem %s0, %s234
      $region44: #{_basic_block_fwd.1} parent=39 // pred_fallthru
        _
    $region40: #{_basic_block_fwd.1} parent=5 // pred_fallthru
      _
    %p236 = scmp.le.s32.totalorder 1, %s13
    %p237 = scmp.lt.s32.totalorder %s13, 3
    %p238 = pnand %p236, %p237
    %p239 = pneg %p238
    // Predicated region
    $region45: #{_basic_block_fwd.1} parent=5 // pred_check
      _
    $region46: #{_basic_block_fwd.1} parent=5 // pred_check_branch
      %241 = sbr.rel (%p238) target = $region48
    $region47: #{_basic_block_fwd.1} parent=5 // pred_region
      %s242 = ssub.s32 %s13, 1
      %p243 = scmp.lt.s32.totalorder %s18, 1
      %s244 = scalar_select %p243, %s18, 1
      %s245 = smul.addr %s244, 32
      %s246 = smul.addr %s245, 8
      %s247 = scalar_lea.vmem %s0, %s246
      %p248 = pneg %p39
      %p249 = pneg %p36
      %p250 = pneg %p60
      %p251 = pneg %p57
      %p252 = pneg %p81
      %p253 = pneg %p78
      %p254 = pneg %p102
      %p255 = pneg %p99
      %p256 = pneg %p123
      %p257 = pneg %p120
      %p258 = pneg %p144
      %p259 = pneg %p141
      %p260 = pneg %p165
      %p261 = pneg %p162
      %p262 = pneg %p191
      %p263 = pneg %p188
      %p264 = scmp.lt.s32.totalorder %s18, 1
      %s265 = scalar_select %p264, %s18, 1
      %s266 = smul.addr %s265, 2
      %s267 = smul.addr %s266, 4
      %s268 = scalar_lea.vmem %s7, %s267
      %p269 = scmp.lt.s32.totalorder %s18, 1
      %s270 = scalar_select %p269, %s18, 1
      %s271 = smul.addr %s270, 32
      %s272 = smul.addr %s271, 8
      %s273 = scalar_lea.vmem %s0, %s272
      %p274 = scmp.lt.s32.totalorder %s18, 1
      %s275 = scalar_select %p274, %s18, 1
      %s276 = smul.addr %s275, 2
      %s277 = smul.addr %s276, 4
      %s278 = scalar_lea.vmem %s7, %s277
      %v279 = vld [vmem:[%s273] sm:$0xff]
      %v280 = vld [vmem:[%s273 + $0x8] sm:$0xff]
      %v281 = vld [vmem:[%s273 + $0x10] sm:$0xff]
      %v282 = vld [vmem:[%s273 + $0x18] sm:$0xff]
      %v283 = vld [vmem:[%s273 + $0x20] sm:$0xff]
      %v284 = vld [vmem:[%s273 + $0x28] sm:$0xff]
      %v285 = vld [vmem:[%s273 + $0x30] sm:$0xff]
      %v286 = vld [vmem:[%s273 + $0x38] sm:$0xff]
      %v287 = vld [vmem:[%s273 + $0x40] sm:$0xff]
      %v288 = vld [vmem:[%s273 + $0x48] sm:$0xff]
      %v289 = vld [vmem:[%s273 + $0x50] sm:$0xff]
      %v290 = vld [vmem:[%s273 + $0x58] sm:$0xff]
      %v291 = vld [vmem:[%s273 + $0x60] sm:$0xff]
      %v292 = vld [vmem:[%s273 + $0x68] sm:$0xff]
      %v293 = vld [vmem:[%s273 + $0x70] sm:$0xff]
      %v294 = vld [vmem:[%s273 + $0x78] sm:$0xff]
      %v295 = vld [vmem:[%s273 + $0x80] sm:$0xff]
      %v296 = vld [vmem:[%s273 + $0x88] sm:$0xff]
      %v297 = vld [vmem:[%s273 + $0x90] sm:$0xff]
      %v298 = vld [vmem:[%s273 + $0x98] sm:$0xff]
      %v299 = vld [vmem:[%s273 + $0xa0] sm:$0xff]
      %v300 = vld [vmem:[%s273 + $0xa8] sm:$0xff]
      %v301 = vld [vmem:[%s273 + $0xb0] sm:$0xff]
      %v302 = vld [vmem:[%s273 + $0xb8] sm:$0xff]
      %v303 = vld [vmem:[%s273 + $0xc0] sm:$0xff]
      %v304 = vld [vmem:[%s273 + $0xc8] sm:$0xff]
      %v305 = vld [vmem:[%s273 + $0xd0] sm:$0xff]
      %v306 = vld [vmem:[%s273 + $0xd8] sm:$0xff]
      %v307 = vld [vmem:[%s273 + $0xe0] sm:$0xff]
      %v308 = vld [vmem:[%s273 + $0xe8] sm:$0xff]
      %v309 = vld [vmem:[%s273 + $0xf0] sm:$0xff]
      %v310 = vld [vmem:[%s273 + $0xf8] sm:$0xff]
      %vm311 = vcmask 31744
      %312 = vst.msk [vmem:[#allocation2] sm:$0xff] %vm311, 0.0
      %313 = vst.msk [vmem:[#allocation2 + $0x8] sm:$0xff] %vm311, 0.0
      %314 = vst.msk [vmem:[#allocation2 + $0x10] sm:$0xff] %vm311, 0.0
      %vm315 = vcmask 24576
      %316 = vst.msk [vmem:[#allocation2 + $0x18] sm:$0x1] %vm315, 0.0
      %317 = vst.msk [vmem:[#allocation2 + $0x20] sm:$0xff] %vm311, 0.0
      %318 = vst.msk [vmem:[#allocation2 + $0x28] sm:$0xff] %vm311, 0.0
      %319 = vst.msk [vmem:[#allocation2 + $0x30] sm:$0xff] %vm311, 0.0
      %320 = vst.msk [vmem:[#allocation2 + $0x38] sm:$0x1] %vm315, 0.0
      %321 = vst.msk [vmem:[#allocation2 + $0x40] sm:$0xff] %vm311, 0.0
      %322 = vst.msk [vmem:[#allocation2 + $0x48] sm:$0xff] %vm311, 0.0
      %323 = vst.msk [vmem:[#allocation2 + $0x50] sm:$0xff] %vm311, 0.0
      %324 = vst.msk [vmem:[#allocation2 + $0x58] sm:$0x1] %vm315, 0.0
      %325 = vst.msk [vmem:[#allocation2 + $0x60] sm:$0xff] %vm311, 0.0
      %326 = vst.msk [vmem:[#allocation2 + $0x68] sm:$0xff] %vm311, 0.0
      %327 = vst.msk [vmem:[#allocation2 + $0x70] sm:$0xff] %vm311, 0.0
      %328 = vst.msk [vmem:[#allocation2 + $0x78] sm:$0x1] %vm315, 0.0
      %329 = vst.msk [vmem:[#allocation2 + $0x80] sm:$0xff] %vm311, 0.0
      %330 = vst.msk [vmem:[#allocation2 + $0x88] sm:$0xff] %vm311, 0.0
      %331 = vst.msk [vmem:[#allocation2 + $0x90] sm:$0xff] %vm311, 0.0
      %332 = vst.msk [vmem:[#allocation2 + $0x98] sm:$0x1] %vm315, 0.0
      %333 = vst.msk [vmem:[#allocation2 + $0xa0] sm:$0xff] %vm311, 0.0
      %334 = vst.msk [vmem:[#allocation2 + $0xa8] sm:$0xff] %vm311, 0.0
      %335 = vst.msk [vmem:[#allocation2 + $0xb0] sm:$0xff] %vm311, 0.0
      %336 = vst.msk [vmem:[#allocation2 + $0xb8] sm:$0x1] %vm315, 0.0
      %337 = vst.msk [vmem:[#allocation2 + $0xc0] sm:$0xff] %vm311, 0.0
      %338 = vst.msk [vmem:[#allocation2 + $0xc8] sm:$0xff] %vm311, 0.0
      %339 = vst.msk [vmem:[#allocation2 + $0xd0] sm:$0xff] %vm311, 0.0
      %340 = vst.msk [vmem:[#allocation2 + $0xd8] sm:$0x1] %vm315, 0.0
      %341 = vst.msk [vmem:[#allocation2 + $0xe0] sm:$0xff] %vm311, 0.0
      %342 = vst.msk [vmem:[#allocation2 + $0xe8] sm:$0xff] %vm311, 0.0
      %343 = vst.msk [vmem:[#allocation2 + $0xf0] sm:$0xff] %vm311, 0.0
      %344 = vst.msk [vmem:[#allocation2 + $0xf8] sm:$0x1] %vm315, 0.0
      %345 = vst.msk [vmem:[#allocation2 + $0x100] sm:$0xff] %vm311, 0.0
      %346 = vst.msk [vmem:[#allocation2 + $0x108] sm:$0xff] %vm311, 0.0
      %347 = vst.msk [vmem:[#allocation2 + $0x110] sm:$0xff] %vm311, 0.0
      %348 = vst.msk [vmem:[#allocation2 + $0x118] sm:$0x1] %vm315, 0.0
      %349 = vst.msk [vmem:[#allocation2 + $0x120] sm:$0xff] %vm311, 0.0
      %350 = vst.msk [vmem:[#allocation2 + $0x128] sm:$0xff] %vm311, 0.0
      %351 = vst.msk [vmem:[#allocation2 + $0x130] sm:$0xff] %vm311, 0.0
      %352 = vst.msk [vmem:[#allocation2 + $0x138] sm:$0x1] %vm315, 0.0
      %353 = vst.msk [vmem:[#allocation2 + $0x140] sm:$0xff] %vm311, 0.0
      %354 = vst.msk [vmem:[#allocation2 + $0x148] sm:$0xff] %vm311, 0.0
      %355 = vst.msk [vmem:[#allocation2 + $0x150] sm:$0xff] %vm311, 0.0
      %356 = vst.msk [vmem:[#allocation2 + $0x158] sm:$0x1] %vm315, 0.0
      %357 = vst.msk [vmem:[#allocation2 + $0x160] sm:$0xff] %vm311, 0.0
      %358 = vst.msk [vmem:[#allocation2 + $0x168] sm:$0xff] %vm311, 0.0
      %359 = vst.msk [vmem:[#allocation2 + $0x170] sm:$0xff] %vm311, 0.0
      %360 = vst.msk [vmem:[#allocation2 + $0x178] sm:$0x1] %vm315, 0.0
      %361 = vst.msk [vmem:[#allocation2 + $0x180] sm:$0xff] %vm311, 0.0
      %362 = vst.msk [vmem:[#allocation2 + $0x188] sm:$0xff] %vm311, 0.0
      %363 = vst.msk [vmem:[#allocation2 + $0x190] sm:$0xff] %vm311, 0.0
      %364 = vst.msk [vmem:[#allocation2 + $0x198] sm:$0x1] %vm315, 0.0
      %365 = vst.msk [vmem:[#allocation2 + $0x1a0] sm:$0xff] %vm311, 0.0
      %366 = vst.msk [vmem:[#allocation2 + $0x1a8] sm:$0xff] %vm311, 0.0
      %367 = vst.msk [vmem:[#allocation2 + $0x1b0] sm:$0xff] %vm311, 0.0
      %368 = vst.msk [vmem:[#allocation2 + $0x1b8] sm:$0x1] %vm315, 0.0
      %369 = vst.msk [vmem:[#allocation2 + $0x1c0] sm:$0xff] %vm311, 0.0
      %370 = vst.msk [vmem:[#allocation2 + $0x1c8] sm:$0xff] %vm311, 0.0
      %371 = vst.msk [vmem:[#allocation2 + $0x1d0] sm:$0xff] %vm311, 0.0
      %372 = vst.msk [vmem:[#allocation2 + $0x1d8] sm:$0x1] %vm315, 0.0
      %373 = vst.msk [vmem:[#allocation2 + $0x1e0] sm:$0xff] %vm311, 0.0
      %374 = vst.msk [vmem:[#allocation2 + $0x1e8] sm:$0xff] %vm311, 0.0
      %375 = vst.msk [vmem:[#allocation2 + $0x1f0] sm:$0xff] %vm311, 0.0
      %376 = vst.msk [vmem:[#allocation2 + $0x1f8] sm:$0x1] %vm315, 0.0
      %377 = vst.msk [vmem:[#allocation2 + $0x200] sm:$0xff] %vm311, 0.0
      %378 = vst.msk [vmem:[#allocation2 + $0x208] sm:$0xff] %vm311, 0.0
      %379 = vst.msk [vmem:[#allocation2 + $0x210] sm:$0xff] %vm311, 0.0
      %380 = vst.msk [vmem:[#allocation2 + $0x218] sm:$0x1] %vm315, 0.0
      %381 = vst.msk [vmem:[#allocation2 + $0x220] sm:$0xff] %vm311, 0.0
      %382 = vst.msk [vmem:[#allocation2 + $0x228] sm:$0xff] %vm311, 0.0
      %383 = vst.msk [vmem:[#allocation2 + $0x230] sm:$0xff] %vm311, 0.0
      %384 = vst.msk [vmem:[#allocation2 + $0x238] sm:$0x1] %vm315, 0.0
      %385 = vst.msk [vmem:[#allocation2 + $0x240] sm:$0xff] %vm311, 0.0
      %386 = vst.msk [vmem:[#allocation2 + $0x248] sm:$0xff] %vm311, 0.0
      %387 = vst.msk [vmem:[#allocation2 + $0x250] sm:$0xff] %vm311, 0.0
      %388 = vst.msk [vmem:[#allocation2 + $0x258] sm:$0x1] %vm315, 0.0
      %389 = vst.msk [vmem:[#allocation2 + $0x260] sm:$0xff] %vm311, 0.0
      %390 = vst.msk [vmem:[#allocation2 + $0x268] sm:$0xff] %vm311, 0.0
      %391 = vst.msk [vmem:[#allocation2 + $0x270] sm:$0xff] %vm311, 0.0
      %392 = vst.msk [vmem:[#allocation2 + $0x278] sm:$0x1] %vm315, 0.0
      %393 = vst.msk [vmem:[#allocation2 + $0x280] sm:$0xff] %vm311, 0.0
      %394 = vst.msk [vmem:[#allocation2 + $0x288] sm:$0xff] %vm311, 0.0
      %395 = vst.msk [vmem:[#allocation2 + $0x290] sm:$0xff] %vm311, 0.0
      %396 = vst.msk [vmem:[#allocation2 + $0x298] sm:$0x1] %vm315, 0.0
      %397 = vst.msk [vmem:[#allocation2 + $0x2a0] sm:$0xff] %vm311, 0.0
      %398 = vst.msk [vmem:[#allocation2 + $0x2a8] sm:$0xff] %vm311, 0.0
      %399 = vst.msk [vmem:[#allocation2 + $0x2b0] sm:$0xff] %vm311, 0.0
      %400 = vst.msk [vmem:[#allocation2 + $0x2b8] sm:$0x1] %vm315, 0.0
      %401 = vst.msk [vmem:[#allocation2 + $0x2c0] sm:$0xff] %vm311, 0.0
      %402 = vst.msk [vmem:[#allocation2 + $0x2c8] sm:$0xff] %vm311, 0.0
      %403 = vst.msk [vmem:[#allocation2 + $0x2d0] sm:$0xff] %vm311, 0.0
      %404 = vst.msk [vmem:[#allocation2 + $0x2d8] sm:$0x1] %vm315, 0.0
      %405 = vst.msk [vmem:[#allocation2 + $0x2e0] sm:$0xff] %vm311, 0.0
      %406 = vst.msk [vmem:[#allocation2 + $0x2e8] sm:$0xff] %vm311, 0.0
      %407 = vst.msk [vmem:[#allocation2 + $0x2f0] sm:$0xff] %vm311, 0.0
      %408 = vst.msk [vmem:[#allocation2 + $0x2f8] sm:$0x1] %vm315, 0.0
      %409 = vst.msk [vmem:[#allocation2 + $0x300] sm:$0xff] %vm311, 0.0
      %410 = vst.msk [vmem:[#allocation2 + $0x308] sm:$0xff] %vm311, 0.0
      %411 = vst.msk [vmem:[#allocation2 + $0x310] sm:$0xff] %vm311, 0.0
      %412 = vst.msk [vmem:[#allocation2 + $0x318] sm:$0x1] %vm315, 0.0
      %s413 = scalar_lea.vmem [#allocation2], 256
      %414 = vst.msk [vmem:[%s413 + $0x8] sm:$0xff] %vm311, %v279
      %415 = vst.msk [vmem:[%s413 + $0x10] sm:$0xff] %vm311, %v280
      %416 = vst.msk [vmem:[%s413 + $0x28] sm:$0xff] %vm311, %v281
      %417 = vst.msk [vmem:[%s413 + $0x30] sm:$0xff] %vm311, %v282
      %418 = vst.msk [vmem:[%s413 + $0x48] sm:$0xff] %vm311, %v283
      %419 = vst.msk [vmem:[%s413 + $0x50] sm:$0xff] %vm311, %v284
      %420 = vst.msk [vmem:[%s413 + $0x68] sm:$0xff] %vm311, %v285
      %421 = vst.msk [vmem:[%s413 + $0x70] sm:$0xff] %vm311, %v286
      %422 = vst.msk [vmem:[%s413 + $0x88] sm:$0xff] %vm311, %v287
      %423 = vst.msk [vmem:[%s413 + $0x90] sm:$0xff] %vm311, %v288
      %424 = vst.msk [vmem:[%s413 + $0xa8] sm:$0xff] %vm311, %v289
      %425 = vst.msk [vmem:[%s413 + $0xb0] sm:$0xff] %vm311, %v290
      %426 = vst.msk [vmem:[%s413 + $0xc8] sm:$0xff] %vm311, %v291
      %427 = vst.msk [vmem:[%s413 + $0xd0] sm:$0xff] %vm311, %v292
      %428 = vst.msk [vmem:[%s413 + $0xe8] sm:$0xff] %vm311, %v293
      %429 = vst.msk [vmem:[%s413 + $0xf0] sm:$0xff] %vm311, %v294
      %430 = vst.msk [vmem:[%s413 + $0x108] sm:$0xff] %vm311, %v295
      %431 = vst.msk [vmem:[%s413 + $0x110] sm:$0xff] %vm311, %v296
      %432 = vst.msk [vmem:[%s413 + $0x128] sm:$0xff] %vm311, %v297
      %433 = vst.msk [vmem:[%s413 + $0x130] sm:$0xff] %vm311, %v298
      %434 = vst.msk [vmem:[%s413 + $0x148] sm:$0xff] %vm311, %v299
      %435 = vst.msk [vmem:[%s413 + $0x150] sm:$0xff] %vm311, %v300
      %436 = vst.msk [vmem:[%s413 + $0x168] sm:$0xff] %vm311, %v301
      %437 = vst.msk [vmem:[%s413 + $0x170] sm:$0xff] %vm311, %v302
      %438 = vst.msk [vmem:[%s413 + $0x188] sm:$0xff] %vm311, %v303
      %439 = vst.msk [vmem:[%s413 + $0x190] sm:$0xff] %vm311, %v304
      %440 = vst.msk [vmem:[%s413 + $0x1a8] sm:$0xff] %vm311, %v305
      %441 = vst.msk [vmem:[%s413 + $0x1b0] sm:$0xff] %vm311, %v306
      %442 = vst.msk [vmem:[%s413 + $0x1c8] sm:$0xff] %vm311, %v307
      %443 = vst.msk [vmem:[%s413 + $0x1d0] sm:$0xff] %vm311, %v308
      %444 = vst.msk [vmem:[%s413 + $0x1e8] sm:$0xff] %vm311, %v309
      %445 = vst.msk [vmem:[%s413 + $0x1f0] sm:$0xff] %vm311, %v310
      %v446 = vld [vmem:[#allocation2 + $0xe0] sm:$0xff]
      %v447 = vld [vmem:[#allocation2 + $0xe8] sm:$0xff]
      %v448 = vld [vmem:[#allocation2 + $0xf0] sm:$0xff]
      %v449 = vld [vmem:[#allocation2 + $0xf8] sm:$0x1]
      %v450 = vld [vmem:[#allocation2 + $0x100] sm:$0xff]
      %v451 = vld [vmem:[#allocation2 + $0x108] sm:$0xff]
      %v452 = vld [vmem:[#allocation2 + $0x110] sm:$0xff]
      %v453 = vld [vmem:[#allocation2 + $0x118] sm:$0x1]
      %v454 = vld [vmem:[#allocation2 + $0x120] sm:$0xff]
      %v455 = vld [vmem:[#allocation2 + $0x128] sm:$0xff]
      %v456 = vld [vmem:[#allocation2 + $0x130] sm:$0xff]
      %v457 = vld [vmem:[#allocation2 + $0x138] sm:$0x1]
      %v458 = vld [vmem:[#allocation2 + $0x140] sm:$0xff]
      %v459 = vld [vmem:[#allocation2 + $0x148] sm:$0xff]
      %v460 = vld [vmem:[#allocation2 + $0x150] sm:$0xff]
      %v461 = vld [vmem:[#allocation2 + $0x158] sm:$0x1]
      %v462 = vld [vmem:[#allocation2 + $0x160] sm:$0xff]
      %v463 = vld [vmem:[#allocation2 + $0x168] sm:$0xff]
      %v464 = vld [vmem:[#allocation2 + $0x170] sm:$0xff]
      %v465 = vld [vmem:[#allocation2 + $0x178] sm:$0x1]
      %v466 = vld [vmem:[#allocation2 + $0x180] sm:$0xff]
      %v467 = vld [vmem:[#allocation2 + $0x188] sm:$0xff]
      %v468 = vld [vmem:[#allocation2 + $0x190] sm:$0xff]
      %v469 = vld [vmem:[#allocation2 + $0x198] sm:$0x1]
      %v470 = vld [vmem:[#allocation2 + $0x1a0] sm:$0xff]
      %v471 = vld [vmem:[#allocation2 + $0x1a8] sm:$0xff]
      %v472 = vld [vmem:[#allocation2 + $0x1b0] sm:$0xff]
      %v473 = vld [vmem:[#allocation2 + $0x1b8] sm:$0x1]
      %v474 = vld [vmem:[#allocation2 + $0x1c0] sm:$0xff]
      %v475 = vld [vmem:[#allocation2 + $0x1c8] sm:$0xff]
      %v476 = vld [vmem:[#allocation2 + $0x1d0] sm:$0xff]
      %v477 = vld [vmem:[#allocation2 + $0x1d8] sm:$0x1]
      %v478 = vld [vmem:[#allocation2 + $0x1e0] sm:$0xff]
      %v479 = vld [vmem:[#allocation2 + $0x1e8] sm:$0xff]
      %v480 = vld [vmem:[#allocation2 + $0x1f0] sm:$0xff]
      %v481 = vld [vmem:[#allocation2 + $0x1f8] sm:$0x1]
      %v482 = vld [vmem:[#allocation2 + $0x200] sm:$0xff]
      %v483 = vld [vmem:[#allocation2 + $0x208] sm:$0xff]
      %v484 = vld [vmem:[#allocation2 + $0x210] sm:$0xff]
      %v485 = vld [vmem:[#allocation2 + $0x218] sm:$0x1]
      %v486 = vld [vmem:[#allocation2 + $0x220] sm:$0xff]
      %v487 = vld [vmem:[#allocation2 + $0x228] sm:$0xff]
      %v488 = vld [vmem:[#allocation2 + $0x230] sm:$0xff]
      %v489 = vld [vmem:[#allocation2 + $0x238] sm:$0x1]
      %v490 = vld [vmem:[#allocation2 + $0x240] sm:$0xff]
      %v491 = vld [vmem:[#allocation2 + $0x248] sm:$0xff]
      %v492 = vld [vmem:[#allocation2 + $0x250] sm:$0xff]
      %v493 = vld [vmem:[#allocation2 + $0x258] sm:$0x1]
      %v494 = vld [vmem:[#allocation2 + $0x260] sm:$0xff]
      %v495 = vld [vmem:[#allocation2 + $0x268] sm:$0xff]
      %v496 = vld [vmem:[#allocation2 + $0x270] sm:$0xff]
      %v497 = vld [vmem:[#allocation2 + $0x278] sm:$0x1]
      %v498 = vld [vmem:[#allocation2 + $0x280] sm:$0xff]
      %v499 = vld [vmem:[#allocation2 + $0x288] sm:$0xff]
      %v500 = vld [vmem:[#allocation2 + $0x290] sm:$0xff]
      %v501 = vld [vmem:[#allocation2 + $0x298] sm:$0x1]
      %v502 = vld [vmem:[#allocation2 + $0x2a0] sm:$0xff]
      %v503 = vld [vmem:[#allocation2 + $0x2a8] sm:$0xff]
      %v504 = vld [vmem:[#allocation2 + $0x2b0] sm:$0xff]
      %v505 = vld [vmem:[#allocation2 + $0x2b8] sm:$0x1]
      %v506 = vld [vmem:[#allocation2 + $0x2c0] sm:$0xff]
      %v507 = vld [vmem:[#allocation2 + $0x2c8] sm:$0xff]
      %v508 = vld [vmem:[#allocation2 + $0x2d0] sm:$0xff]
      %v509 = vld [vmem:[#allocation2 + $0x2d8] sm:$0x1]
      %v510 = vld [vmem:[#allocation2 + $0x2e0] sm:$0xff]
      %v511 = vld [vmem:[#allocation2 + $0x2e8] sm:$0xff]
      %v512 = vld [vmem:[#allocation2 + $0x2f0] sm:$0xff]
      %v513 = vld [vmem:[#allocation2 + $0x2f8] sm:$0x1]
      %v514 = vld [vmem:[#allocation2 + $0x300] sm:$0xff]
      %v515 = vld [vmem:[#allocation2 + $0x308] sm:$0xff]
      %v516 = vld [vmem:[#allocation2 + $0x310] sm:$0xff]
      %v517 = vld [vmem:[#allocation2 + $0x318] sm:$0x1]
      %vm550 = vcmask 1046528
      %v551 = vrot.slane %v447, 1
      %v552 = vrot.slane %v448, 1
      %v553 = vsel %vm550, %v551, %v552
      %v554 = vrot.slane %v451, 1
      %v555 = vrot.slane %v452, 1
      %v556 = vsel %vm550, %v554, %v555
      %v557 = vrot.slane %v455, 1
      %v558 = vrot.slane %v456, 1
      %v559 = vsel %vm550, %v557, %v558
      %v560 = vrot.slane %v459, 1
      %v561 = vrot.slane %v460, 1
      %v562 = vsel %vm550, %v560, %v561
      %v563 = vrot.slane %v463, 1
      %v564 = vrot.slane %v464, 1
      %v565 = vsel %vm550, %v563, %v564
      %v566 = vrot.slane %v467, 1
      %v567 = vrot.slane %v468, 1
      %v568 = vsel %vm550, %v566, %v567
      %v569 = vrot.slane %v471, 1
      %v570 = vrot.slane %v472, 1
      %v571 = vsel %vm550, %v569, %v570
      %v572 = vrot.slane %v475, 1
      %v573 = vrot.slane %v476, 1
      %v574 = vsel %vm550, %v572, %v573
      %v575 = vrot.slane %v479, 1
      %v576 = vrot.slane %v480, 1
      %v577 = vsel %vm550, %v575, %v576
      %v578 = vrot.slane %v483, 1
      %v579 = vrot.slane %v484, 1
      %v580 = vsel %vm550, %v578, %v579
      %v581 = vrot.slane %v487, 1
      %v582 = vrot.slane %v488, 1
      %v583 = vsel %vm550, %v581, %v582
      %v584 = vrot.slane %v491, 1
      %v585 = vrot.slane %v492, 1
      %v586 = vsel %vm550, %v584, %v585
      %v587 = vrot.slane %v495, 1
      %v588 = vrot.slane %v496, 1
      %v589 = vsel %vm550, %v587, %v588
      %v590 = vrot.slane %v499, 1
      %v591 = vrot.slane %v500, 1
      %v592 = vsel %vm550, %v590, %v591
      %v593 = vrot.slane %v503, 1
      %v594 = vrot.slane %v504, 1
      %v595 = vsel %vm550, %v593, %v594
      %v596 = vrot.slane %v507, 1
      %v597 = vrot.slane %v508, 1
      %v598 = vsel %vm550, %v596, %v597
      %599 = vrot.lane.b32.xlu0 %v551, 4
      %v600 = vpop.permute.xlu0 %599
      %601 = vrot.lane.b32.xlu0 %v553, 4
      %v602 = vpop.permute.xlu0 %601
      %603 = vrot.lane.b32.xlu0 %v552, 4
      %v604 = vpop.permute.xlu0 %603
      %605 = vrot.lane.b32.xlu0 %v554, 4
      %v606 = vpop.permute.xlu0 %605
      %607 = vrot.lane.b32.xlu0 %v556, 4
      %v608 = vpop.permute.xlu0 %607
      %609 = vrot.lane.b32.xlu0 %v555, 4
      %v610 = vpop.permute.xlu0 %609
      %611 = vrot.lane.b32.xlu0 %v557, 4
      %v612 = vpop.permute.xlu0 %611
      %613 = vrot.lane.b32.xlu0 %v559, 4
      %v614 = vpop.permute.xlu0 %613
      %615 = vrot.lane.b32.xlu0 %v558, 4
      %v616 = vpop.permute.xlu0 %615
      %617 = vrot.lane.b32.xlu0 %v560, 4
      %v618 = vpop.permute.xlu0 %617
      %619 = vrot.lane.b32.xlu0 %v562, 4
      %v620 = vpop.permute.xlu0 %619
      %621 = vrot.lane.b32.xlu0 %v561, 4
      %v622 = vpop.permute.xlu0 %621
      %623 = vrot.lane.b32.xlu0 %v563, 4
      %v624 = vpop.permute.xlu0 %623
      %625 = vrot.lane.b32.xlu0 %v565, 4
      %v626 = vpop.permute.xlu0 %625
      %627 = vrot.lane.b32.xlu0 %v564, 4
      %v628 = vpop.permute.xlu0 %627
      %629 = vrot.lane.b32.xlu0 %v566, 4
      %v630 = vpop.permute.xlu0 %629
      %631 = vrot.lane.b32.xlu0 %v568, 4
      %v632 = vpop.permute.xlu0 %631
      %633 = vrot.lane.b32.xlu0 %v567, 4
      %v634 = vpop.permute.xlu0 %633
      %635 = vrot.lane.b32.xlu0 %v569, 4
      %v636 = vpop.permute.xlu0 %635
      %637 = vrot.lane.b32.xlu0 %v571, 4
      %v638 = vpop.permute.xlu0 %637
      %639 = vrot.lane.b32.xlu0 %v570, 4
      %v640 = vpop.permute.xlu0 %639
      %641 = vrot.lane.b32.xlu0 %v572, 4
      %v642 = vpop.permute.xlu0 %641
      %643 = vrot.lane.b32.xlu0 %v574, 4
      %v644 = vpop.permute.xlu0 %643
      %645 = vrot.lane.b32.xlu0 %v573, 4
      %v646 = vpop.permute.xlu0 %645
      %647 = vrot.lane.b32.xlu0 %v575, 4
      %v648 = vpop.permute.xlu0 %647
      %649 = vrot.lane.b32.xlu0 %v577, 4
      %v650 = vpop.permute.xlu0 %649
      %651 = vrot.lane.b32.xlu0 %v576, 4
      %v652 = vpop.permute.xlu0 %651
      %653 = vrot.lane.b32.xlu0 %v578, 4
      %v654 = vpop.permute.xlu0 %653
      %655 = vrot.lane.b32.xlu0 %v580, 4
      %v656 = vpop.permute.xlu0 %655
      %657 = vrot.lane.b32.xlu0 %v579, 4
      %v658 = vpop.permute.xlu0 %657
      %659 = vrot.lane.b32.xlu0 %v581, 4
      %v660 = vpop.permute.xlu0 %659
      %661 = vrot.lane.b32.xlu0 %v583, 4
      %v662 = vpop.permute.xlu0 %661
      %663 = vrot.lane.b32.xlu0 %v582, 4
      %v664 = vpop.permute.xlu0 %663
      %665 = vrot.lane.b32.xlu0 %v584, 4
      %v666 = vpop.permute.xlu0 %665
      %667 = vrot.lane.b32.xlu0 %v586, 4
      %v668 = vpop.permute.xlu0 %667
      %669 = vrot.lane.b32.xlu0 %v585, 4
      %v670 = vpop.permute.xlu0 %669
      %671 = vrot.lane.b32.xlu0 %v587, 4
      %v672 = vpop.permute.xlu0 %671
      %673 = vrot.lane.b32.xlu0 %v589, 4
      %v674 = vpop.permute.xlu0 %673
      %675 = vrot.lane.b32.xlu0 %v588, 4
      %v676 = vpop.permute.xlu0 %675
      %677 = vrot.lane.b32.xlu0 %v590, 4
      %v678 = vpop.permute.xlu0 %677
      %679 = vrot.lane.b32.xlu0 %v592, 4
      %v680 = vpop.permute.xlu0 %679
      %681 = vrot.lane.b32.xlu0 %v591, 4
      %v682 = vpop.permute.xlu0 %681
      %683 = vrot.lane.b32.xlu0 %v593, 4
      %v684 = vpop.permute.xlu0 %683
      %685 = vrot.lane.b32.xlu0 %v595, 4
      %v686 = vpop.permute.xlu0 %685
      %687 = vrot.lane.b32.xlu0 %v594, 4
      %v688 = vpop.permute.xlu0 %687
      %689 = vrot.lane.b32.xlu0 %v596, 4
      %v690 = vpop.permute.xlu0 %689
      %691 = vrot.lane.b32.xlu0 %v598, 4
      %v692 = vpop.permute.xlu0 %691
      %693 = vrot.lane.b32.xlu0 %v597, 4
      %v694 = vpop.permute.xlu0 %693
      %vm759 = vcmask 1045504
      %v760 = vrot.slane %v447, 2
      %v761 = vrot.slane %v448, 2
      %v762 = vsel %vm759, %v760, %v761
      %v763 = vrot.slane %v449, 2
      %v764 = vsel %vm759, %v761, %v763
      %v765 = vrot.slane %v451, 2
      %v766 = vrot.slane %v452, 2
      %v767 = vsel %vm759, %v765, %v766
      %v768 = vrot.slane %v453, 2
      %v769 = vsel %vm759, %v766, %v768
      %v770 = vrot.slane %v455, 2
      %v771 = vrot.slane %v456, 2
      %v772 = vsel %vm759, %v770, %v771
      %v773 = vrot.slane %v457, 2
      %v774 = vsel %vm759, %v771, %v773
      %v775 = vrot.slane %v459, 2
      %v776 = vrot.slane %v460, 2
      %v777 = vsel %vm759, %v775, %v776
      %v778 = vrot.slane %v461, 2
      %v779 = vsel %vm759, %v776, %v778
      %v780 = vrot.slane %v463, 2
      %v781 = vrot.slane %v464, 2
      %v782 = vsel %vm759, %v780, %v781
      %v783 = vrot.slane %v465, 2
      %v784 = vsel %vm759, %v781, %v783
      %v785 = vrot.slane %v467, 2
      %v786 = vrot.slane %v468, 2
      %v787 = vsel %vm759, %v785, %v786
      %v788 = vrot.slane %v469, 2
      %v789 = vsel %vm759, %v786, %v788
      %v790 = vrot.slane %v471, 2
      %v791 = vrot.slane %v472, 2
      %v792 = vsel %vm759, %v790, %v791
      %v793 = vrot.slane %v473, 2
      %v794 = vsel %vm759, %v791, %v793
      %v795 = vrot.slane %v475, 2
      %v796 = vrot.slane %v476, 2
      %v797 = vsel %vm759, %v795, %v796
      %v798 = vrot.slane %v477, 2
      %v799 = vsel %vm759, %v796, %v798
      %v800 = vrot.slane %v479, 2
      %v801 = vrot.slane %v480, 2
      %v802 = vsel %vm759, %v800, %v801
      %v803 = vrot.slane %v481, 2
      %v804 = vsel %vm759, %v801, %v803
      %v805 = vrot.slane %v483, 2
      %v806 = vrot.slane %v484, 2
      %v807 = vsel %vm759, %v805, %v806
      %v808 = vrot.slane %v485, 2
      %v809 = vsel %vm759, %v806, %v808
      %v810 = vrot.slane %v487, 2
      %v811 = vrot.slane %v488, 2
      %v812 = vsel %vm759, %v810, %v811
      %v813 = vrot.slane %v489, 2
      %v814 = vsel %vm759, %v811, %v813
      %v815 = vrot.slane %v491, 2
      %v816 = vrot.slane %v492, 2
      %v817 = vsel %vm759, %v815, %v816
      %v818 = vrot.slane %v493, 2
      %v819 = vsel %vm759, %v816, %v818
      %v820 = vrot.slane %v495, 2
      %v821 = vrot.slane %v496, 2
      %v822 = vsel %vm759, %v820, %v821
      %v823 = vrot.slane %v497, 2
      %v824 = vsel %vm759, %v821, %v823
      %v825 = vrot.slane %v499, 2
      %v826 = vrot.slane %v500, 2
      %v827 = vsel %vm759, %v825, %v826
      %v828 = vrot.slane %v501, 2
      %v829 = vsel %vm759, %v826, %v828
      %v830 = vrot.slane %v503, 2
      %v831 = vrot.slane %v504, 2
      %v832 = vsel %vm759, %v830, %v831
      %v833 = vrot.slane %v505, 2
      %v834 = vsel %vm759, %v831, %v833
      %v835 = vrot.slane %v507, 2
      %v836 = vrot.slane %v508, 2
      %v837 = vsel %vm759, %v835, %v836
      %v838 = vrot.slane %v509, 2
      %v839 = vsel %vm759, %v836, %v838
      %840 = vrot.lane.b32.xlu0 %v760, 8
      %v841 = vpop.permute.xlu0 %840
      %842 = vrot.lane.b32.xlu0 %v762, 8
      %v843 = vpop.permute.xlu0 %842
      %844 = vrot.lane.b32.xlu0 %v764, 8
      %v845 = vpop.permute.xlu0 %844
      %846 = vrot.lane.b32.xlu0 %v765, 8
      %v847 = vpop.permute.xlu0 %846
      %848 = vrot.lane.b32.xlu0 %v767, 8
      %v849 = vpop.permute.xlu0 %848
      %850 = vrot.lane.b32.xlu0 %v769, 8
      %v851 = vpop.permute.xlu0 %850
      %852 = vrot.lane.b32.xlu0 %v770, 8
      %v853 = vpop.permute.xlu0 %852
      %854 = vrot.lane.b32.xlu0 %v772, 8
      %v855 = vpop.permute.xlu0 %854
      %856 = vrot.lane.b32.xlu0 %v774, 8
      %v857 = vpop.permute.xlu0 %856
      %858 = vrot.lane.b32.xlu0 %v775, 8
      %v859 = vpop.permute.xlu0 %858
      %860 = vrot.lane.b32.xlu0 %v777, 8
      %v861 = vpop.permute.xlu0 %860
      %862 = vrot.lane.b32.xlu0 %v779, 8
      %v863 = vpop.permute.xlu0 %862
      %864 = vrot.lane.b32.xlu0 %v780, 8
      %v865 = vpop.permute.xlu0 %864
      %866 = vrot.lane.b32.xlu0 %v782, 8
      %v867 = vpop.permute.xlu0 %866
      %868 = vrot.lane.b32.xlu0 %v784, 8
      %v869 = vpop.permute.xlu0 %868
      %870 = vrot.lane.b32.xlu0 %v785, 8
      %v871 = vpop.permute.xlu0 %870
      %872 = vrot.lane.b32.xlu0 %v787, 8
      %v873 = vpop.permute.xlu0 %872
      %874 = vrot.lane.b32.xlu0 %v789, 8
      %v875 = vpop.permute.xlu0 %874
      %876 = vrot.lane.b32.xlu0 %v790, 8
      %v877 = vpop.permute.xlu0 %876
      %878 = vrot.lane.b32.xlu0 %v792, 8
      %v879 = vpop.permute.xlu0 %878
      %880 = vrot.lane.b32.xlu0 %v794, 8
      %v881 = vpop.permute.xlu0 %880
      %882 = vrot.lane.b32.xlu0 %v795, 8
      %v883 = vpop.permute.xlu0 %882
      %884 = vrot.lane.b32.xlu0 %v797, 8
      %v885 = vpop.permute.xlu0 %884
      %886 = vrot.lane.b32.xlu0 %v799, 8
      %v887 = vpop.permute.xlu0 %886
      %888 = vrot.lane.b32.xlu0 %v800, 8
      %v889 = vpop.permute.xlu0 %888
      %890 = vrot.lane.b32.xlu0 %v802, 8
      %v891 = vpop.permute.xlu0 %890
      %892 = vrot.lane.b32.xlu0 %v804, 8
      %v893 = vpop.permute.xlu0 %892
      %894 = vrot.lane.b32.xlu0 %v805, 8
      %v895 = vpop.permute.xlu0 %894
      %896 = vrot.lane.b32.xlu0 %v807, 8
      %v897 = vpop.permute.xlu0 %896
      %898 = vrot.lane.b32.xlu0 %v809, 8
      %v899 = vpop.permute.xlu0 %898
      %900 = vrot.lane.b32.xlu0 %v810, 8
      %v901 = vpop.permute.xlu0 %900
      %902 = vrot.lane.b32.xlu0 %v812, 8
      %v903 = vpop.permute.xlu0 %902
      %904 = vrot.lane.b32.xlu0 %v814, 8
      %v905 = vpop.permute.xlu0 %904
      %906 = vrot.lane.b32.xlu0 %v815, 8
      %v907 = vpop.permute.xlu0 %906
      %908 = vrot.lane.b32.xlu0 %v817, 8
      %v909 = vpop.permute.xlu0 %908
      %910 = vrot.lane.b32.xlu0 %v819, 8
      %v911 = vpop.permute.xlu0 %910
      %912 = vrot.lane.b32.xlu0 %v820, 8
      %v913 = vpop.permute.xlu0 %912
      %914 = vrot.lane.b32.xlu0 %v822, 8
      %v915 = vpop.permute.xlu0 %914
      %916 = vrot.lane.b32.xlu0 %v824, 8
      %v917 = vpop.permute.xlu0 %916
      %918 = vrot.lane.b32.xlu0 %v825, 8
      %v919 = vpop.permute.xlu0 %918
      %920 = vrot.lane.b32.xlu0 %v827, 8
      %v921 = vpop.permute.xlu0 %920
      %922 = vrot.lane.b32.xlu0 %v829, 8
      %v923 = vpop.permute.xlu0 %922
      %924 = vrot.lane.b32.xlu0 %v830, 8
      %v925 = vpop.permute.xlu0 %924
      %926 = vrot.lane.b32.xlu0 %v832, 8
      %v927 = vpop.permute.xlu0 %926
      %928 = vrot.lane.b32.xlu0 %v834, 8
      %v929 = vpop.permute.xlu0 %928
      %930 = vrot.lane.b32.xlu0 %v835, 8
      %v931 = vpop.permute.xlu0 %930
      %932 = vrot.lane.b32.xlu0 %v837, 8
      %v933 = vpop.permute.xlu0 %932
      %934 = vrot.lane.b32.xlu0 %v839, 8
      %v935 = vpop.permute.xlu0 %934
      %1002 = vrot.lane.b32.xlu0 %v450, 12
      %v1003 = vpop.permute.xlu0 %1002
      %1004 = vrot.lane.b32.xlu0 %v451, 12
      %v1005 = vpop.permute.xlu0 %1004
      %1006 = vrot.lane.b32.xlu0 %v452, 12
      %v1007 = vpop.permute.xlu0 %1006
      %1008 = vrot.lane.b32.xlu0 %v454, 12
      %v1009 = vpop.permute.xlu0 %1008
      %1010 = vrot.lane.b32.xlu0 %v455, 12
      %v1011 = vpop.permute.xlu0 %1010
      %1012 = vrot.lane.b32.xlu0 %v456, 12
      %v1013 = vpop.permute.xlu0 %1012
      %1014 = vrot.lane.b32.xlu0 %v458, 12
      %v1015 = vpop.permute.xlu0 %1014
      %1016 = vrot.lane.b32.xlu0 %v459, 12
      %v1017 = vpop.permute.xlu0 %1016
      %1018 = vrot.lane.b32.xlu0 %v460, 12
      %v1019 = vpop.permute.xlu0 %1018
      %1020 = vrot.lane.b32.xlu0 %v462, 12
      %v1021 = vpop.permute.xlu0 %1020
      %1022 = vrot.lane.b32.xlu0 %v463, 12
      %v1023 = vpop.permute.xlu0 %1022
      %1024 = vrot.lane.b32.xlu0 %v464, 12
      %v1025 = vpop.permute.xlu0 %1024
      %1026 = vrot.lane.b32.xlu0 %v466, 12
      %v1027 = vpop.permute.xlu0 %1026
      %1028 = vrot.lane.b32.xlu0 %v467, 12
      %v1029 = vpop.permute.xlu0 %1028
      %1030 = vrot.lane.b32.xlu0 %v468, 12
      %v1031 = vpop.permute.xlu0 %1030
      %1032 = vrot.lane.b32.xlu0 %v470, 12
      %v1033 = vpop.permute.xlu0 %1032
      %1034 = vrot.lane.b32.xlu0 %v471, 12
      %v1035 = vpop.permute.xlu0 %1034
      %1036 = vrot.lane.b32.xlu0 %v472, 12
      %v1037 = vpop.permute.xlu0 %1036
      %1038 = vrot.lane.b32.xlu0 %v474, 12
      %v1039 = vpop.permute.xlu0 %1038
      %1040 = vrot.lane.b32.xlu0 %v475, 12
      %v1041 = vpop.permute.xlu0 %1040
      %1042 = vrot.lane.b32.xlu0 %v476, 12
      %v1043 = vpop.permute.xlu0 %1042
      %1044 = vrot.lane.b32.xlu0 %v478, 12
      %v1045 = vpop.permute.xlu0 %1044
      %1046 = vrot.lane.b32.xlu0 %v479, 12
      %v1047 = vpop.permute.xlu0 %1046
      %1048 = vrot.lane.b32.xlu0 %v480, 12
      %v1049 = vpop.permute.xlu0 %1048
      %1050 = vrot.lane.b32.xlu0 %v482, 12
      %v1051 = vpop.permute.xlu0 %1050
      %1052 = vrot.lane.b32.xlu0 %v483, 12
      %v1053 = vpop.permute.xlu0 %1052
      %1054 = vrot.lane.b32.xlu0 %v484, 12
      %v1055 = vpop.permute.xlu0 %1054
      %1056 = vrot.lane.b32.xlu0 %v486, 12
      %v1057 = vpop.permute.xlu0 %1056
      %1058 = vrot.lane.b32.xlu0 %v487, 12
      %v1059 = vpop.permute.xlu0 %1058
      %1060 = vrot.lane.b32.xlu0 %v488, 12
      %v1061 = vpop.permute.xlu0 %1060
      %1062 = vrot.lane.b32.xlu0 %v490, 12
      %v1063 = vpop.permute.xlu0 %1062
      %1064 = vrot.lane.b32.xlu0 %v491, 12
      %v1065 = vpop.permute.xlu0 %1064
      %1066 = vrot.lane.b32.xlu0 %v492, 12
      %v1067 = vpop.permute.xlu0 %1066
      %1068 = vrot.lane.b32.xlu0 %v494, 12
      %v1069 = vpop.permute.xlu0 %1068
      %1070 = vrot.lane.b32.xlu0 %v495, 12
      %v1071 = vpop.permute.xlu0 %1070
      %1072 = vrot.lane.b32.xlu0 %v496, 12
      %v1073 = vpop.permute.xlu0 %1072
      %1074 = vrot.lane.b32.xlu0 %v498, 12
      %v1075 = vpop.permute.xlu0 %1074
      %1076 = vrot.lane.b32.xlu0 %v499, 12
      %v1077 = vpop.permute.xlu0 %1076
      %1078 = vrot.lane.b32.xlu0 %v500, 12
      %v1079 = vpop.permute.xlu0 %1078
      %1080 = vrot.lane.b32.xlu0 %v502, 12
      %v1081 = vpop.permute.xlu0 %1080
      %1082 = vrot.lane.b32.xlu0 %v503, 12
      %v1083 = vpop.permute.xlu0 %1082
      %1084 = vrot.lane.b32.xlu0 %v504, 12
      %v1085 = vpop.permute.xlu0 %1084
      %1086 = vrot.lane.b32.xlu0 %v506, 12
      %v1087 = vpop.permute.xlu0 %1086
      %1088 = vrot.lane.b32.xlu0 %v507, 12
      %v1089 = vpop.permute.xlu0 %1088
      %1090 = vrot.lane.b32.xlu0 %v508, 12
      %v1091 = vpop.permute.xlu0 %1090
      %1092 = vrot.lane.b32.xlu0 %v510, 12
      %v1093 = vpop.permute.xlu0 %1092
      %1094 = vrot.lane.b32.xlu0 %v511, 12
      %v1095 = vpop.permute.xlu0 %1094
      %1096 = vrot.lane.b32.xlu0 %v512, 12
      %v1097 = vpop.permute.xlu0 %1096
      %v1146 = vrot.slane %v511, 1
      %v1147 = vrot.slane %v512, 1
      %v1148 = vsel %vm550, %v1146, %v1147
      %1149 = vrot.lane.b32.xlu0 %v554, 16
      %v1150 = vpop.permute.xlu0 %1149
      %1151 = vrot.lane.b32.xlu0 %v556, 16
      %v1152 = vpop.permute.xlu0 %1151
      %1153 = vrot.lane.b32.xlu0 %v555, 16
      %v1154 = vpop.permute.xlu0 %1153
      %1155 = vrot.lane.b32.xlu0 %v557, 16
      %v1156 = vpop.permute.xlu0 %1155
      %1157 = vrot.lane.b32.xlu0 %v559, 16
      %v1158 = vpop.permute.xlu0 %1157
      %1159 = vrot.lane.b32.xlu0 %v558, 16
      %v1160 = vpop.permute.xlu0 %1159
      %1161 = vrot.lane.b32.xlu0 %v560, 16
      %v1162 = vpop.permute.xlu0 %1161
      %1163 = vrot.lane.b32.xlu0 %v562, 16
      %v1164 = vpop.permute.xlu0 %1163
      %1165 = vrot.lane.b32.xlu0 %v561, 16
      %v1166 = vpop.permute.xlu0 %1165
      %1167 = vrot.lane.b32.xlu0 %v563, 16
      %v1168 = vpop.permute.xlu0 %1167
      %1169 = vrot.lane.b32.xlu0 %v565, 16
      %v1170 = vpop.permute.xlu0 %1169
      %1171 = vrot.lane.b32.xlu0 %v564, 16
      %v1172 = vpop.permute.xlu0 %1171
      %1173 = vrot.lane.b32.xlu0 %v566, 16
      %v1174 = vpop.permute.xlu0 %1173
      %1175 = vrot.lane.b32.xlu0 %v568, 16
      %v1176 = vpop.permute.xlu0 %1175
      %1177 = vrot.lane.b32.xlu0 %v567, 16
      %v1178 = vpop.permute.xlu0 %1177
      %1179 = vrot.lane.b32.xlu0 %v569, 16
      %v1180 = vpop.permute.xlu0 %1179
      %1181 = vrot.lane.b32.xlu0 %v571, 16
      %v1182 = vpop.permute.xlu0 %1181
      %1183 = vrot.lane.b32.xlu0 %v570, 16
      %v1184 = vpop.permute.xlu0 %1183
      %1185 = vrot.lane.b32.xlu0 %v572, 16
      %v1186 = vpop.permute.xlu0 %1185
      %1187 = vrot.lane.b32.xlu0 %v574, 16
      %v1188 = vpop.permute.xlu0 %1187
      %1189 = vrot.lane.b32.xlu0 %v573, 16
      %v1190 = vpop.permute.xlu0 %1189
      %1191 = vrot.lane.b32.xlu0 %v575, 16
      %v1192 = vpop.permute.xlu0 %1191
      %1193 = vrot.lane.b32.xlu0 %v577, 16
      %v1194 = vpop.permute.xlu0 %1193
      %1195 = vrot.lane.b32.xlu0 %v576, 16
      %v1196 = vpop.permute.xlu0 %1195
      %1197 = vrot.lane.b32.xlu0 %v578, 16
      %v1198 = vpop.permute.xlu0 %1197
      %1199 = vrot.lane.b32.xlu0 %v580, 16
      %v1200 = vpop.permute.xlu0 %1199
      %1201 = vrot.lane.b32.xlu0 %v579, 16
      %v1202 = vpop.permute.xlu0 %1201
      %1203 = vrot.lane.b32.xlu0 %v581, 16
      %v1204 = vpop.permute.xlu0 %1203
      %1205 = vrot.lane.b32.xlu0 %v583, 16
      %v1206 = vpop.permute.xlu0 %1205
      %1207 = vrot.lane.b32.xlu0 %v582, 16
      %v1208 = vpop.permute.xlu0 %1207
      %1209 = vrot.lane.b32.xlu0 %v584, 16
      %v1210 = vpop.permute.xlu0 %1209
      %1211 = vrot.lane.b32.xlu0 %v586, 16
      %v1212 = vpop.permute.xlu0 %1211
      %1213 = vrot.lane.b32.xlu0 %v585, 16
      %v1214 = vpop.permute.xlu0 %1213
      %1215 = vrot.lane.b32.xlu0 %v587, 16
      %v1216 = vpop.permute.xlu0 %1215
      %1217 = vrot.lane.b32.xlu0 %v589, 16
      %v1218 = vpop.permute.xlu0 %1217
      %1219 = vrot.lane.b32.xlu0 %v588, 16
      %v1220 = vpop.permute.xlu0 %1219
      %1221 = vrot.lane.b32.xlu0 %v590, 16
      %v1222 = vpop.permute.xlu0 %1221
      %1223 = vrot.lane.b32.xlu0 %v592, 16
      %v1224 = vpop.permute.xlu0 %1223
      %1225 = vrot.lane.b32.xlu0 %v591, 16
      %v1226 = vpop.permute.xlu0 %1225
      %1227 = vrot.lane.b32.xlu0 %v593, 16
      %v1228 = vpop.permute.xlu0 %1227
      %1229 = vrot.lane.b32.xlu0 %v595, 16
      %v1230 = vpop.permute.xlu0 %1229
      %1231 = vrot.lane.b32.xlu0 %v594, 16
      %v1232 = vpop.permute.xlu0 %1231
      %1233 = vrot.lane.b32.xlu0 %v596, 16
      %v1234 = vpop.permute.xlu0 %1233
      %1235 = vrot.lane.b32.xlu0 %v598, 16
      %v1236 = vpop.permute.xlu0 %1235
      %1237 = vrot.lane.b32.xlu0 %v597, 16
      %v1238 = vpop.permute.xlu0 %1237
      %1239 = vrot.lane.b32.xlu0 %v1146, 16
      %v1240 = vpop.permute.xlu0 %1239
      %1241 = vrot.lane.b32.xlu0 %v1148, 16
      %v1242 = vpop.permute.xlu0 %1241
      %1243 = vrot.lane.b32.xlu0 %v1147, 16
      %v1244 = vpop.permute.xlu0 %1243
      %v1294 = vrot.slane %v511, 2
      %v1295 = vrot.slane %v512, 2
      %v1296 = vsel %vm759, %v1294, %v1295
      %v1297 = vrot.slane %v513, 2
      %v1298 = vsel %vm759, %v1295, %v1297
      %1299 = vrot.lane.b32.xlu0 %v765, 20
      %v1300 = vpop.permute.xlu0 %1299
      %1301 = vrot.lane.b32.xlu0 %v767, 20
      %v1302 = vpop.permute.xlu0 %1301
      %1303 = vrot.lane.b32.xlu0 %v769, 20
      %v1304 = vpop.permute.xlu0 %1303
      %1305 = vrot.lane.b32.xlu0 %v770, 20
      %v1306 = vpop.permute.xlu0 %1305
      %1307 = vrot.lane.b32.xlu0 %v772, 20
      %v1308 = vpop.permute.xlu0 %1307
      %1309 = vrot.lane.b32.xlu0 %v774, 20
      %v1310 = vpop.permute.xlu0 %1309
      %1311 = vrot.lane.b32.xlu0 %v775, 20
      %v1312 = vpop.permute.xlu0 %1311
      %1313 = vrot.lane.b32.xlu0 %v777, 20
      %v1314 = vpop.permute.xlu0 %1313
      %1315 = vrot.lane.b32.xlu0 %v779, 20
      %v1316 = vpop.permute.xlu0 %1315
      %1317 = vrot.lane.b32.xlu0 %v780, 20
      %v1318 = vpop.permute.xlu0 %1317
      %1319 = vrot.lane.b32.xlu0 %v782, 20
      %v1320 = vpop.permute.xlu0 %1319
      %1321 = vrot.lane.b32.xlu0 %v784, 20
      %v1322 = vpop.permute.xlu0 %1321
      %1323 = vrot.lane.b32.xlu0 %v785, 20
      %v1324 = vpop.permute.xlu0 %1323
      %1325 = vrot.lane.b32.xlu0 %v787, 20
      %v1326 = vpop.permute.xlu0 %1325
      %1327 = vrot.lane.b32.xlu0 %v789, 20
      %v1328 = vpop.permute.xlu0 %1327
      %1329 = vrot.lane.b32.xlu0 %v790, 20
      %v1330 = vpop.permute.xlu0 %1329
      %1331 = vrot.lane.b32.xlu0 %v792, 20
      %v1332 = vpop.permute.xlu0 %1331
      %1333 = vrot.lane.b32.xlu0 %v794, 20
      %v1334 = vpop.permute.xlu0 %1333
      %1335 = vrot.lane.b32.xlu0 %v795, 20
      %v1336 = vpop.permute.xlu0 %1335
      %1337 = vrot.lane.b32.xlu0 %v797, 20
      %v1338 = vpop.permute.xlu0 %1337
      %1339 = vrot.lane.b32.xlu0 %v799, 20
      %v1340 = vpop.permute.xlu0 %1339
      %1341 = vrot.lane.b32.xlu0 %v800, 20
      %v1342 = vpop.permute.xlu0 %1341
      %1343 = vrot.lane.b32.xlu0 %v802, 20
      %v1344 = vpop.permute.xlu0 %1343
      %1345 = vrot.lane.b32.xlu0 %v804, 20
      %v1346 = vpop.permute.xlu0 %1345
      %1347 = vrot.lane.b32.xlu0 %v805, 20
      %v1348 = vpop.permute.xlu0 %1347
      %1349 = vrot.lane.b32.xlu0 %v807, 20
      %v1350 = vpop.permute.xlu0 %1349
      %1351 = vrot.lane.b32.xlu0 %v809, 20
      %v1352 = vpop.permute.xlu0 %1351
      %1353 = vrot.lane.b32.xlu0 %v810, 20
      %v1354 = vpop.permute.xlu0 %1353
      %1355 = vrot.lane.b32.xlu0 %v812, 20
      %v1356 = vpop.permute.xlu0 %1355
      %1357 = vrot.lane.b32.xlu0 %v814, 20
      %v1358 = vpop.permute.xlu0 %1357
      %1359 = vrot.lane.b32.xlu0 %v815, 20
      %v1360 = vpop.permute.xlu0 %1359
      %1361 = vrot.lane.b32.xlu0 %v817, 20
      %v1362 = vpop.permute.xlu0 %1361
      %1363 = vrot.lane.b32.xlu0 %v819, 20
      %v1364 = vpop.permute.xlu0 %1363
      %1365 = vrot.lane.b32.xlu0 %v820, 20
      %v1366 = vpop.permute.xlu0 %1365
      %1367 = vrot.lane.b32.xlu0 %v822, 20
      %v1368 = vpop.permute.xlu0 %1367
      %1369 = vrot.lane.b32.xlu0 %v824, 20
      %v1370 = vpop.permute.xlu0 %1369
      %1371 = vrot.lane.b32.xlu0 %v825, 20
      %v1372 = vpop.permute.xlu0 %1371
      %1373 = vrot.lane.b32.xlu0 %v827, 20
      %v1374 = vpop.permute.xlu0 %1373
      %1375 = vrot.lane.b32.xlu0 %v829, 20
      %v1376 = vpop.permute.xlu0 %1375
      %1377 = vrot.lane.b32.xlu0 %v830, 20
      %v1378 = vpop.permute.xlu0 %1377
      %1379 = vrot.lane.b32.xlu0 %v832, 20
      %v1380 = vpop.permute.xlu0 %1379
      %1381 = vrot.lane.b32.xlu0 %v834, 20
      %v1382 = vpop.permute.xlu0 %1381
      %1383 = vrot.lane.b32.xlu0 %v835, 20
      %v1384 = vpop.permute.xlu0 %1383
      %1385 = vrot.lane.b32.xlu0 %v837, 20
      %v1386 = vpop.permute.xlu0 %1385
      %1387 = vrot.lane.b32.xlu0 %v839, 20
      %v1388 = vpop.permute.xlu0 %1387
      %1389 = vrot.lane.b32.xlu0 %v1294, 20
      %v1390 = vpop.permute.xlu0 %1389
      %1391 = vrot.lane.b32.xlu0 %v1296, 20
      %v1392 = vpop.permute.xlu0 %1391
      %1393 = vrot.lane.b32.xlu0 %v1298, 20
      %v1394 = vpop.permute.xlu0 %1393
      %1446 = vrot.lane.b32.xlu0 %v454, 24
      %v1447 = vpop.permute.xlu0 %1446
      %1448 = vrot.lane.b32.xlu0 %v455, 24
      %v1449 = vpop.permute.xlu0 %1448
      %1450 = vrot.lane.b32.xlu0 %v456, 24
      %v1451 = vpop.permute.xlu0 %1450
      %1452 = vrot.lane.b32.xlu0 %v458, 24
      %v1453 = vpop.permute.xlu0 %1452
      %1454 = vrot.lane.b32.xlu0 %v459, 24
      %v1455 = vpop.permute.xlu0 %1454
      %1456 = vrot.lane.b32.xlu0 %v460, 24
      %v1457 = vpop.permute.xlu0 %1456
      %1458 = vrot.lane.b32.xlu0 %v462, 24
      %v1459 = vpop.permute.xlu0 %1458
      %1460 = vrot.lane.b32.xlu0 %v463, 24
      %v1461 = vpop.permute.xlu0 %1460
      %1462 = vrot.lane.b32.xlu0 %v464, 24
      %v1463 = vpop.permute.xlu0 %1462
      %1464 = vrot.lane.b32.xlu0 %v466, 24
      %v1465 = vpop.permute.xlu0 %1464
      %1466 = vrot.lane.b32.xlu0 %v467, 24
      %v1467 = vpop.permute.xlu0 %1466
      %1468 = vrot.lane.b32.xlu0 %v468, 24
      %v1469 = vpop.permute.xlu0 %1468
      %1470 = vrot.lane.b32.xlu0 %v470, 24
      %v1471 = vpop.permute.xlu0 %1470
      %1472 = vrot.lane.b32.xlu0 %v471, 24
      %v1473 = vpop.permute.xlu0 %1472
      %1474 = vrot.lane.b32.xlu0 %v472, 24
      %v1475 = vpop.permute.xlu0 %1474
      %1476 = vrot.lane.b32.xlu0 %v474, 24
      %v1477 = vpop.permute.xlu0 %1476
      %1478 = vrot.lane.b32.xlu0 %v475, 24
      %v1479 = vpop.permute.xlu0 %1478
      %1480 = vrot.lane.b32.xlu0 %v476, 24
      %v1481 = vpop.permute.xlu0 %1480
      %1482 = vrot.lane.b32.xlu0 %v478, 24
      %v1483 = vpop.permute.xlu0 %1482
      %1484 = vrot.lane.b32.xlu0 %v479, 24
      %v1485 = vpop.permute.xlu0 %1484
      %1486 = vrot.lane.b32.xlu0 %v480, 24
      %v1487 = vpop.permute.xlu0 %1486
      %1488 = vrot.lane.b32.xlu0 %v482, 24
      %v1489 = vpop.permute.xlu0 %1488
      %1490 = vrot.lane.b32.xlu0 %v483, 24
      %v1491 = vpop.permute.xlu0 %1490
      %1492 = vrot.lane.b32.xlu0 %v484, 24
      %v1493 = vpop.permute.xlu0 %1492
      %1494 = vrot.lane.b32.xlu0 %v486, 24
      %v1495 = vpop.permute.xlu0 %1494
      %1496 = vrot.lane.b32.xlu0 %v487, 24
      %v1497 = vpop.permute.xlu0 %1496
      %1498 = vrot.lane.b32.xlu0 %v488, 24
      %v1499 = vpop.permute.xlu0 %1498
      %1500 = vrot.lane.b32.xlu0 %v490, 24
      %v1501 = vpop.permute.xlu0 %1500
      %1502 = vrot.lane.b32.xlu0 %v491, 24
      %v1503 = vpop.permute.xlu0 %1502
      %1504 = vrot.lane.b32.xlu0 %v492, 24
      %v1505 = vpop.permute.xlu0 %1504
      %1506 = vrot.lane.b32.xlu0 %v494, 24
      %v1507 = vpop.permute.xlu0 %1506
      %1508 = vrot.lane.b32.xlu0 %v495, 24
      %v1509 = vpop.permute.xlu0 %1508
      %1510 = vrot.lane.b32.xlu0 %v496, 24
      %v1511 = vpop.permute.xlu0 %1510
      %1512 = vrot.lane.b32.xlu0 %v498, 24
      %v1513 = vpop.permute.xlu0 %1512
      %1514 = vrot.lane.b32.xlu0 %v499, 24
      %v1515 = vpop.permute.xlu0 %1514
      %1516 = vrot.lane.b32.xlu0 %v500, 24
      %v1517 = vpop.permute.xlu0 %1516
      %1518 = vrot.lane.b32.xlu0 %v502, 24
      %v1519 = vpop.permute.xlu0 %1518
      %1520 = vrot.lane.b32.xlu0 %v503, 24
      %v1521 = vpop.permute.xlu0 %1520
      %1522 = vrot.lane.b32.xlu0 %v504, 24
      %v1523 = vpop.permute.xlu0 %1522
      %1524 = vrot.lane.b32.xlu0 %v506, 24
      %v1525 = vpop.permute.xlu0 %1524
      %1526 = vrot.lane.b32.xlu0 %v507, 24
      %v1527 = vpop.permute.xlu0 %1526
      %1528 = vrot.lane.b32.xlu0 %v508, 24
      %v1529 = vpop.permute.xlu0 %1528
      %1530 = vrot.lane.b32.xlu0 %v510, 24
      %v1531 = vpop.permute.xlu0 %1530
      %1532 = vrot.lane.b32.xlu0 %v511, 24
      %v1533 = vpop.permute.xlu0 %1532
      %1534 = vrot.lane.b32.xlu0 %v512, 24
      %v1535 = vpop.permute.xlu0 %1534
      %1536 = vrot.lane.b32.xlu0 %v514, 24
      %v1537 = vpop.permute.xlu0 %1536
      %1538 = vrot.lane.b32.xlu0 %v515, 24
      %v1539 = vpop.permute.xlu0 %1538
      %1540 = vrot.lane.b32.xlu0 %v516, 24
      %v1541 = vpop.permute.xlu0 %1540
      %v1590 = vrot.slane %v515, 1
      %v1591 = vrot.slane %v516, 1
      %v1592 = vsel %vm550, %v1590, %v1591
      %1593 = vrot.lane.b32.xlu0 %v557, 28
      %v1594 = vpop.permute.xlu0 %1593
      %1595 = vrot.lane.b32.xlu0 %v559, 28
      %v1596 = vpop.permute.xlu0 %1595
      %1597 = vrot.lane.b32.xlu0 %v558, 28
      %v1598 = vpop.permute.xlu0 %1597
      %1599 = vrot.lane.b32.xlu0 %v560, 28
      %v1600 = vpop.permute.xlu0 %1599
      %1601 = vrot.lane.b32.xlu0 %v562, 28
      %v1602 = vpop.permute.xlu0 %1601
      %1603 = vrot.lane.b32.xlu0 %v561, 28
      %v1604 = vpop.permute.xlu0 %1603
      %1605 = vrot.lane.b32.xlu0 %v563, 28
      %v1606 = vpop.permute.xlu0 %1605
      %1607 = vrot.lane.b32.xlu0 %v565, 28
      %v1608 = vpop.permute.xlu0 %1607
      %1609 = vrot.lane.b32.xlu0 %v564, 28
      %v1610 = vpop.permute.xlu0 %1609
      %1611 = vrot.lane.b32.xlu0 %v566, 28
      %v1612 = vpop.permute.xlu0 %1611
      %1613 = vrot.lane.b32.xlu0 %v568, 28
      %v1614 = vpop.permute.xlu0 %1613
      %1615 = vrot.lane.b32.xlu0 %v567, 28
      %v1616 = vpop.permute.xlu0 %1615
      %1617 = vrot.lane.b32.xlu0 %v569, 28
      %v1618 = vpop.permute.xlu0 %1617
      %1619 = vrot.lane.b32.xlu0 %v571, 28
      %v1620 = vpop.permute.xlu0 %1619
      %1621 = vrot.lane.b32.xlu0 %v570, 28
      %v1622 = vpop.permute.xlu0 %1621
      %1623 = vrot.lane.b32.xlu0 %v572, 28
      %v1624 = vpop.permute.xlu0 %1623
      %1625 = vrot.lane.b32.xlu0 %v574, 28
      %v1626 = vpop.permute.xlu0 %1625
      %1627 = vrot.lane.b32.xlu0 %v573, 28
      %v1628 = vpop.permute.xlu0 %1627
      %1629 = vrot.lane.b32.xlu0 %v575, 28
      %v1630 = vpop.permute.xlu0 %1629
      %1631 = vrot.lane.b32.xlu0 %v577, 28
      %v1632 = vpop.permute.xlu0 %1631
      %1633 = vrot.lane.b32.xlu0 %v576, 28
      %v1634 = vpop.permute.xlu0 %1633
      %1635 = vrot.lane.b32.xlu0 %v578, 28
      %v1636 = vpop.permute.xlu0 %1635
      %1637 = vrot.lane.b32.xlu0 %v580, 28
      %v1638 = vpop.permute.xlu0 %1637
      %1639 = vrot.lane.b32.xlu0 %v579, 28
      %v1640 = vpop.permute.xlu0 %1639
      %1641 = vrot.lane.b32.xlu0 %v581, 28
      %v1642 = vpop.permute.xlu0 %1641
      %1643 = vrot.lane.b32.xlu0 %v583, 28
      %v1644 = vpop.permute.xlu0 %1643
      %1645 = vrot.lane.b32.xlu0 %v582, 28
      %v1646 = vpop.permute.xlu0 %1645
      %1647 = vrot.lane.b32.xlu0 %v584, 28
      %v1648 = vpop.permute.xlu0 %1647
      %1649 = vrot.lane.b32.xlu0 %v586, 28
      %v1650 = vpop.permute.xlu0 %1649
      %1651 = vrot.lane.b32.xlu0 %v585, 28
      %v1652 = vpop.permute.xlu0 %1651
      %1653 = vrot.lane.b32.xlu0 %v587, 28
      %v1654 = vpop.permute.xlu0 %1653
      %1655 = vrot.lane.b32.xlu0 %v589, 28
      %v1656 = vpop.permute.xlu0 %1655
      %1657 = vrot.lane.b32.xlu0 %v588, 28
      %v1658 = vpop.permute.xlu0 %1657
      %1659 = vrot.lane.b32.xlu0 %v590, 28
      %v1660 = vpop.permute.xlu0 %1659
      %1661 = vrot.lane.b32.xlu0 %v592, 28
      %v1662 = vpop.permute.xlu0 %1661
      %1663 = vrot.lane.b32.xlu0 %v591, 28
      %v1664 = vpop.permute.xlu0 %1663
      %1665 = vrot.lane.b32.xlu0 %v593, 28
      %v1666 = vpop.permute.xlu0 %1665
      %1667 = vrot.lane.b32.xlu0 %v595, 28
      %v1668 = vpop.permute.xlu0 %1667
      %1669 = vrot.lane.b32.xlu0 %v594, 28
      %v1670 = vpop.permute.xlu0 %1669
      %1671 = vrot.lane.b32.xlu0 %v596, 28
      %v1672 = vpop.permute.xlu0 %1671
      %1673 = vrot.lane.b32.xlu0 %v598, 28
      %v1674 = vpop.permute.xlu0 %1673
      %1675 = vrot.lane.b32.xlu0 %v597, 28
      %v1676 = vpop.permute.xlu0 %1675
      %1677 = vrot.lane.b32.xlu0 %v1146, 28
      %v1678 = vpop.permute.xlu0 %1677
      %1679 = vrot.lane.b32.xlu0 %v1148, 28
      %v1680 = vpop.permute.xlu0 %1679
      %1681 = vrot.lane.b32.xlu0 %v1147, 28
      %v1682 = vpop.permute.xlu0 %1681
      %1683 = vrot.lane.b32.xlu0 %v1590, 28
      %v1684 = vpop.permute.xlu0 %1683
      %1685 = vrot.lane.b32.xlu0 %v1592, 28
      %v1686 = vpop.permute.xlu0 %1685
      %1687 = vrot.lane.b32.xlu0 %v1591, 28
      %v1688 = vpop.permute.xlu0 %1687
      %v1738 = vrot.slane %v515, 2
      %v1739 = vrot.slane %v516, 2
      %v1740 = vsel %vm759, %v1738, %v1739
      %v1741 = vrot.slane %v517, 2
      %v1742 = vsel %vm759, %v1739, %v1741
      %1743 = vrot.lane.b32.xlu0 %v770, 32
      %v1744 = vpop.permute.xlu0 %1743
      %1745 = vrot.lane.b32.xlu0 %v772, 32
      %v1746 = vpop.permute.xlu0 %1745
      %1747 = vrot.lane.b32.xlu0 %v774, 32
      %v1748 = vpop.permute.xlu0 %1747
      %1749 = vrot.lane.b32.xlu0 %v775, 32
      %v1750 = vpop.permute.xlu0 %1749
      %1751 = vrot.lane.b32.xlu0 %v777, 32
      %v1752 = vpop.permute.xlu0 %1751
      %1753 = vrot.lane.b32.xlu0 %v779, 32
      %v1754 = vpop.permute.xlu0 %1753
      %1755 = vrot.lane.b32.xlu0 %v780, 32
      %v1756 = vpop.permute.xlu0 %1755
      %1757 = vrot.lane.b32.xlu0 %v782, 32
      %v1758 = vpop.permute.xlu0 %1757
      %1759 = vrot.lane.b32.xlu0 %v784, 32
      %v1760 = vpop.permute.xlu0 %1759
      %1761 = vrot.lane.b32.xlu0 %v785, 32
      %v1762 = vpop.permute.xlu0 %1761
      %1763 = vrot.lane.b32.xlu0 %v787, 32
      %v1764 = vpop.permute.xlu0 %1763
      %1765 = vrot.lane.b32.xlu0 %v789, 32
      %v1766 = vpop.permute.xlu0 %1765
      %1767 = vrot.lane.b32.xlu0 %v790, 32
      %v1768 = vpop.permute.xlu0 %1767
      %1769 = vrot.lane.b32.xlu0 %v792, 32
      %v1770 = vpop.permute.xlu0 %1769
      %1771 = vrot.lane.b32.xlu0 %v794, 32
      %v1772 = vpop.permute.xlu0 %1771
      %1773 = vrot.lane.b32.xlu0 %v795, 32
      %v1774 = vpop.permute.xlu0 %1773
      %1775 = vrot.lane.b32.xlu0 %v797, 32
      %v1776 = vpop.permute.xlu0 %1775
      %1777 = vrot.lane.b32.xlu0 %v799, 32
      %v1778 = vpop.permute.xlu0 %1777
      %1779 = vrot.lane.b32.xlu0 %v800, 32
      %v1780 = vpop.permute.xlu0 %1779
      %1781 = vrot.lane.b32.xlu0 %v802, 32
      %v1782 = vpop.permute.xlu0 %1781
      %1783 = vrot.lane.b32.xlu0 %v804, 32
      %v1784 = vpop.permute.xlu0 %1783
      %1785 = vrot.lane.b32.xlu0 %v805, 32
      %v1786 = vpop.permute.xlu0 %1785
      %1787 = vrot.lane.b32.xlu0 %v807, 32
      %v1788 = vpop.permute.xlu0 %1787
      %1789 = vrot.lane.b32.xlu0 %v809, 32
      %v1790 = vpop.permute.xlu0 %1789
      %1791 = vrot.lane.b32.xlu0 %v810, 32
      %v1792 = vpop.permute.xlu0 %1791
      %1793 = vrot.lane.b32.xlu0 %v812, 32
      %v1794 = vpop.permute.xlu0 %1793
      %1795 = vrot.lane.b32.xlu0 %v814, 32
      %v1796 = vpop.permute.xlu0 %1795
      %1797 = vrot.lane.b32.xlu0 %v815, 32
      %v1798 = vpop.permute.xlu0 %1797
      %1799 = vrot.lane.b32.xlu0 %v817, 32
      %v1800 = vpop.permute.xlu0 %1799
      %1801 = vrot.lane.b32.xlu0 %v819, 32
      %v1802 = vpop.permute.xlu0 %1801
      %1803 = vrot.lane.b32.xlu0 %v820, 32
      %v1804 = vpop.permute.xlu0 %1803
      %1805 = vrot.lane.b32.xlu0 %v822, 32
      %v1806 = vpop.permute.xlu0 %1805
      %1807 = vrot.lane.b32.xlu0 %v824, 32
      %v1808 = vpop.permute.xlu0 %1807
      %1809 = vrot.lane.b32.xlu0 %v825, 32
      %v1810 = vpop.permute.xlu0 %1809
      %1811 = vrot.lane.b32.xlu0 %v827, 32
      %v1812 = vpop.permute.xlu0 %1811
      %1813 = vrot.lane.b32.xlu0 %v829, 32
      %v1814 = vpop.permute.xlu0 %1813
      %1815 = vrot.lane.b32.xlu0 %v830, 32
      %v1816 = vpop.permute.xlu0 %1815
      %1817 = vrot.lane.b32.xlu0 %v832, 32
      %v1818 = vpop.permute.xlu0 %1817
      %1819 = vrot.lane.b32.xlu0 %v834, 32
      %v1820 = vpop.permute.xlu0 %1819
      %1821 = vrot.lane.b32.xlu0 %v835, 32
      %v1822 = vpop.permute.xlu0 %1821
      %1823 = vrot.lane.b32.xlu0 %v837, 32
      %v1824 = vpop.permute.xlu0 %1823
      %1825 = vrot.lane.b32.xlu0 %v839, 32
      %v1826 = vpop.permute.xlu0 %1825
      %1827 = vrot.lane.b32.xlu0 %v1294, 32
      %v1828 = vpop.permute.xlu0 %1827
      %1829 = vrot.lane.b32.xlu0 %v1296, 32
      %v1830 = vpop.permute.xlu0 %1829
      %1831 = vrot.lane.b32.xlu0 %v1298, 32
      %v1832 = vpop.permute.xlu0 %1831
      %1833 = vrot.lane.b32.xlu0 %v1738, 32
      %v1834 = vpop.permute.xlu0 %1833
      %1835 = vrot.lane.b32.xlu0 %v1740, 32
      %v1836 = vpop.permute.xlu0 %1835
      %1837 = vrot.lane.b32.xlu0 %v1742, 32
      %v1838 = vpop.permute.xlu0 %1837
      %v1887 = vsel %vm311, %v446, %v600
      %v1888 = vsel %vm311, %v447, %v602
      %v1889 = vsel %vm311, %v448, %v604
      %v1890 = vsel %vm311, %v450, %v606
      %v1891 = vsel %vm311, %v451, %v608
      %v1892 = vsel %vm311, %v452, %v610
      %v1893 = vsel %vm311, %v454, %v612
      %v1894 = vsel %vm311, %v455, %v614
      %v1895 = vsel %vm311, %v456, %v616
      %v1896 = vsel %vm311, %v458, %v618
      %v1897 = vsel %vm311, %v459, %v620
      %v1898 = vsel %vm311, %v460, %v622
      %v1899 = vsel %vm311, %v462, %v624
      %v1900 = vsel %vm311, %v463, %v626
      %v1901 = vsel %vm311, %v464, %v628
      %v1902 = vsel %vm311, %v466, %v630
      %v1903 = vsel %vm311, %v467, %v632
      %v1904 = vsel %vm311, %v468, %v634
      %v1905 = vsel %vm311, %v470, %v636
      %v1906 = vsel %vm311, %v471, %v638
      %v1907 = vsel %vm311, %v472, %v640
      %v1908 = vsel %vm311, %v474, %v642
      %v1909 = vsel %vm311, %v475, %v644
      %v1910 = vsel %vm311, %v476, %v646
      %v1911 = vsel %vm311, %v478, %v648
      %v1912 = vsel %vm311, %v479, %v650
      %v1913 = vsel %vm311, %v480, %v652
      %v1914 = vsel %vm311, %v482, %v654
      %v1915 = vsel %vm311, %v483, %v656
      %v1916 = vsel %vm311, %v484, %v658
      %v1917 = vsel %vm311, %v486, %v660
      %v1918 = vsel %vm311, %v487, %v662
      %v1919 = vsel %vm311, %v488, %v664
      %v1920 = vsel %vm311, %v490, %v666
      %v1921 = vsel %vm311, %v491, %v668
      %v1922 = vsel %vm311, %v492, %v670
      %v1923 = vsel %vm311, %v494, %v672
      %v1924 = vsel %vm311, %v495, %v674
      %v1925 = vsel %vm311, %v496, %v676
      %v1926 = vsel %vm311, %v498, %v678
      %v1927 = vsel %vm311, %v499, %v680
      %v1928 = vsel %vm311, %v500, %v682
      %v1929 = vsel %vm311, %v502, %v684
      %v1930 = vsel %vm311, %v503, %v686
      %v1931 = vsel %vm311, %v504, %v688
      %v1932 = vsel %vm311, %v506, %v690
      %v1933 = vsel %vm311, %v507, %v692
      %v1934 = vsel %vm311, %v508, %v694
      %vm1935 = vcmask 64512
      %v1936 = vsel %vm1935, %v1887, %v841
      %v1937 = vsel %vm1935, %v1888, %v843
      %v1938 = vsel %vm1935, %v1889, %v845
      %v1939 = vsel %vm1935, %v1890, %v847
      %v1940 = vsel %vm1935, %v1891, %v849
      %v1941 = vsel %vm1935, %v1892, %v851
      %v1942 = vsel %vm1935, %v1893, %v853
      %v1943 = vsel %vm1935, %v1894, %v855
      %v1944 = vsel %vm1935, %v1895, %v857
      %v1945 = vsel %vm1935, %v1896, %v859
      %v1946 = vsel %vm1935, %v1897, %v861
      %v1947 = vsel %vm1935, %v1898, %v863
      %v1948 = vsel %vm1935, %v1899, %v865
      %v1949 = vsel %vm1935, %v1900, %v867
      %v1950 = vsel %vm1935, %v1901, %v869
      %v1951 = vsel %vm1935, %v1902, %v871
      %v1952 = vsel %vm1935, %v1903, %v873
      %v1953 = vsel %vm1935, %v1904, %v875
      %v1954 = vsel %vm1935, %v1905, %v877
      %v1955 = vsel %vm1935, %v1906, %v879
      %v1956 = vsel %vm1935, %v1907, %v881
      %v1957 = vsel %vm1935, %v1908, %v883
      %v1958 = vsel %vm1935, %v1909, %v885
      %v1959 = vsel %vm1935, %v1910, %v887
      %v1960 = vsel %vm1935, %v1911, %v889
      %v1961 = vsel %vm1935, %v1912, %v891
      %v1962 = vsel %vm1935, %v1913, %v893
      %v1963 = vsel %vm1935, %v1914, %v895
      %v1964 = vsel %vm1935, %v1915, %v897
      %v1965 = vsel %vm1935, %v1916, %v899
      %v1966 = vsel %vm1935, %v1917, %v901
      %v1967 = vsel %vm1935, %v1918, %v903
      %v1968 = vsel %vm1935, %v1919, %v905
      %v1969 = vsel %vm1935, %v1920, %v907
      %v1970 = vsel %vm1935, %v1921, %v909
      %v1971 = vsel %vm1935, %v1922, %v911
      %v1972 = vsel %vm1935, %v1923, %v913
      %v1973 = vsel %vm1935, %v1924, %v915
      %v1974 = vsel %vm1935, %v1925, %v917
      %v1975 = vsel %vm1935, %v1926, %v919
      %v1976 = vsel %vm1935, %v1927, %v921
      %v1977 = vsel %vm1935, %v1928, %v923
      %v1978 = vsel %vm1935, %v1929, %v925
      %v1979 = vsel %vm1935, %v1930, %v927
      %v1980 = vsel %vm1935, %v1931, %v929
      %v1981 = vsel %vm1935, %v1932, %v931
      %v1982 = vsel %vm1935, %v1933, %v933
      %v1983 = vsel %vm1935, %v1934, %v935
      %vm1984 = vcmask 97280
      %v1985 = vsel %vm1984, %v1936, %v1003
      %v1986 = vsel %vm1984, %v1937, %v1005
      %v1987 = vsel %vm1984, %v1938, %v1007
      %v1988 = vsel %vm1984, %v1939, %v1009
      %v1989 = vsel %vm1984, %v1940, %v1011
      %v1990 = vsel %vm1984, %v1941, %v1013
      %v1991 = vsel %vm1984, %v1942, %v1015
      %v1992 = vsel %vm1984, %v1943, %v1017
      %v1993 = vsel %vm1984, %v1944, %v1019
      %v1994 = vsel %vm1984, %v1945, %v1021
      %v1995 = vsel %vm1984, %v1946, %v1023
      %v1996 = vsel %vm1984, %v1947, %v1025
      %v1997 = vsel %vm1984, %v1948, %v1027
      %v1998 = vsel %vm1984, %v1949, %v1029
      %v1999 = vsel %vm1984, %v1950, %v1031
      %v2000 = vsel %vm1984, %v1951, %v1033
      %v2001 = vsel %vm1984, %v1952, %v1035
      %v2002 = vsel %vm1984, %v1953, %v1037
      %v2003 = vsel %vm1984, %v1954, %v1039
      %v2004 = vsel %vm1984, %v1955, %v1041
      %v2005 = vsel %vm1984, %v1956, %v1043
      %v2006 = vsel %vm1984, %v1957, %v1045
      %v2007 = vsel %vm1984, %v1958, %v1047
      %v2008 = vsel %vm1984, %v1959, %v1049
      %v2009 = vsel %vm1984, %v1960, %v1051
      %v2010 = vsel %vm1984, %v1961, %v1053
      %v2011 = vsel %vm1984, %v1962, %v1055
      %v2012 = vsel %vm1984, %v1963, %v1057
      %v2013 = vsel %vm1984, %v1964, %v1059
      %v2014 = vsel %vm1984, %v1965, %v1061
      %v2015 = vsel %vm1984, %v1966, %v1063
      %v2016 = vsel %vm1984, %v1967, %v1065
      %v2017 = vsel %vm1984, %v1968, %v1067
      %v2018 = vsel %vm1984, %v1969, %v1069
      %v2019 = vsel %vm1984, %v1970, %v1071
      %v2020 = vsel %vm1984, %v1971, %v1073
      %v2021 = vsel %vm1984, %v1972, %v1075
      %v2022 = vsel %vm1984, %v1973, %v1077
      %v2023 = vsel %vm1984, %v1974, %v1079
      %v2024 = vsel %vm1984, %v1975, %v1081
      %v2025 = vsel %vm1984, %v1976, %v1083
      %v2026 = vsel %vm1984, %v1977, %v1085
      %v2027 = vsel %vm1984, %v1978, %v1087
      %v2028 = vsel %vm1984, %v1979, %v1089
      %v2029 = vsel %vm1984, %v1980, %v1091
      %v2030 = vsel %vm1984, %v1981, %v1093
      %v2031 = vsel %vm1984, %v1982, %v1095
      %v2032 = vsel %vm1984, %v1983, %v1097
      %vm2033 = vcmask 130048
      %v2034 = vsel %vm2033, %v1985, %v1150
      %v2035 = vsel %vm2033, %v1986, %v1152
      %v2036 = vsel %vm2033, %v1987, %v1154
      %v2037 = vsel %vm2033, %v1988, %v1156
      %v2038 = vsel %vm2033, %v1989, %v1158
      %v2039 = vsel %vm2033, %v1990, %v1160
      %v2040 = vsel %vm2033, %v1991, %v1162
      %v2041 = vsel %vm2033, %v1992, %v1164
      %v2042 = vsel %vm2033, %v1993, %v1166
      %v2043 = vsel %vm2033, %v1994, %v1168
      %v2044 = vsel %vm2033, %v1995, %v1170
      %v2045 = vsel %vm2033, %v1996, %v1172
      %v2046 = vsel %vm2033, %v1997, %v1174
      %v2047 = vsel %vm2033, %v1998, %v1176
      %v2048 = vsel %vm2033, %v1999, %v1178
      %v2049 = vsel %vm2033, %v2000, %v1180
      %v2050 = vsel %vm2033, %v2001, %v1182
      %v2051 = vsel %vm2033, %v2002, %v1184
      %v2052 = vsel %vm2033, %v2003, %v1186
      %v2053 = vsel %vm2033, %v2004, %v1188
      %v2054 = vsel %vm2033, %v2005, %v1190
      %v2055 = vsel %vm2033, %v2006, %v1192
      %v2056 = vsel %vm2033, %v2007, %v1194
      %v2057 = vsel %vm2033, %v2008, %v1196
      %v2058 = vsel %vm2033, %v2009, %v1198
      %v2059 = vsel %vm2033, %v2010, %v1200
      %v2060 = vsel %vm2033, %v2011, %v1202
      %v2061 = vsel %vm2033, %v2012, %v1204
      %v2062 = vsel %vm2033, %v2013, %v1206
      %v2063 = vsel %vm2033, %v2014, %v1208
      %v2064 = vsel %vm2033, %v2015, %v1210
      %v2065 = vsel %vm2033, %v2016, %v1212
      %v2066 = vsel %vm2033, %v2017, %v1214
      %v2067 = vsel %vm2033, %v2018, %v1216
      %v2068 = vsel %vm2033, %v2019, %v1218
      %v2069 = vsel %vm2033, %v2020, %v1220
      %v2070 = vsel %vm2033, %v2021, %v1222
      %v2071 = vsel %vm2033, %v2022, %v1224
      %v2072 = vsel %vm2033, %v2023, %v1226
      %v2073 = vsel %vm2033, %v2024, %v1228
      %v2074 = vsel %vm2033, %v2025, %v1230
      %v2075 = vsel %vm2033, %v2026, %v1232
      %v2076 = vsel %vm2033, %v2027, %v1234
      %v2077 = vsel %vm2033, %v2028, %v1236
      %v2078 = vsel %vm2033, %v2029, %v1238
      %v2079 = vsel %vm2033, %v2030, %v1240
      %v2080 = vsel %vm2033, %v2031, %v1242
      %v2081 = vsel %vm2033, %v2032, %v1244
      %vm2082 = vcmask 162816
      %v2083 = vsel %vm2082, %v2034, %v1300
      %v2084 = vsel %vm2082, %v2035, %v1302
      %v2085 = vsel %vm2082, %v2036, %v1304
      %v2086 = vsel %vm2082, %v2037, %v1306
      %v2087 = vsel %vm2082, %v2038, %v1308
      %v2088 = vsel %vm2082, %v2039, %v1310
      %v2089 = vsel %vm2082, %v2040, %v1312
      %v2090 = vsel %vm2082, %v2041, %v1314
      %v2091 = vsel %vm2082, %v2042, %v1316
      %v2092 = vsel %vm2082, %v2043, %v1318
      %v2093 = vsel %vm2082, %v2044, %v1320
      %v2094 = vsel %vm2082, %v2045, %v1322
      %v2095 = vsel %vm2082, %v2046, %v1324
      %v2096 = vsel %vm2082, %v2047, %v1326
      %v2097 = vsel %vm2082, %v2048, %v1328
      %v2098 = vsel %vm2082, %v2049, %v1330
      %v2099 = vsel %vm2082, %v2050, %v1332
      %v2100 = vsel %vm2082, %v2051, %v1334
      %v2101 = vsel %vm2082, %v2052, %v1336
      %v2102 = vsel %vm2082, %v2053, %v1338
      %v2103 = vsel %vm2082, %v2054, %v1340
      %v2104 = vsel %vm2082, %v2055, %v1342
      %v2105 = vsel %vm2082, %v2056, %v1344
      %v2106 = vsel %vm2082, %v2057, %v1346
      %v2107 = vsel %vm2082, %v2058, %v1348
      %v2108 = vsel %vm2082, %v2059, %v1350
      %v2109 = vsel %vm2082, %v2060, %v1352
      %v2110 = vsel %vm2082, %v2061, %v1354
      %v2111 = vsel %vm2082, %v2062, %v1356
      %v2112 = vsel %vm2082, %v2063, %v1358
      %v2113 = vsel %vm2082, %v2064, %v1360
      %v2114 = vsel %vm2082, %v2065, %v1362
      %v2115 = vsel %vm2082, %v2066, %v1364
      %v2116 = vsel %vm2082, %v2067, %v1366
      %v2117 = vsel %vm2082, %v2068, %v1368
      %v2118 = vsel %vm2082, %v2069, %v1370
      %v2119 = vsel %vm2082, %v2070, %v1372
      %v2120 = vsel %vm2082, %v2071, %v1374
      %v2121 = vsel %vm2082, %v2072, %v1376
      %v2122 = vsel %vm2082, %v2073, %v1378
      %v2123 = vsel %vm2082, %v2074, %v1380
      %v2124 = vsel %vm2082, %v2075, %v1382
      %v2125 = vsel %vm2082, %v2076, %v1384
      %v2126 = vsel %vm2082, %v2077, %v1386
      %v2127 = vsel %vm2082, %v2078, %v1388
      %v2128 = vsel %vm2082, %v2079, %v1390
      %v2129 = vsel %vm2082, %v2080, %v1392
      %v2130 = vsel %vm2082, %v2081, %v1394
      %vm2131 = vcmask 195584
      %v2132 = vsel %vm2131, %v2083, %v1447
      %v2133 = vsel %vm2131, %v2084, %v1449
      %v2134 = vsel %vm2131, %v2085, %v1451
      %v2135 = vsel %vm2131, %v2086, %v1453
      %v2136 = vsel %vm2131, %v2087, %v1455
      %v2137 = vsel %vm2131, %v2088, %v1457
      %v2138 = vsel %vm2131, %v2089, %v1459
      %v2139 = vsel %vm2131, %v2090, %v1461
      %v2140 = vsel %vm2131, %v2091, %v1463
      %v2141 = vsel %vm2131, %v2092, %v1465
      %v2142 = vsel %vm2131, %v2093, %v1467
      %v2143 = vsel %vm2131, %v2094, %v1469
      %v2144 = vsel %vm2131, %v2095, %v1471
      %v2145 = vsel %vm2131, %v2096, %v1473
      %v2146 = vsel %vm2131, %v2097, %v1475
      %v2147 = vsel %vm2131, %v2098, %v1477
      %v2148 = vsel %vm2131, %v2099, %v1479
      %v2149 = vsel %vm2131, %v2100, %v1481
      %v2150 = vsel %vm2131, %v2101, %v1483
      %v2151 = vsel %vm2131, %v2102, %v1485
      %v2152 = vsel %vm2131, %v2103, %v1487
      %v2153 = vsel %vm2131, %v2104, %v1489
      %v2154 = vsel %vm2131, %v2105, %v1491
      %v2155 = vsel %vm2131, %v2106, %v1493
      %v2156 = vsel %vm2131, %v2107, %v1495
      %v2157 = vsel %vm2131, %v2108, %v1497
      %v2158 = vsel %vm2131, %v2109, %v1499
      %v2159 = vsel %vm2131, %v2110, %v1501
      %v2160 = vsel %vm2131, %v2111, %v1503
      %v2161 = vsel %vm2131, %v2112, %v1505
      %v2162 = vsel %vm2131, %v2113, %v1507
      %v2163 = vsel %vm2131, %v2114, %v1509
      %v2164 = vsel %vm2131, %v2115, %v1511
      %v2165 = vsel %vm2131, %v2116, %v1513
      %v2166 = vsel %vm2131, %v2117, %v1515
      %v2167 = vsel %vm2131, %v2118, %v1517
      %v2168 = vsel %vm2131, %v2119, %v1519
      %v2169 = vsel %vm2131, %v2120, %v1521
      %v2170 = vsel %vm2131, %v2121, %v1523
      %v2171 = vsel %vm2131, %v2122, %v1525
      %v2172 = vsel %vm2131, %v2123, %v1527
      %v2173 = vsel %vm2131, %v2124, %v1529
      %v2174 = vsel %vm2131, %v2125, %v1531
      %v2175 = vsel %vm2131, %v2126, %v1533
      %v2176 = vsel %vm2131, %v2127, %v1535
      %v2177 = vsel %vm2131, %v2128, %v1537
      %v2178 = vsel %vm2131, %v2129, %v1539
      %v2179 = vsel %vm2131, %v2130, %v1541
      %vm2180 = vcmask 228352
      %v2181 = vsel %vm2180, %v2132, %v1594
      %v2182 = vsel %vm2180, %v2133, %v1596
      %v2183 = vsel %vm2180, %v2134, %v1598
      %v2184 = vsel %vm2180, %v2135, %v1600
      %v2185 = vsel %vm2180, %v2136, %v1602
      %v2186 = vsel %vm2180, %v2137, %v1604
      %v2187 = vsel %vm2180, %v2138, %v1606
      %v2188 = vsel %vm2180, %v2139, %v1608
      %v2189 = vsel %vm2180, %v2140, %v1610
      %v2190 = vsel %vm2180, %v2141, %v1612
      %v2191 = vsel %vm2180, %v2142, %v1614
      %v2192 = vsel %vm2180, %v2143, %v1616
      %v2193 = vsel %vm2180, %v2144, %v1618
      %v2194 = vsel %vm2180, %v2145, %v1620
      %v2195 = vsel %vm2180, %v2146, %v1622
      %v2196 = vsel %vm2180, %v2147, %v1624
      %v2197 = vsel %vm2180, %v2148, %v1626
      %v2198 = vsel %vm2180, %v2149, %v1628
      %v2199 = vsel %vm2180, %v2150, %v1630
      %v2200 = vsel %vm2180, %v2151, %v1632
      %v2201 = vsel %vm2180, %v2152, %v1634
      %v2202 = vsel %vm2180, %v2153, %v1636
      %v2203 = vsel %vm2180, %v2154, %v1638
      %v2204 = vsel %vm2180, %v2155, %v1640
      %v2205 = vsel %vm2180, %v2156, %v1642
      %v2206 = vsel %vm2180, %v2157, %v1644
      %v2207 = vsel %vm2180, %v2158, %v1646
      %v2208 = vsel %vm2180, %v2159, %v1648
      %v2209 = vsel %vm2180, %v2160, %v1650
      %v2210 = vsel %vm2180, %v2161, %v1652
      %v2211 = vsel %vm2180, %v2162, %v1654
      %v2212 = vsel %vm2180, %v2163, %v1656
      %v2213 = vsel %vm2180, %v2164, %v1658
      %v2214 = vsel %vm2180, %v2165, %v1660
      %v2215 = vsel %vm2180, %v2166, %v1662
      %v2216 = vsel %vm2180, %v2167, %v1664
      %v2217 = vsel %vm2180, %v2168, %v1666
      %v2218 = vsel %vm2180, %v2169, %v1668
      %v2219 = vsel %vm2180, %v2170, %v1670
      %v2220 = vsel %vm2180, %v2171, %v1672
      %v2221 = vsel %vm2180, %v2172, %v1674
      %v2222 = vsel %vm2180, %v2173, %v1676
      %v2223 = vsel %vm2180, %v2174, %v1678
      %v2224 = vsel %vm2180, %v2175, %v1680
      %v2225 = vsel %vm2180, %v2176, %v1682
      %v2226 = vsel %vm2180, %v2177, %v1684
      %v2227 = vsel %vm2180, %v2178, %v1686
      %v2228 = vsel %vm2180, %v2179, %v1688
      %vm2229 = vcmask 261120
      %v2230 = vsel %vm2229, %v2181, %v1744
      %v2231 = vsel %vm2229, %v2182, %v1746
      %v2232 = vsel %vm2229, %v2183, %v1748
      %v2233 = vsel %vm2229, %v2184, %v1750
      %v2234 = vsel %vm2229, %v2185, %v1752
      %v2235 = vsel %vm2229, %v2186, %v1754
      %v2236 = vsel %vm2229, %v2187, %v1756
      %v2237 = vsel %vm2229, %v2188, %v1758
      %v2238 = vsel %vm2229, %v2189, %v1760
      %v2239 = vsel %vm2229, %v2190, %v1762
      %v2240 = vsel %vm2229, %v2191, %v1764
      %v2241 = vsel %vm2229, %v2192, %v1766
      %v2242 = vsel %vm2229, %v2193, %v1768
      %v2243 = vsel %vm2229, %v2194, %v1770
      %v2244 = vsel %vm2229, %v2195, %v1772
      %v2245 = vsel %vm2229, %v2196, %v1774
      %v2246 = vsel %vm2229, %v2197, %v1776
      %v2247 = vsel %vm2229, %v2198, %v1778
      %v2248 = vsel %vm2229, %v2199, %v1780
      %v2249 = vsel %vm2229, %v2200, %v1782
      %v2250 = vsel %vm2229, %v2201, %v1784
      %v2251 = vsel %vm2229, %v2202, %v1786
      %v2252 = vsel %vm2229, %v2203, %v1788
      %v2253 = vsel %vm2229, %v2204, %v1790
      %v2254 = vsel %vm2229, %v2205, %v1792
      %v2255 = vsel %vm2229, %v2206, %v1794
      %v2256 = vsel %vm2229, %v2207, %v1796
      %v2257 = vsel %vm2229, %v2208, %v1798
      %v2258 = vsel %vm2229, %v2209, %v1800
      %v2259 = vsel %vm2229, %v2210, %v1802
      %v2260 = vsel %vm2229, %v2211, %v1804
      %v2261 = vsel %vm2229, %v2212, %v1806
      %v2262 = vsel %vm2229, %v2213, %v1808
      %v2263 = vsel %vm2229, %v2214, %v1810
      %v2264 = vsel %vm2229, %v2215, %v1812
      %v2265 = vsel %vm2229, %v2216, %v1814
      %v2266 = vsel %vm2229, %v2217, %v1816
      %v2267 = vsel %vm2229, %v2218, %v1818
      %v2268 = vsel %vm2229, %v2219, %v1820
      %v2269 = vsel %vm2229, %v2220, %v1822
      %v2270 = vsel %vm2229, %v2221, %v1824
      %v2271 = vsel %vm2229, %v2222, %v1826
      %v2272 = vsel %vm2229, %v2223, %v1828
      %v2273 = vsel %vm2229, %v2224, %v1830
      %v2274 = vsel %vm2229, %v2225, %v1832
      %v2275 = vsel %vm2229, %v2226, %v1834
      %v2276 = vsel %vm2229, %v2227, %v1836
      %v2277 = vsel %vm2229, %v2228, %v1838
      %vm2326 = vcmask 1040384
      %v2327 = vrot.slane %v2230, 7
      %v2328 = vrot.slane %v2231, 7
      %v2329 = vsel %vm2326, %v2327, %v2328
      %v2330 = vrot.slane %v2232, 7
      %v2331 = vsel %vm2326, %v2328, %v2330
      %v2332 = vrot.slane %v2233, 7
      %v2333 = vrot.slane %v2234, 7
      %v2334 = vsel %vm2326, %v2332, %v2333
      %v2335 = vrot.slane %v2235, 7
      %v2336 = vsel %vm2326, %v2333, %v2335
      %v2337 = vrot.slane %v2236, 7
      %v2338 = vrot.slane %v2237, 7
      %v2339 = vsel %vm2326, %v2337, %v2338
      %v2340 = vrot.slane %v2238, 7
      %v2341 = vsel %vm2326, %v2338, %v2340
      %v2342 = vrot.slane %v2239, 7
      %v2343 = vrot.slane %v2240, 7
      %v2344 = vsel %vm2326, %v2342, %v2343
      %v2345 = vrot.slane %v2241, 7
      %v2346 = vsel %vm2326, %v2343, %v2345
      %v2347 = vrot.slane %v2242, 7
      %v2348 = vrot.slane %v2243, 7
      %v2349 = vsel %vm2326, %v2347, %v2348
      %v2350 = vrot.slane %v2244, 7
      %v2351 = vsel %vm2326, %v2348, %v2350
      %v2352 = vrot.slane %v2245, 7
      %v2353 = vrot.slane %v2246, 7
      %v2354 = vsel %vm2326, %v2352, %v2353
      %v2355 = vrot.slane %v2247, 7
      %v2356 = vsel %vm2326, %v2353, %v2355
      %v2357 = vrot.slane %v2248, 7
      %v2358 = vrot.slane %v2249, 7
      %v2359 = vsel %vm2326, %v2357, %v2358
      %v2360 = vrot.slane %v2250, 7
      %v2361 = vsel %vm2326, %v2358, %v2360
      %v2362 = vrot.slane %v2251, 7
      %v2363 = vrot.slane %v2252, 7
      %v2364 = vsel %vm2326, %v2362, %v2363
      %v2365 = vrot.slane %v2253, 7
      %v2366 = vsel %vm2326, %v2363, %v2365
      %v2367 = vrot.slane %v2254, 7
      %v2368 = vrot.slane %v2255, 7
      %v2369 = vsel %vm2326, %v2367, %v2368
      %v2370 = vrot.slane %v2256, 7
      %v2371 = vsel %vm2326, %v2368, %v2370
      %v2372 = vrot.slane %v2257, 7
      %v2373 = vrot.slane %v2258, 7
      %v2374 = vsel %vm2326, %v2372, %v2373
      %v2375 = vrot.slane %v2259, 7
      %v2376 = vsel %vm2326, %v2373, %v2375
      %v2377 = vrot.slane %v2260, 7
      %v2378 = vrot.slane %v2261, 7
      %v2379 = vsel %vm2326, %v2377, %v2378
      %v2380 = vrot.slane %v2262, 7
      %v2381 = vsel %vm2326, %v2378, %v2380
      %v2382 = vrot.slane %v2263, 7
      %v2383 = vrot.slane %v2264, 7
      %v2384 = vsel %vm2326, %v2382, %v2383
      %v2385 = vrot.slane %v2265, 7
      %v2386 = vsel %vm2326, %v2383, %v2385
      %v2387 = vrot.slane %v2266, 7
      %v2388 = vrot.slane %v2267, 7
      %v2389 = vsel %vm2326, %v2387, %v2388
      %v2390 = vrot.slane %v2268, 7
      %v2391 = vsel %vm2326, %v2388, %v2390
      %v2392 = vrot.slane %v2269, 7
      %v2393 = vrot.slane %v2270, 7
      %v2394 = vsel %vm2326, %v2392, %v2393
      %v2395 = vrot.slane %v2271, 7
      %v2396 = vsel %vm2326, %v2393, %v2395
      %v2397 = vrot.slane %v2272, 7
      %v2398 = vrot.slane %v2273, 7
      %v2399 = vsel %vm2326, %v2397, %v2398
      %v2400 = vrot.slane %v2274, 7
      %v2401 = vsel %vm2326, %v2398, %v2400
      %v2402 = vrot.slane %v2275, 7
      %v2403 = vrot.slane %v2276, 7
      %v2404 = vsel %vm2326, %v2402, %v2403
      %v2405 = vrot.slane %v2277, 7
      %v2406 = vsel %vm2326, %v2403, %v2405
      %v2407 = vld [vmem:[%s1] sm:$0xff]
      %v2408 = vld [vmem:[%s1 + $0x8] sm:$0xff]
      %v2409 = vld [vmem:[%s1 + $0x10] sm:$0xff]
      %v2410 = vld [vmem:[%s1 + $0x18] sm:$0xff]
      %v2411 = vld [vmem:[%s1 + $0x20] sm:$0xf]
      %vm2412 = vcmask 293888
      %v2413 = vsel %vm2412, %v2329, 0
      %v2415 = vsel %vm2412, %v2331, 0
      %v2417 = vsel %vm2412, %v2334, 0
      %v2419 = vsel %vm2412, %v2336, 0
      %v2421 = vsel %vm2412, %v2339, 0
      %v2423 = vsel %vm2412, %v2341, 0
      %v2425 = vsel %vm2412, %v2344, 0
      %v2427 = vsel %vm2412, %v2346, 0
      %v2429 = vsel %vm2412, %v2349, 0
      %v2431 = vsel %vm2412, %v2351, 0
      %v2433 = vsel %vm2412, %v2354, 0
      %v2435 = vsel %vm2412, %v2356, 0
      %v2437 = vsel %vm2412, %v2359, 0
      %v2439 = vsel %vm2412, %v2361, 0
      %v2441 = vsel %vm2412, %v2364, 0
      %v2443 = vsel %vm2412, %v2366, 0
      %v2445 = vsel %vm2412, %v2369, 0
      %v2447 = vsel %vm2412, %v2371, 0
      %v2449 = vsel %vm2412, %v2374, 0
      %v2451 = vsel %vm2412, %v2376, 0
      %v2453 = vsel %vm2412, %v2379, 0
      %v2455 = vsel %vm2412, %v2381, 0
      %v2457 = vsel %vm2412, %v2384, 0
      %v2459 = vsel %vm2412, %v2386, 0
      %v2461 = vsel %vm2412, %v2389, 0
      %v2463 = vsel %vm2412, %v2391, 0
      %v2465 = vsel %vm2412, %v2394, 0
      %v2467 = vsel %vm2412, %v2396, 0
      %v2469 = vsel %vm2412, %v2399, 0
      %v2471 = vsel %vm2412, %v2401, 0
      %v2473 = vsel %vm2412, %v2404, 0
      %v2475 = vsel %vm2412, %v2406, 0
      %vm2477 = vcmask 1043456
      %v2479 = vsel %vm2477, %v2411, 0
      %2481 = vmatprep.subr.mxu0 0.0
      %2482 = vmatpush1.msra.mxu0 0.0
      %2483 = vmatprep.subr.mxu0 0.0
      %2484 = vmatpush1.msra.mxu0 0.0
      %2485 = vmatprep.subr.mxu0 0.0
      %2486 = vmatpush1.msra.mxu0 0.0
      %2487 = vmatprep.subr.mxu0 0.0
      %2488 = vmatpush1.msra.mxu0 0.0
      %2489 = vmatprep.subr.mxu0 0.0
      %2490 = vmatpush1.msra.mxu0 0.0
      %2491 = vmatprep.subr.mxu0 0.0
      %2492 = vmatpush1.msra.mxu0 0.0
      %2493 = vmatprep.subr.mxu0 0.0
      %2494 = vmatpush1.msra.mxu0 0.0
      %2495 = vmatprep.subr.mxu0 0.0
      %2496 = vmatpush1.msra.mxu0 0.0
      %2497 = vmatprep.subr.mxu0 0.0
      %2498 = vmatpush1.msra.mxu0 0.0
      %2499 = vmatprep.subr.mxu0 0.0
      %2500 = vmatpush1.msra.mxu0 0.0
      %2501 = vmatprep.subr.mxu0 0.0
      %2502 = vmatpush1.msra.mxu0 0.0
      %2503 = vmatprep.subr.mxu0 0.0
      %2504 = vmatpush1.msra.mxu0 %v2479
      %2505 = vmatprep.subr.mxu0 0.0
      %2506 = vmatpush1.msra.mxu0 %v2410
      %2507 = vmatprep.subr.mxu0 0.0
      %2508 = vmatpush1.msra.mxu0 %v2409
      %2509 = vmatprep.subr.mxu0 0.0
      %2510 = vmatpush1.msra.mxu0 %v2408
      %2511 = vmatprep.subr.mxu0 0.0
      %2512 = vmatpush1.msra.mxu0 %v2407
      %2513 = vmatprep.subr.mxu0 0.0
      %2514 = vmatpush2.msra.mxu0 0.0
      %2515 = vmatprep.subr.mxu0 0.0
      %2516 = vmatpush2.msra.mxu0 0.0
      %2517 = vmatprep.subr.mxu0 0.0
      %2518 = vmatpush2.msra.mxu0 0.0
      %2519 = vmatprep.subr.mxu0 0.0
      %2520 = vmatpush2.msra.mxu0 0.0
      %2521 = vmatprep.subr.mxu0 0.0
      %2522 = vmatpush2.msra.mxu0 0.0
      %2523 = vmatprep.subr.mxu0 0.0
      %2524 = vmatpush2.msra.mxu0 0.0
      %2525 = vmatprep.subr.mxu0 0.0
      %2526 = vmatpush2.msra.mxu0 0.0
      %2527 = vmatprep.subr.mxu0 0.0
      %2528 = vmatpush2.msra.mxu0 0.0
      %2529 = vmatprep.subr.mxu0 0.0
      %2530 = vmatpush2.msra.mxu0 0.0
      %2531 = vmatprep.subr.mxu0 0.0
      %2532 = vmatpush2.msra.mxu0 0.0
      %2533 = vmatprep.subr.mxu0 0.0
      %2534 = vmatpush2.msra.mxu0 0.0
      %2535 = vmatprep.subr.mxu0 0.0
      %2536 = vmatpush2.msra.mxu0 0.0
      %2537 = vmatprep.subr.mxu0 0.0
      %2538 = vmatpush2.msra.mxu0 0.0
      %2539 = vmatprep.subr.mxu0 0.0
      %2540 = vmatpush2.msra.mxu0 0.0
      %2541 = vmatprep.subr.mxu0 0.0
      %2542 = vmatpush2.msra.mxu0 0.0
      %2543 = vmatprep.subr.mxu0 0.0
      %2544 = vmatpush2.msra.mxu0 0.0
      %2545 = vmatprep.mubr.f32.mxu0 0.0
      %2546 = vmatmul.mubr.f32.gmra.mxu0 %v2413
      %v2547 = vpop.f32.mrf.mxu0
      %v2548 = vadd.f32 0.0, %v2547
      %v2549 = vpop.f32.mrf.mxu0
      %2550 = vmatprep.mubr.f32.mxu0 0.0
      %2551 = vmatmul.mubr.f32.gmra.mxu0 %v2415
      %v2552 = vpop.f32.mrf.mxu0
      %v2553 = vadd.f32 0.0, %v2552
      %v2554 = vpop.f32.mrf.mxu0
      %2555 = vmatprep.mubr.f32.mxu0 0.0
      %2556 = vmatmul.mubr.f32.gmra.mxu0 %v2417
      %v2557 = vpop.f32.mrf.mxu0
      %v2558 = vadd.f32 0.0, %v2557
      %v2559 = vpop.f32.mrf.mxu0
      %2560 = vmatprep.mubr.f32.mxu0 0.0
      %2561 = vmatmul.mubr.f32.gmra.mxu0 %v2419
      %v2562 = vpop.f32.mrf.mxu0
      %v2563 = vadd.f32 0.0, %v2562
      %v2564 = vpop.f32.mrf.mxu0
      %2565 = vmatprep.mubr.f32.mxu0 0.0
      %2566 = vmatmul.mubr.f32.gmra.mxu0 %v2421
      %v2567 = vpop.f32.mrf.mxu0
      %v2568 = vadd.f32 0.0, %v2567
      %v2569 = vpop.f32.mrf.mxu0
      %2570 = vmatprep.mubr.f32.mxu0 0.0
      %2571 = vmatmul.mubr.f32.gmra.mxu0 %v2423
      %v2572 = vpop.f32.mrf.mxu0
      %v2573 = vadd.f32 0.0, %v2572
      %v2574 = vpop.f32.mrf.mxu0
      %2575 = vmatprep.mubr.f32.mxu0 0.0
      %2576 = vmatmul.mubr.f32.gmra.mxu0 %v2425
      %v2577 = vpop.f32.mrf.mxu0
      %v2578 = vadd.f32 0.0, %v2577
      %v2579 = vpop.f32.mrf.mxu0
      %2580 = vmatprep.mubr.f32.mxu0 0.0
      %2581 = vmatmul.mubr.f32.gmra.mxu0 %v2427
      %v2582 = vpop.f32.mrf.mxu0
      %v2583 = vadd.f32 0.0, %v2582
      %v2584 = vpop.f32.mrf.mxu0
      %2585 = vmatprep.mubr.f32.mxu0 0.0
      %2586 = vmatmul.mubr.f32.gmra.mxu0 %v2429
      %v2587 = vpop.f32.mrf.mxu0
      %v2588 = vadd.f32 0.0, %v2587
      %v2589 = vpop.f32.mrf.mxu0
      %2590 = vmatprep.mubr.f32.mxu0 0.0
      %2591 = vmatmul.mubr.f32.gmra.mxu0 %v2431
      %v2592 = vpop.f32.mrf.mxu0
      %v2593 = vadd.f32 0.0, %v2592
      %v2594 = vpop.f32.mrf.mxu0
      %2595 = vmatprep.mubr.f32.mxu0 0.0
      %2596 = vmatmul.mubr.f32.gmra.mxu0 %v2433
      %v2597 = vpop.f32.mrf.mxu0
      %v2598 = vadd.f32 0.0, %v2597
      %v2599 = vpop.f32.mrf.mxu0
      %2600 = vmatprep.mubr.f32.mxu0 0.0
      %2601 = vmatmul.mubr.f32.gmra.mxu0 %v2435
      %v2602 = vpop.f32.mrf.mxu0
      %v2603 = vadd.f32 0.0, %v2602
      %v2604 = vpop.f32.mrf.mxu0
      %2605 = vmatprep.mubr.f32.mxu0 0.0
      %2606 = vmatmul.mubr.f32.gmra.mxu0 %v2437
      %v2607 = vpop.f32.mrf.mxu0
      %v2608 = vadd.f32 0.0, %v2607
      %v2609 = vpop.f32.mrf.mxu0
      %2610 = vmatprep.mubr.f32.mxu0 0.0
      %2611 = vmatmul.mubr.f32.gmra.mxu0 %v2439
      %v2612 = vpop.f32.mrf.mxu0
      %v2613 = vadd.f32 0.0, %v2612
      %v2614 = vpop.f32.mrf.mxu0
      %2615 = vmatprep.mubr.f32.mxu0 0.0
      %2616 = vmatmul.mubr.f32.gmra.mxu0 %v2441
      %v2617 = vpop.f32.mrf.mxu0
      %v2618 = vadd.f32 0.0, %v2617
      %v2619 = vpop.f32.mrf.mxu0
      %2620 = vmatprep.mubr.f32.mxu0 0.0
      %2621 = vmatmul.mubr.f32.gmra.mxu0 %v2443
      %v2622 = vpop.f32.mrf.mxu0
      %v2623 = vadd.f32 0.0, %v2622
      %v2624 = vpop.f32.mrf.mxu0
      %2625 = vmatprep.mubr.f32.mxu0 0.0
      %2626 = vmatmul.mubr.f32.gmra.mxu0 %v2445
      %v2627 = vpop.f32.mrf.mxu0
      %v2628 = vadd.f32 0.0, %v2627
      %v2629 = vpop.f32.mrf.mxu0
      %2630 = vmatprep.mubr.f32.mxu0 0.0
      %2631 = vmatmul.mubr.f32.gmra.mxu0 %v2447
      %v2632 = vpop.f32.mrf.mxu0
      %v2633 = vadd.f32 0.0, %v2632
      %v2634 = vpop.f32.mrf.mxu0
      %2635 = vmatprep.mubr.f32.mxu0 0.0
      %2636 = vmatmul.mubr.f32.gmra.mxu0 %v2449
      %v2637 = vpop.f32.mrf.mxu0
      %v2638 = vadd.f32 0.0, %v2637
      %v2639 = vpop.f32.mrf.mxu0
      %2640 = vmatprep.mubr.f32.mxu0 0.0
      %2641 = vmatmul.mubr.f32.gmra.mxu0 %v2451
      %v2642 = vpop.f32.mrf.mxu0
      %v2643 = vadd.f32 0.0, %v2642
      %v2644 = vpop.f32.mrf.mxu0
      %2645 = vmatprep.mubr.f32.mxu0 0.0
      %2646 = vmatmul.mubr.f32.gmra.mxu0 %v2453
      %v2647 = vpop.f32.mrf.mxu0
      %v2648 = vadd.f32 0.0, %v2647
      %v2649 = vpop.f32.mrf.mxu0
      %2650 = vmatprep.mubr.f32.mxu0 0.0
      %2651 = vmatmul.mubr.f32.gmra.mxu0 %v2455
      %v2652 = vpop.f32.mrf.mxu0
      %v2653 = vadd.f32 0.0, %v2652
      %v2654 = vpop.f32.mrf.mxu0
      %2655 = vmatprep.mubr.f32.mxu0 0.0
      %2656 = vmatmul.mubr.f32.gmra.mxu0 %v2457
      %v2657 = vpop.f32.mrf.mxu0
      %v2658 = vadd.f32 0.0, %v2657
      %v2659 = vpop.f32.mrf.mxu0
      %2660 = vmatprep.mubr.f32.mxu0 0.0
      %2661 = vmatmul.mubr.f32.gmra.mxu0 %v2459
      %v2662 = vpop.f32.mrf.mxu0
      %v2663 = vadd.f32 0.0, %v2662
      %v2664 = vpop.f32.mrf.mxu0
      %2665 = vmatprep.mubr.f32.mxu0 0.0
      %2666 = vmatmul.mubr.f32.gmra.mxu0 %v2461
      %v2667 = vpop.f32.mrf.mxu0
      %v2668 = vadd.f32 0.0, %v2667
      %v2669 = vpop.f32.mrf.mxu0
      %2670 = vmatprep.mubr.f32.mxu0 0.0
      %2671 = vmatmul.mubr.f32.gmra.mxu0 %v2463
      %v2672 = vpop.f32.mrf.mxu0
      %v2673 = vadd.f32 0.0, %v2672
      %v2674 = vpop.f32.mrf.mxu0
      %2675 = vmatprep.mubr.f32.mxu0 0.0
      %2676 = vmatmul.mubr.f32.gmra.mxu0 %v2465
      %v2677 = vpop.f32.mrf.mxu0
      %v2678 = vadd.f32 0.0, %v2677
      %v2679 = vpop.f32.mrf.mxu0
      %2680 = vmatprep.mubr.f32.mxu0 0.0
      %2681 = vmatmul.mubr.f32.gmra.mxu0 %v2467
      %v2682 = vpop.f32.mrf.mxu0
      %v2683 = vadd.f32 0.0, %v2682
      %v2684 = vpop.f32.mrf.mxu0
      %2685 = vmatprep.mubr.f32.mxu0 0.0
      %2686 = vmatmul.mubr.f32.gmra.mxu0 %v2469
      %v2687 = vpop.f32.mrf.mxu0
      %v2688 = vadd.f32 0.0, %v2687
      %v2689 = vpop.f32.mrf.mxu0
      %2690 = vmatprep.mubr.f32.mxu0 0.0
      %2691 = vmatmul.mubr.f32.gmra.mxu0 %v2471
      %v2692 = vpop.f32.mrf.mxu0
      %v2693 = vadd.f32 0.0, %v2692
      %v2694 = vpop.f32.mrf.mxu0
      %2695 = vmatprep.mubr.f32.mxu0 0.0
      %2696 = vmatmul.mubr.f32.gmra.mxu0 %v2473
      %v2697 = vpop.f32.mrf.mxu0
      %v2698 = vadd.f32 0.0, %v2697
      %v2699 = vpop.f32.mrf.mxu0
      %2700 = vmatprep.mubr.f32.mxu0 0.0
      %2701 = vmatmul.mubr.f32.gmra.mxu0 %v2475
      %v2702 = vpop.f32.mrf.mxu0
      %v2703 = vadd.f32 0.0, %v2702
      %v2704 = vpop.f32.mrf.mxu0
      %2705 = vdwg.mxu0
      %v2706 = vld [vmem:[%s2] sm:$0x1]
      %v2708 = vlaneseq
      %v2709 = vshrl.u32 %v2708, 7
      %v2710 = vsub.s32 0, %v2709
      %v2711 = vrot.slane %v2706, %v2710
      %v2713 = vmul.f32 %v2548, %v2711
      %v2714 = vmul.f32 %v2553, %v2711
      %v2715 = vmul.f32 %v2558, %v2711
      %v2716 = vmul.f32 %v2563, %v2711
      %v2717 = vmul.f32 %v2568, %v2711
      %v2718 = vmul.f32 %v2573, %v2711
      %v2719 = vmul.f32 %v2578, %v2711
      %v2720 = vmul.f32 %v2583, %v2711
      %v2721 = vmul.f32 %v2588, %v2711
      %v2722 = vmul.f32 %v2593, %v2711
      %v2723 = vmul.f32 %v2598, %v2711
      %v2724 = vmul.f32 %v2603, %v2711
      %v2725 = vmul.f32 %v2608, %v2711
      %v2726 = vmul.f32 %v2613, %v2711
      %v2727 = vmul.f32 %v2618, %v2711
      %v2728 = vmul.f32 %v2623, %v2711
      %v2729 = vmul.f32 %v2628, %v2711
      %v2730 = vmul.f32 %v2633, %v2711
      %v2731 = vmul.f32 %v2638, %v2711
      %v2732 = vmul.f32 %v2643, %v2711
      %v2733 = vmul.f32 %v2648, %v2711
      %v2734 = vmul.f32 %v2653, %v2711
      %v2735 = vmul.f32 %v2658, %v2711
      %v2736 = vmul.f32 %v2663, %v2711
      %v2737 = vmul.f32 %v2668, %v2711
      %v2738 = vmul.f32 %v2673, %v2711
      %v2739 = vmul.f32 %v2678, %v2711
      %v2740 = vmul.f32 %v2683, %v2711
      %v2741 = vmul.f32 %v2688, %v2711
      %v2742 = vmul.f32 %v2693, %v2711
      %v2743 = vmul.f32 %v2698, %v2711
      %v2744 = vmul.f32 %v2703, %v2711
      %v2745 = vld [vmem:[%s3] sm:$0x1]
      %v2747 = vlaneseq
      %v2748 = vshrl.u32 %v2747, 7
      %v2749 = vsub.s32 0, %v2748
      %v2750 = vrot.slane %v2745, %v2749
      %v2752 = vadd.f32 %v2713, %v2750
      %v2753 = vadd.f32 %v2714, %v2750
      %v2754 = vadd.f32 %v2715, %v2750
      %v2755 = vadd.f32 %v2716, %v2750
      %v2756 = vadd.f32 %v2717, %v2750
      %v2757 = vadd.f32 %v2718, %v2750
      %v2758 = vadd.f32 %v2719, %v2750
      %v2759 = vadd.f32 %v2720, %v2750
      %v2760 = vadd.f32 %v2721, %v2750
      %v2761 = vadd.f32 %v2722, %v2750
      %v2762 = vadd.f32 %v2723, %v2750
      %v2763 = vadd.f32 %v2724, %v2750
      %v2764 = vadd.f32 %v2725, %v2750
      %v2765 = vadd.f32 %v2726, %v2750
      %v2766 = vadd.f32 %v2727, %v2750
      %v2767 = vadd.f32 %v2728, %v2750
      %v2768 = vadd.f32 %v2729, %v2750
      %v2769 = vadd.f32 %v2730, %v2750
      %v2770 = vadd.f32 %v2731, %v2750
      %v2771 = vadd.f32 %v2732, %v2750
      %v2772 = vadd.f32 %v2733, %v2750
      %v2773 = vadd.f32 %v2734, %v2750
      %v2774 = vadd.f32 %v2735, %v2750
      %v2775 = vadd.f32 %v2736, %v2750
      %v2776 = vadd.f32 %v2737, %v2750
      %v2777 = vadd.f32 %v2738, %v2750
      %v2778 = vadd.f32 %v2739, %v2750
      %v2779 = vadd.f32 %v2740, %v2750
      %v2780 = vadd.f32 %v2741, %v2750
      %v2781 = vadd.f32 %v2742, %v2750
      %v2782 = vadd.f32 %v2743, %v2750
      %v2783 = vadd.f32 %v2744, %v2750
      %v2784 = vmax.f32 %v2752, 0.0
      %v2785 = vmax.f32 %v2753, 0.0
      %v2786 = vmax.f32 %v2754, 0.0
      %v2787 = vmax.f32 %v2755, 0.0
      %v2788 = vmax.f32 %v2756, 0.0
      %v2789 = vmax.f32 %v2757, 0.0
      %v2790 = vmax.f32 %v2758, 0.0
      %v2791 = vmax.f32 %v2759, 0.0
      %v2792 = vmax.f32 %v2760, 0.0
      %v2793 = vmax.f32 %v2761, 0.0
      %v2794 = vmax.f32 %v2762, 0.0
      %v2795 = vmax.f32 %v2763, 0.0
      %v2796 = vmax.f32 %v2764, 0.0
      %v2797 = vmax.f32 %v2765, 0.0
      %v2798 = vmax.f32 %v2766, 0.0
      %v2799 = vmax.f32 %v2767, 0.0
      %v2800 = vmax.f32 %v2768, 0.0
      %v2801 = vmax.f32 %v2769, 0.0
      %v2802 = vmax.f32 %v2770, 0.0
      %v2803 = vmax.f32 %v2771, 0.0
      %v2804 = vmax.f32 %v2772, 0.0
      %v2805 = vmax.f32 %v2773, 0.0
      %v2806 = vmax.f32 %v2774, 0.0
      %v2807 = vmax.f32 %v2775, 0.0
      %v2808 = vmax.f32 %v2776, 0.0
      %v2809 = vmax.f32 %v2777, 0.0
      %v2810 = vmax.f32 %v2778, 0.0
      %v2811 = vmax.f32 %v2779, 0.0
      %v2812 = vmax.f32 %v2780, 0.0
      %v2813 = vmax.f32 %v2781, 0.0
      %v2814 = vmax.f32 %v2782, 0.0
      %v2815 = vmax.f32 %v2783, 0.0
      %2816 = vst.msk [vmem:[#allocation3] sm:$0xff] %vm311, 0.0
      %2817 = vst.msk [vmem:[#allocation3 + $0x8] sm:$0xff] %vm311, 0.0
      %2818 = vst.msk [vmem:[#allocation3 + $0x10] sm:$0xff] %vm311, 0.0
      %2819 = vst.msk [vmem:[#allocation3 + $0x18] sm:$0x1] %vm315, 0.0
      %2820 = vst.msk [vmem:[#allocation3 + $0x20] sm:$0xff] %vm311, 0.0
      %2821 = vst.msk [vmem:[#allocation3 + $0x28] sm:$0xff] %vm311, 0.0
      %2822 = vst.msk [vmem:[#allocation3 + $0x30] sm:$0xff] %vm311, 0.0
      %2823 = vst.msk [vmem:[#allocation3 + $0x38] sm:$0x1] %vm315, 0.0
      %2824 = vst.msk [vmem:[#allocation3 + $0x40] sm:$0xff] %vm311, 0.0
      %2825 = vst.msk [vmem:[#allocation3 + $0x48] sm:$0xff] %vm311, 0.0
      %2826 = vst.msk [vmem:[#allocation3 + $0x50] sm:$0xff] %vm311, 0.0
      %2827 = vst.msk [vmem:[#allocation3 + $0x58] sm:$0x1] %vm315, 0.0
      %2828 = vst.msk [vmem:[#allocation3 + $0x60] sm:$0xff] %vm311, 0.0
      %2829 = vst.msk [vmem:[#allocation3 + $0x68] sm:$0xff] %vm311, 0.0
      %2830 = vst.msk [vmem:[#allocation3 + $0x70] sm:$0xff] %vm311, 0.0
      %2831 = vst.msk [vmem:[#allocation3 + $0x78] sm:$0x1] %vm315, 0.0
      %2832 = vst.msk [vmem:[#allocation3 + $0x80] sm:$0xff] %vm311, 0.0
      %2833 = vst.msk [vmem:[#allocation3 + $0x88] sm:$0xff] %vm311, 0.0
      %2834 = vst.msk [vmem:[#allocation3 + $0x90] sm:$0xff] %vm311, 0.0
      %2835 = vst.msk [vmem:[#allocation3 + $0x98] sm:$0x1] %vm315, 0.0
      %2836 = vst.msk [vmem:[#allocation3 + $0xa0] sm:$0xff] %vm311, 0.0
      %2837 = vst.msk [vmem:[#allocation3 + $0xa8] sm:$0xff] %vm311, 0.0
      %2838 = vst.msk [vmem:[#allocation3 + $0xb0] sm:$0xff] %vm311, 0.0
      %2839 = vst.msk [vmem:[#allocation3 + $0xb8] sm:$0x1] %vm315, 0.0
      %2840 = vst.msk [vmem:[#allocation3 + $0xc0] sm:$0xff] %vm311, 0.0
      %2841 = vst.msk [vmem:[#allocation3 + $0xc8] sm:$0xff] %vm311, 0.0
      %2842 = vst.msk [vmem:[#allocation3 + $0xd0] sm:$0xff] %vm311, 0.0
      %2843 = vst.msk [vmem:[#allocation3 + $0xd8] sm:$0x1] %vm315, 0.0
      %2844 = vst.msk [vmem:[#allocation3 + $0xe0] sm:$0xff] %vm311, 0.0
      %2845 = vst.msk [vmem:[#allocation3 + $0xe8] sm:$0xff] %vm311, 0.0
      %2846 = vst.msk [vmem:[#allocation3 + $0xf0] sm:$0xff] %vm311, 0.0
      %2847 = vst.msk [vmem:[#allocation3 + $0xf8] sm:$0x1] %vm315, 0.0
      %2848 = vst.msk [vmem:[#allocation3 + $0x100] sm:$0xff] %vm311, 0.0
      %2849 = vst.msk [vmem:[#allocation3 + $0x108] sm:$0xff] %vm311, 0.0
      %2850 = vst.msk [vmem:[#allocation3 + $0x110] sm:$0xff] %vm311, 0.0
      %2851 = vst.msk [vmem:[#allocation3 + $0x118] sm:$0x1] %vm315, 0.0
      %2852 = vst.msk [vmem:[#allocation3 + $0x120] sm:$0xff] %vm311, 0.0
      %2853 = vst.msk [vmem:[#allocation3 + $0x128] sm:$0xff] %vm311, 0.0
      %2854 = vst.msk [vmem:[#allocation3 + $0x130] sm:$0xff] %vm311, 0.0
      %2855 = vst.msk [vmem:[#allocation3 + $0x138] sm:$0x1] %vm315, 0.0
      %2856 = vst.msk [vmem:[#allocation3 + $0x140] sm:$0xff] %vm311, 0.0
      %2857 = vst.msk [vmem:[#allocation3 + $0x148] sm:$0xff] %vm311, 0.0
      %2858 = vst.msk [vmem:[#allocation3 + $0x150] sm:$0xff] %vm311, 0.0
      %2859 = vst.msk [vmem:[#allocation3 + $0x158] sm:$0x1] %vm315, 0.0
      %2860 = vst.msk [vmem:[#allocation3 + $0x160] sm:$0xff] %vm311, 0.0
      %2861 = vst.msk [vmem:[#allocation3 + $0x168] sm:$0xff] %vm311, 0.0
      %2862 = vst.msk [vmem:[#allocation3 + $0x170] sm:$0xff] %vm311, 0.0
      %2863 = vst.msk [vmem:[#allocation3 + $0x178] sm:$0x1] %vm315, 0.0
      %2864 = vst.msk [vmem:[#allocation3 + $0x180] sm:$0xff] %vm311, 0.0
      %2865 = vst.msk [vmem:[#allocation3 + $0x188] sm:$0xff] %vm311, 0.0
      %2866 = vst.msk [vmem:[#allocation3 + $0x190] sm:$0xff] %vm311, 0.0
      %2867 = vst.msk [vmem:[#allocation3 + $0x198] sm:$0x1] %vm315, 0.0
      %2868 = vst.msk [vmem:[#allocation3 + $0x1a0] sm:$0xff] %vm311, 0.0
      %2869 = vst.msk [vmem:[#allocation3 + $0x1a8] sm:$0xff] %vm311, 0.0
      %2870 = vst.msk [vmem:[#allocation3 + $0x1b0] sm:$0xff] %vm311, 0.0
      %2871 = vst.msk [vmem:[#allocation3 + $0x1b8] sm:$0x1] %vm315, 0.0
      %2872 = vst.msk [vmem:[#allocation3 + $0x1c0] sm:$0xff] %vm311, 0.0
      %2873 = vst.msk [vmem:[#allocation3 + $0x1c8] sm:$0xff] %vm311, 0.0
      %2874 = vst.msk [vmem:[#allocation3 + $0x1d0] sm:$0xff] %vm311, 0.0
      %2875 = vst.msk [vmem:[#allocation3 + $0x1d8] sm:$0x1] %vm315, 0.0
      %2876 = vst.msk [vmem:[#allocation3 + $0x1e0] sm:$0xff] %vm311, 0.0
      %2877 = vst.msk [vmem:[#allocation3 + $0x1e8] sm:$0xff] %vm311, 0.0
      %2878 = vst.msk [vmem:[#allocation3 + $0x1f0] sm:$0xff] %vm311, 0.0
      %2879 = vst.msk [vmem:[#allocation3 + $0x1f8] sm:$0x1] %vm315, 0.0
      %2880 = vst.msk [vmem:[#allocation3 + $0x200] sm:$0xff] %vm311, 0.0
      %2881 = vst.msk [vmem:[#allocation3 + $0x208] sm:$0xff] %vm311, 0.0
      %2882 = vst.msk [vmem:[#allocation3 + $0x210] sm:$0xff] %vm311, 0.0
      %2883 = vst.msk [vmem:[#allocation3 + $0x218] sm:$0x1] %vm315, 0.0
      %2884 = vst.msk [vmem:[#allocation3 + $0x220] sm:$0xff] %vm311, 0.0
      %2885 = vst.msk [vmem:[#allocation3 + $0x228] sm:$0xff] %vm311, 0.0
      %2886 = vst.msk [vmem:[#allocation3 + $0x230] sm:$0xff] %vm311, 0.0
      %2887 = vst.msk [vmem:[#allocation3 + $0x238] sm:$0x1] %vm315, 0.0
      %2888 = vst.msk [vmem:[#allocation3 + $0x240] sm:$0xff] %vm311, 0.0
      %2889 = vst.msk [vmem:[#allocation3 + $0x248] sm:$0xff] %vm311, 0.0
      %2890 = vst.msk [vmem:[#allocation3 + $0x250] sm:$0xff] %vm311, 0.0
      %2891 = vst.msk [vmem:[#allocation3 + $0x258] sm:$0x1] %vm315, 0.0
      %2892 = vst.msk [vmem:[#allocation3 + $0x260] sm:$0xff] %vm311, 0.0
      %2893 = vst.msk [vmem:[#allocation3 + $0x268] sm:$0xff] %vm311, 0.0
      %2894 = vst.msk [vmem:[#allocation3 + $0x270] sm:$0xff] %vm311, 0.0
      %2895 = vst.msk [vmem:[#allocation3 + $0x278] sm:$0x1] %vm315, 0.0
      %2896 = vst.msk [vmem:[#allocation3 + $0x280] sm:$0xff] %vm311, 0.0
      %2897 = vst.msk [vmem:[#allocation3 + $0x288] sm:$0xff] %vm311, 0.0
      %2898 = vst.msk [vmem:[#allocation3 + $0x290] sm:$0xff] %vm311, 0.0
      %2899 = vst.msk [vmem:[#allocation3 + $0x298] sm:$0x1] %vm315, 0.0
      %2900 = vst.msk [vmem:[#allocation3 + $0x2a0] sm:$0xff] %vm311, 0.0
      %2901 = vst.msk [vmem:[#allocation3 + $0x2a8] sm:$0xff] %vm311, 0.0
      %2902 = vst.msk [vmem:[#allocation3 + $0x2b0] sm:$0xff] %vm311, 0.0
      %2903 = vst.msk [vmem:[#allocation3 + $0x2b8] sm:$0x1] %vm315, 0.0
      %2904 = vst.msk [vmem:[#allocation3 + $0x2c0] sm:$0xff] %vm311, 0.0
      %2905 = vst.msk [vmem:[#allocation3 + $0x2c8] sm:$0xff] %vm311, 0.0
      %2906 = vst.msk [vmem:[#allocation3 + $0x2d0] sm:$0xff] %vm311, 0.0
      %2907 = vst.msk [vmem:[#allocation3 + $0x2d8] sm:$0x1] %vm315, 0.0
      %2908 = vst.msk [vmem:[#allocation3 + $0x2e0] sm:$0xff] %vm311, 0.0
      %2909 = vst.msk [vmem:[#allocation3 + $0x2e8] sm:$0xff] %vm311, 0.0
      %2910 = vst.msk [vmem:[#allocation3 + $0x2f0] sm:$0xff] %vm311, 0.0
      %2911 = vst.msk [vmem:[#allocation3 + $0x2f8] sm:$0x1] %vm315, 0.0
      %2912 = vst.msk [vmem:[#allocation3 + $0x300] sm:$0xff] %vm311, 0.0
      %2913 = vst.msk [vmem:[#allocation3 + $0x308] sm:$0xff] %vm311, 0.0
      %2914 = vst.msk [vmem:[#allocation3 + $0x310] sm:$0xff] %vm311, 0.0
      %2915 = vst.msk [vmem:[#allocation3 + $0x318] sm:$0x1] %vm315, 0.0
      %s2916 = scalar_lea.vmem [#allocation3], 256
      %2917 = vst.msk [vmem:[%s2916 + $0x8] sm:$0xff] %vm311, %v2784
      %2918 = vst.msk [vmem:[%s2916 + $0x10] sm:$0xff] %vm311, %v2785
      %2919 = vst.msk [vmem:[%s2916 + $0x28] sm:$0xff] %vm311, %v2786
      %2920 = vst.msk [vmem:[%s2916 + $0x30] sm:$0xff] %vm311, %v2787
      %2921 = vst.msk [vmem:[%s2916 + $0x48] sm:$0xff] %vm311, %v2788
      %2922 = vst.msk [vmem:[%s2916 + $0x50] sm:$0xff] %vm311, %v2789
      %2923 = vst.msk [vmem:[%s2916 + $0x68] sm:$0xff] %vm311, %v2790
      %2924 = vst.msk [vmem:[%s2916 + $0x70] sm:$0xff] %vm311, %v2791
      %2925 = vst.msk [vmem:[%s2916 + $0x88] sm:$0xff] %vm311, %v2792
      %2926 = vst.msk [vmem:[%s2916 + $0x90] sm:$0xff] %vm311, %v2793
      %2927 = vst.msk [vmem:[%s2916 + $0xa8] sm:$0xff] %vm311, %v2794
      %2928 = vst.msk [vmem:[%s2916 + $0xb0] sm:$0xff] %vm311, %v2795
      %2929 = vst.msk [vmem:[%s2916 + $0xc8] sm:$0xff] %vm311, %v2796
      %2930 = vst.msk [vmem:[%s2916 + $0xd0] sm:$0xff] %vm311, %v2797
      %2931 = vst.msk [vmem:[%s2916 + $0xe8] sm:$0xff] %vm311, %v2798
      %2932 = vst.msk [vmem:[%s2916 + $0xf0] sm:$0xff] %vm311, %v2799
      %2933 = vst.msk [vmem:[%s2916 + $0x108] sm:$0xff] %vm311, %v2800
      %2934 = vst.msk [vmem:[%s2916 + $0x110] sm:$0xff] %vm311, %v2801
      %2935 = vst.msk [vmem:[%s2916 + $0x128] sm:$0xff] %vm311, %v2802
      %2936 = vst.msk [vmem:[%s2916 + $0x130] sm:$0xff] %vm311, %v2803
      %2937 = vst.msk [vmem:[%s2916 + $0x148] sm:$0xff] %vm311, %v2804
      %2938 = vst.msk [vmem:[%s2916 + $0x150] sm:$0xff] %vm311, %v2805
      %2939 = vst.msk [vmem:[%s2916 + $0x168] sm:$0xff] %vm311, %v2806
      %2940 = vst.msk [vmem:[%s2916 + $0x170] sm:$0xff] %vm311, %v2807
      %2941 = vst.msk [vmem:[%s2916 + $0x188] sm:$0xff] %vm311, %v2808
      %2942 = vst.msk [vmem:[%s2916 + $0x190] sm:$0xff] %vm311, %v2809
      %2943 = vst.msk [vmem:[%s2916 + $0x1a8] sm:$0xff] %vm311, %v2810
      %2944 = vst.msk [vmem:[%s2916 + $0x1b0] sm:$0xff] %vm311, %v2811
      %2945 = vst.msk [vmem:[%s2916 + $0x1c8] sm:$0xff] %vm311, %v2812
      %2946 = vst.msk [vmem:[%s2916 + $0x1d0] sm:$0xff] %vm311, %v2813
      %2947 = vst.msk [vmem:[%s2916 + $0x1e8] sm:$0xff] %vm311, %v2814
      %2948 = vst.msk [vmem:[%s2916 + $0x1f0] sm:$0xff] %vm311, %v2815
      %v2949 = vld [vmem:[#allocation3 + $0xe0] sm:$0xff]
      %v2950 = vld [vmem:[#allocation3 + $0xe8] sm:$0xff]
      %v2951 = vld [vmem:[#allocation3 + $0xf0] sm:$0xff]
      %v2952 = vld [vmem:[#allocation3 + $0xf8] sm:$0x1]
      %v2953 = vld [vmem:[#allocation3 + $0x100] sm:$0xff]
      %v2954 = vld [vmem:[#allocation3 + $0x108] sm:$0xff]
      %v2955 = vld [vmem:[#allocation3 + $0x110] sm:$0xff]
      %v2956 = vld [vmem:[#allocation3 + $0x118] sm:$0x1]
      %v2957 = vld [vmem:[#allocation3 + $0x120] sm:$0xff]
      %v2958 = vld [vmem:[#allocation3 + $0x128] sm:$0xff]
      %v2959 = vld [vmem:[#allocation3 + $0x130] sm:$0xff]
      %v2960 = vld [vmem:[#allocation3 + $0x138] sm:$0x1]
      %v2961 = vld [vmem:[#allocation3 + $0x140] sm:$0xff]
      %v2962 = vld [vmem:[#allocation3 + $0x148] sm:$0xff]
      %v2963 = vld [vmem:[#allocation3 + $0x150] sm:$0xff]
      %v2964 = vld [vmem:[#allocation3 + $0x158] sm:$0x1]
      %v2965 = vld [vmem:[#allocation3 + $0x160] sm:$0xff]
      %v2966 = vld [vmem:[#allocation3 + $0x168] sm:$0xff]
      %v2967 = vld [vmem:[#allocation3 + $0x170] sm:$0xff]
      %v2968 = vld [vmem:[#allocation3 + $0x178] sm:$0x1]
      %v2969 = vld [vmem:[#allocation3 + $0x180] sm:$0xff]
      %v2970 = vld [vmem:[#allocation3 + $0x188] sm:$0xff]
      %v2971 = vld [vmem:[#allocation3 + $0x190] sm:$0xff]
      %v2972 = vld [vmem:[#allocation3 + $0x198] sm:$0x1]
      %v2973 = vld [vmem:[#allocation3 + $0x1a0] sm:$0xff]
      %v2974 = vld [vmem:[#allocation3 + $0x1a8] sm:$0xff]
      %v2975 = vld [vmem:[#allocation3 + $0x1b0] sm:$0xff]
      %v2976 = vld [vmem:[#allocation3 + $0x1b8] sm:$0x1]
      %v2977 = vld [vmem:[#allocation3 + $0x1c0] sm:$0xff]
      %v2978 = vld [vmem:[#allocation3 + $0x1c8] sm:$0xff]
      %v2979 = vld [vmem:[#allocation3 + $0x1d0] sm:$0xff]
      %v2980 = vld [vmem:[#allocation3 + $0x1d8] sm:$0x1]
      %v2981 = vld [vmem:[#allocation3 + $0x1e0] sm:$0xff]
      %v2982 = vld [vmem:[#allocation3 + $0x1e8] sm:$0xff]
      %v2983 = vld [vmem:[#allocation3 + $0x1f0] sm:$0xff]
      %v2984 = vld [vmem:[#allocation3 + $0x1f8] sm:$0x1]
      %v2985 = vld [vmem:[#allocation3 + $0x200] sm:$0xff]
      %v2986 = vld [vmem:[#allocation3 + $0x208] sm:$0xff]
      %v2987 = vld [vmem:[#allocation3 + $0x210] sm:$0xff]
      %v2988 = vld [vmem:[#allocation3 + $0x218] sm:$0x1]
      %v2989 = vld [vmem:[#allocation3 + $0x220] sm:$0xff]
      %v2990 = vld [vmem:[#allocation3 + $0x228] sm:$0xff]
      %v2991 = vld [vmem:[#allocation3 + $0x230] sm:$0xff]
      %v2992 = vld [vmem:[#allocation3 + $0x238] sm:$0x1]
      %v2993 = vld [vmem:[#allocation3 + $0x240] sm:$0xff]
      %v2994 = vld [vmem:[#allocation3 + $0x248] sm:$0xff]
      %v2995 = vld [vmem:[#allocation3 + $0x250] sm:$0xff]
      %v2996 = vld [vmem:[#allocation3 + $0x258] sm:$0x1]
      %v2997 = vld [vmem:[#allocation3 + $0x260] sm:$0xff]
      %v2998 = vld [vmem:[#allocation3 + $0x268] sm:$0xff]
      %v2999 = vld [vmem:[#allocation3 + $0x270] sm:$0xff]
      %v3000 = vld [vmem:[#allocation3 + $0x278] sm:$0x1]
      %v3001 = vld [vmem:[#allocation3 + $0x280] sm:$0xff]
      %v3002 = vld [vmem:[#allocation3 + $0x288] sm:$0xff]
      %v3003 = vld [vmem:[#allocation3 + $0x290] sm:$0xff]
      %v3004 = vld [vmem:[#allocation3 + $0x298] sm:$0x1]
      %v3005 = vld [vmem:[#allocation3 + $0x2a0] sm:$0xff]
      %v3006 = vld [vmem:[#allocation3 + $0x2a8] sm:$0xff]
      %v3007 = vld [vmem:[#allocation3 + $0x2b0] sm:$0xff]
      %v3008 = vld [vmem:[#allocation3 + $0x2b8] sm:$0x1]
      %v3009 = vld [vmem:[#allocation3 + $0x2c0] sm:$0xff]
      %v3010 = vld [vmem:[#allocation3 + $0x2c8] sm:$0xff]
      %v3011 = vld [vmem:[#allocation3 + $0x2d0] sm:$0xff]
      %v3012 = vld [vmem:[#allocation3 + $0x2d8] sm:$0x1]
      %v3013 = vld [vmem:[#allocation3 + $0x2e0] sm:$0xff]
      %v3014 = vld [vmem:[#allocation3 + $0x2e8] sm:$0xff]
      %v3015 = vld [vmem:[#allocation3 + $0x2f0] sm:$0xff]
      %v3016 = vld [vmem:[#allocation3 + $0x2f8] sm:$0x1]
      %v3017 = vld [vmem:[#allocation3 + $0x300] sm:$0xff]
      %v3018 = vld [vmem:[#allocation3 + $0x308] sm:$0xff]
      %v3019 = vld [vmem:[#allocation3 + $0x310] sm:$0xff]
      %v3020 = vld [vmem:[#allocation3 + $0x318] sm:$0x1]
      %v3053 = vrot.slane %v2950, 1
      %v3054 = vrot.slane %v2951, 1
      %v3055 = vsel %vm550, %v3053, %v3054
      %v3056 = vrot.slane %v2954, 1
      %v3057 = vrot.slane %v2955, 1
      %v3058 = vsel %vm550, %v3056, %v3057
      %v3059 = vrot.slane %v2958, 1
      %v3060 = vrot.slane %v2959, 1
      %v3061 = vsel %vm550, %v3059, %v3060
      %v3062 = vrot.slane %v2962, 1
      %v3063 = vrot.slane %v2963, 1
      %v3064 = vsel %vm550, %v3062, %v3063
      %v3065 = vrot.slane %v2966, 1
      %v3066 = vrot.slane %v2967, 1
      %v3067 = vsel %vm550, %v3065, %v3066
      %v3068 = vrot.slane %v2970, 1
      %v3069 = vrot.slane %v2971, 1
      %v3070 = vsel %vm550, %v3068, %v3069
      %v3071 = vrot.slane %v2974, 1
      %v3072 = vrot.slane %v2975, 1
      %v3073 = vsel %vm550, %v3071, %v3072
      %v3074 = vrot.slane %v2978, 1
      %v3075 = vrot.slane %v2979, 1
      %v3076 = vsel %vm550, %v3074, %v3075
      %v3077 = vrot.slane %v2982, 1
      %v3078 = vrot.slane %v2983, 1
      %v3079 = vsel %vm550, %v3077, %v3078
      %v3080 = vrot.slane %v2986, 1
      %v3081 = vrot.slane %v2987, 1
      %v3082 = vsel %vm550, %v3080, %v3081
      %v3083 = vrot.slane %v2990, 1
      %v3084 = vrot.slane %v2991, 1
      %v3085 = vsel %vm550, %v3083, %v3084
      %v3086 = vrot.slane %v2994, 1
      %v3087 = vrot.slane %v2995, 1
      %v3088 = vsel %vm550, %v3086, %v3087
      %v3089 = vrot.slane %v2998, 1
      %v3090 = vrot.slane %v2999, 1
      %v3091 = vsel %vm550, %v3089, %v3090
      %v3092 = vrot.slane %v3002, 1
      %v3093 = vrot.slane %v3003, 1
      %v3094 = vsel %vm550, %v3092, %v3093
      %v3095 = vrot.slane %v3006, 1
      %v3096 = vrot.slane %v3007, 1
      %v3097 = vsel %vm550, %v3095, %v3096
      %v3098 = vrot.slane %v3010, 1
      %v3099 = vrot.slane %v3011, 1
      %v3100 = vsel %vm550, %v3098, %v3099
      %3101 = vrot.lane.b32.xlu0 %v3053, 4
      %v3102 = vpop.permute.xlu0 %3101
      %3103 = vrot.lane.b32.xlu0 %v3055, 4
      %v3104 = vpop.permute.xlu0 %3103
      %3105 = vrot.lane.b32.xlu0 %v3054, 4
      %v3106 = vpop.permute.xlu0 %3105
      %3107 = vrot.lane.b32.xlu0 %v3056, 4
      %v3108 = vpop.permute.xlu0 %3107
      %3109 = vrot.lane.b32.xlu0 %v3058, 4
      %v3110 = vpop.permute.xlu0 %3109
      %3111 = vrot.lane.b32.xlu0 %v3057, 4
      %v3112 = vpop.permute.xlu0 %3111
      %3113 = vrot.lane.b32.xlu0 %v3059, 4
      %v3114 = vpop.permute.xlu0 %3113
      %3115 = vrot.lane.b32.xlu0 %v3061, 4
      %v3116 = vpop.permute.xlu0 %3115
      %3117 = vrot.lane.b32.xlu0 %v3060, 4
      %v3118 = vpop.permute.xlu0 %3117
      %3119 = vrot.lane.b32.xlu0 %v3062, 4
      %v3120 = vpop.permute.xlu0 %3119
      %3121 = vrot.lane.b32.xlu0 %v3064, 4
      %v3122 = vpop.permute.xlu0 %3121
      %3123 = vrot.lane.b32.xlu0 %v3063, 4
      %v3124 = vpop.permute.xlu0 %3123
      %3125 = vrot.lane.b32.xlu0 %v3065, 4
      %v3126 = vpop.permute.xlu0 %3125
      %3127 = vrot.lane.b32.xlu0 %v3067, 4
      %v3128 = vpop.permute.xlu0 %3127
      %3129 = vrot.lane.b32.xlu0 %v3066, 4
      %v3130 = vpop.permute.xlu0 %3129
      %3131 = vrot.lane.b32.xlu0 %v3068, 4
      %v3132 = vpop.permute.xlu0 %3131
      %3133 = vrot.lane.b32.xlu0 %v3070, 4
      %v3134 = vpop.permute.xlu0 %3133
      %3135 = vrot.lane.b32.xlu0 %v3069, 4
      %v3136 = vpop.permute.xlu0 %3135
      %3137 = vrot.lane.b32.xlu0 %v3071, 4
      %v3138 = vpop.permute.xlu0 %3137
      %3139 = vrot.lane.b32.xlu0 %v3073, 4
      %v3140 = vpop.permute.xlu0 %3139
      %3141 = vrot.lane.b32.xlu0 %v3072, 4
      %v3142 = vpop.permute.xlu0 %3141
      %3143 = vrot.lane.b32.xlu0 %v3074, 4
      %v3144 = vpop.permute.xlu0 %3143
      %3145 = vrot.lane.b32.xlu0 %v3076, 4
      %v3146 = vpop.permute.xlu0 %3145
      %3147 = vrot.lane.b32.xlu0 %v3075, 4
      %v3148 = vpop.permute.xlu0 %3147
      %3149 = vrot.lane.b32.xlu0 %v3077, 4
      %v3150 = vpop.permute.xlu0 %3149
      %3151 = vrot.lane.b32.xlu0 %v3079, 4
      %v3152 = vpop.permute.xlu0 %3151
      %3153 = vrot.lane.b32.xlu0 %v3078, 4
      %v3154 = vpop.permute.xlu0 %3153
      %3155 = vrot.lane.b32.xlu0 %v3080, 4
      %v3156 = vpop.permute.xlu0 %3155
      %3157 = vrot.lane.b32.xlu0 %v3082, 4
      %v3158 = vpop.permute.xlu0 %3157
      %3159 = vrot.lane.b32.xlu0 %v3081, 4
      %v3160 = vpop.permute.xlu0 %3159
      %3161 = vrot.lane.b32.xlu0 %v3083, 4
      %v3162 = vpop.permute.xlu0 %3161
      %3163 = vrot.lane.b32.xlu0 %v3085, 4
      %v3164 = vpop.permute.xlu0 %3163
      %3165 = vrot.lane.b32.xlu0 %v3084, 4
      %v3166 = vpop.permute.xlu0 %3165
      %3167 = vrot.lane.b32.xlu0 %v3086, 4
      %v3168 = vpop.permute.xlu0 %3167
      %3169 = vrot.lane.b32.xlu0 %v3088, 4
      %v3170 = vpop.permute.xlu0 %3169
      %3171 = vrot.lane.b32.xlu0 %v3087, 4
      %v3172 = vpop.permute.xlu0 %3171
      %3173 = vrot.lane.b32.xlu0 %v3089, 4
      %v3174 = vpop.permute.xlu0 %3173
      %3175 = vrot.lane.b32.xlu0 %v3091, 4
      %v3176 = vpop.permute.xlu0 %3175
      %3177 = vrot.lane.b32.xlu0 %v3090, 4
      %v3178 = vpop.permute.xlu0 %3177
      %3179 = vrot.lane.b32.xlu0 %v3092, 4
      %v3180 = vpop.permute.xlu0 %3179
      %3181 = vrot.lane.b32.xlu0 %v3094, 4
      %v3182 = vpop.permute.xlu0 %3181
      %3183 = vrot.lane.b32.xlu0 %v3093, 4
      %v3184 = vpop.permute.xlu0 %3183
      %3185 = vrot.lane.b32.xlu0 %v3095, 4
      %v3186 = vpop.permute.xlu0 %3185
      %3187 = vrot.lane.b32.xlu0 %v3097, 4
      %v3188 = vpop.permute.xlu0 %3187
      %3189 = vrot.lane.b32.xlu0 %v3096, 4
      %v3190 = vpop.permute.xlu0 %3189
      %3191 = vrot.lane.b32.xlu0 %v3098, 4
      %v3192 = vpop.permute.xlu0 %3191
      %3193 = vrot.lane.b32.xlu0 %v3100, 4
      %v3194 = vpop.permute.xlu0 %3193
      %3195 = vrot.lane.b32.xlu0 %v3099, 4
      %v3196 = vpop.permute.xlu0 %3195
      %v3261 = vrot.slane %v2950, 2
      %v3262 = vrot.slane %v2951, 2
      %v3263 = vsel %vm759, %v3261, %v3262
      %v3264 = vrot.slane %v2952, 2
      %v3265 = vsel %vm759, %v3262, %v3264
      %v3266 = vrot.slane %v2954, 2
      %v3267 = vrot.slane %v2955, 2
      %v3268 = vsel %vm759, %v3266, %v3267
      %v3269 = vrot.slane %v2956, 2
      %v3270 = vsel %vm759, %v3267, %v3269
      %v3271 = vrot.slane %v2958, 2
      %v3272 = vrot.slane %v2959, 2
      %v3273 = vsel %vm759, %v3271, %v3272
      %v3274 = vrot.slane %v2960, 2
      %v3275 = vsel %vm759, %v3272, %v3274
      %v3276 = vrot.slane %v2962, 2
      %v3277 = vrot.slane %v2963, 2
      %v3278 = vsel %vm759, %v3276, %v3277
      %v3279 = vrot.slane %v2964, 2
      %v3280 = vsel %vm759, %v3277, %v3279
      %v3281 = vrot.slane %v2966, 2
      %v3282 = vrot.slane %v2967, 2
      %v3283 = vsel %vm759, %v3281, %v3282
      %v3284 = vrot.slane %v2968, 2
      %v3285 = vsel %vm759, %v3282, %v3284
      %v3286 = vrot.slane %v2970, 2
      %v3287 = vrot.slane %v2971, 2
      %v3288 = vsel %vm759, %v3286, %v3287
      %v3289 = vrot.slane %v2972, 2
      %v3290 = vsel %vm759, %v3287, %v3289
      %v3291 = vrot.slane %v2974, 2
      %v3292 = vrot.slane %v2975, 2
      %v3293 = vsel %vm759, %v3291, %v3292
      %v3294 = vrot.slane %v2976, 2
      %v3295 = vsel %vm759, %v3292, %v3294
      %v3296 = vrot.slane %v2978, 2
      %v3297 = vrot.slane %v2979, 2
      %v3298 = vsel %vm759, %v3296, %v3297
      %v3299 = vrot.slane %v2980, 2
      %v3300 = vsel %vm759, %v3297, %v3299
      %v3301 = vrot.slane %v2982, 2
      %v3302 = vrot.slane %v2983, 2
      %v3303 = vsel %vm759, %v3301, %v3302
      %v3304 = vrot.slane %v2984, 2
      %v3305 = vsel %vm759, %v3302, %v3304
      %v3306 = vrot.slane %v2986, 2
      %v3307 = vrot.slane %v2987, 2
      %v3308 = vsel %vm759, %v3306, %v3307
      %v3309 = vrot.slane %v2988, 2
      %v3310 = vsel %vm759, %v3307, %v3309
      %v3311 = vrot.slane %v2990, 2
      %v3312 = vrot.slane %v2991, 2
      %v3313 = vsel %vm759, %v3311, %v3312
      %v3314 = vrot.slane %v2992, 2
      %v3315 = vsel %vm759, %v3312, %v3314
      %v3316 = vrot.slane %v2994, 2
      %v3317 = vrot.slane %v2995, 2
      %v3318 = vsel %vm759, %v3316, %v3317
      %v3319 = vrot.slane %v2996, 2
      %v3320 = vsel %vm759, %v3317, %v3319
      %v3321 = vrot.slane %v2998, 2
      %v3322 = vrot.slane %v2999, 2
      %v3323 = vsel %vm759, %v3321, %v3322
      %v3324 = vrot.slane %v3000, 2
      %v3325 = vsel %vm759, %v3322, %v3324
      %v3326 = vrot.slane %v3002, 2
      %v3327 = vrot.slane %v3003, 2
      %v3328 = vsel %vm759, %v3326, %v3327
      %v3329 = vrot.slane %v3004, 2
      %v3330 = vsel %vm759, %v3327, %v3329
      %v3331 = vrot.slane %v3006, 2
      %v3332 = vrot.slane %v3007, 2
      %v3333 = vsel %vm759, %v3331, %v3332
      %v3334 = vrot.slane %v3008, 2
      %v3335 = vsel %vm759, %v3332, %v3334
      %v3336 = vrot.slane %v3010, 2
      %v3337 = vrot.slane %v3011, 2
      %v3338 = vsel %vm759, %v3336, %v3337
      %v3339 = vrot.slane %v3012, 2
      %v3340 = vsel %vm759, %v3337, %v3339
      %3341 = vrot.lane.b32.xlu0 %v3261, 8
      %v3342 = vpop.permute.xlu0 %3341
      %3343 = vrot.lane.b32.xlu0 %v3263, 8
      %v3344 = vpop.permute.xlu0 %3343
      %3345 = vrot.lane.b32.xlu0 %v3265, 8
      %v3346 = vpop.permute.xlu0 %3345
      %3347 = vrot.lane.b32.xlu0 %v3266, 8
      %v3348 = vpop.permute.xlu0 %3347
      %3349 = vrot.lane.b32.xlu0 %v3268, 8
      %v3350 = vpop.permute.xlu0 %3349
      %3351 = vrot.lane.b32.xlu0 %v3270, 8
      %v3352 = vpop.permute.xlu0 %3351
      %3353 = vrot.lane.b32.xlu0 %v3271, 8
      %v3354 = vpop.permute.xlu0 %3353
      %3355 = vrot.lane.b32.xlu0 %v3273, 8
      %v3356 = vpop.permute.xlu0 %3355
      %3357 = vrot.lane.b32.xlu0 %v3275, 8
      %v3358 = vpop.permute.xlu0 %3357
      %3359 = vrot.lane.b32.xlu0 %v3276, 8
      %v3360 = vpop.permute.xlu0 %3359
      %3361 = vrot.lane.b32.xlu0 %v3278, 8
      %v3362 = vpop.permute.xlu0 %3361
      %3363 = vrot.lane.b32.xlu0 %v3280, 8
      %v3364 = vpop.permute.xlu0 %3363
      %3365 = vrot.lane.b32.xlu0 %v3281, 8
      %v3366 = vpop.permute.xlu0 %3365
      %3367 = vrot.lane.b32.xlu0 %v3283, 8
      %v3368 = vpop.permute.xlu0 %3367
      %3369 = vrot.lane.b32.xlu0 %v3285, 8
      %v3370 = vpop.permute.xlu0 %3369
      %3371 = vrot.lane.b32.xlu0 %v3286, 8
      %v3372 = vpop.permute.xlu0 %3371
      %3373 = vrot.lane.b32.xlu0 %v3288, 8
      %v3374 = vpop.permute.xlu0 %3373
      %3375 = vrot.lane.b32.xlu0 %v3290, 8
      %v3376 = vpop.permute.xlu0 %3375
      %3377 = vrot.lane.b32.xlu0 %v3291, 8
      %v3378 = vpop.permute.xlu0 %3377
      %3379 = vrot.lane.b32.xlu0 %v3293, 8
      %v3380 = vpop.permute.xlu0 %3379
      %3381 = vrot.lane.b32.xlu0 %v3295, 8
      %v3382 = vpop.permute.xlu0 %3381
      %3383 = vrot.lane.b32.xlu0 %v3296, 8
      %v3384 = vpop.permute.xlu0 %3383
      %3385 = vrot.lane.b32.xlu0 %v3298, 8
      %v3386 = vpop.permute.xlu0 %3385
      %3387 = vrot.lane.b32.xlu0 %v3300, 8
      %v3388 = vpop.permute.xlu0 %3387
      %3389 = vrot.lane.b32.xlu0 %v3301, 8
      %v3390 = vpop.permute.xlu0 %3389
      %3391 = vrot.lane.b32.xlu0 %v3303, 8
      %v3392 = vpop.permute.xlu0 %3391
      %3393 = vrot.lane.b32.xlu0 %v3305, 8
      %v3394 = vpop.permute.xlu0 %3393
      %3395 = vrot.lane.b32.xlu0 %v3306, 8
      %v3396 = vpop.permute.xlu0 %3395
      %3397 = vrot.lane.b32.xlu0 %v3308, 8
      %v3398 = vpop.permute.xlu0 %3397
      %3399 = vrot.lane.b32.xlu0 %v3310, 8
      %v3400 = vpop.permute.xlu0 %3399
      %3401 = vrot.lane.b32.xlu0 %v3311, 8
      %v3402 = vpop.permute.xlu0 %3401
      %3403 = vrot.lane.b32.xlu0 %v3313, 8
      %v3404 = vpop.permute.xlu0 %3403
      %3405 = vrot.lane.b32.xlu0 %v3315, 8
      %v3406 = vpop.permute.xlu0 %3405
      %3407 = vrot.lane.b32.xlu0 %v3316, 8
      %v3408 = vpop.permute.xlu0 %3407
      %3409 = vrot.lane.b32.xlu0 %v3318, 8
      %v3410 = vpop.permute.xlu0 %3409
      %3411 = vrot.lane.b32.xlu0 %v3320, 8
      %v3412 = vpop.permute.xlu0 %3411
      %3413 = vrot.lane.b32.xlu0 %v3321, 8
      %v3414 = vpop.permute.xlu0 %3413
      %3415 = vrot.lane.b32.xlu0 %v3323, 8
      %v3416 = vpop.permute.xlu0 %3415
      %3417 = vrot.lane.b32.xlu0 %v3325, 8
      %v3418 = vpop.permute.xlu0 %3417
      %3419 = vrot.lane.b32.xlu0 %v3326, 8
      %v3420 = vpop.permute.xlu0 %3419
      %3421 = vrot.lane.b32.xlu0 %v3328, 8
      %v3422 = vpop.permute.xlu0 %3421
      %3423 = vrot.lane.b32.xlu0 %v3330, 8
      %v3424 = vpop.permute.xlu0 %3423
      %3425 = vrot.lane.b32.xlu0 %v3331, 8
      %v3426 = vpop.permute.xlu0 %3425
      %3427 = vrot.lane.b32.xlu0 %v3333, 8
      %v3428 = vpop.permute.xlu0 %3427
      %3429 = vrot.lane.b32.xlu0 %v3335, 8
      %v3430 = vpop.permute.xlu0 %3429
      %3431 = vrot.lane.b32.xlu0 %v3336, 8
      %v3432 = vpop.permute.xlu0 %3431
      %3433 = vrot.lane.b32.xlu0 %v3338, 8
      %v3434 = vpop.permute.xlu0 %3433
      %3435 = vrot.lane.b32.xlu0 %v3340, 8
      %v3436 = vpop.permute.xlu0 %3435
      %3503 = vrot.lane.b32.xlu0 %v2953, 12
      %v3504 = vpop.permute.xlu0 %3503
      %3505 = vrot.lane.b32.xlu0 %v2954, 12
      %v3506 = vpop.permute.xlu0 %3505
      %3507 = vrot.lane.b32.xlu0 %v2955, 12
      %v3508 = vpop.permute.xlu0 %3507
      %3509 = vrot.lane.b32.xlu0 %v2957, 12
      %v3510 = vpop.permute.xlu0 %3509
      %3511 = vrot.lane.b32.xlu0 %v2958, 12
      %v3512 = vpop.permute.xlu0 %3511
      %3513 = vrot.lane.b32.xlu0 %v2959, 12
      %v3514 = vpop.permute.xlu0 %3513
      %3515 = vrot.lane.b32.xlu0 %v2961, 12
      %v3516 = vpop.permute.xlu0 %3515
      %3517 = vrot.lane.b32.xlu0 %v2962, 12
      %v3518 = vpop.permute.xlu0 %3517
      %3519 = vrot.lane.b32.xlu0 %v2963, 12
      %v3520 = vpop.permute.xlu0 %3519
      %3521 = vrot.lane.b32.xlu0 %v2965, 12
      %v3522 = vpop.permute.xlu0 %3521
      %3523 = vrot.lane.b32.xlu0 %v2966, 12
      %v3524 = vpop.permute.xlu0 %3523
      %3525 = vrot.lane.b32.xlu0 %v2967, 12
      %v3526 = vpop.permute.xlu0 %3525
      %3527 = vrot.lane.b32.xlu0 %v2969, 12
      %v3528 = vpop.permute.xlu0 %3527
      %3529 = vrot.lane.b32.xlu0 %v2970, 12
      %v3530 = vpop.permute.xlu0 %3529
      %3531 = vrot.lane.b32.xlu0 %v2971, 12
      %v3532 = vpop.permute.xlu0 %3531
      %3533 = vrot.lane.b32.xlu0 %v2973, 12
      %v3534 = vpop.permute.xlu0 %3533
      %3535 = vrot.lane.b32.xlu0 %v2974, 12
      %v3536 = vpop.permute.xlu0 %3535
      %3537 = vrot.lane.b32.xlu0 %v2975, 12
      %v3538 = vpop.permute.xlu0 %3537
      %3539 = vrot.lane.b32.xlu0 %v2977, 12
      %v3540 = vpop.permute.xlu0 %3539
      %3541 = vrot.lane.b32.xlu0 %v2978, 12
      %v3542 = vpop.permute.xlu0 %3541
      %3543 = vrot.lane.b32.xlu0 %v2979, 12
      %v3544 = vpop.permute.xlu0 %3543
      %3545 = vrot.lane.b32.xlu0 %v2981, 12
      %v3546 = vpop.permute.xlu0 %3545
      %3547 = vrot.lane.b32.xlu0 %v2982, 12
      %v3548 = vpop.permute.xlu0 %3547
      %3549 = vrot.lane.b32.xlu0 %v2983, 12
      %v3550 = vpop.permute.xlu0 %3549
      %3551 = vrot.lane.b32.xlu0 %v2985, 12
      %v3552 = vpop.permute.xlu0 %3551
      %3553 = vrot.lane.b32.xlu0 %v2986, 12
      %v3554 = vpop.permute.xlu0 %3553
      %3555 = vrot.lane.b32.xlu0 %v2987, 12
      %v3556 = vpop.permute.xlu0 %3555
      %3557 = vrot.lane.b32.xlu0 %v2989, 12
      %v3558 = vpop.permute.xlu0 %3557
      %3559 = vrot.lane.b32.xlu0 %v2990, 12
      %v3560 = vpop.permute.xlu0 %3559
      %3561 = vrot.lane.b32.xlu0 %v2991, 12
      %v3562 = vpop.permute.xlu0 %3561
      %3563 = vrot.lane.b32.xlu0 %v2993, 12
      %v3564 = vpop.permute.xlu0 %3563
      %3565 = vrot.lane.b32.xlu0 %v2994, 12
      %v3566 = vpop.permute.xlu0 %3565
      %3567 = vrot.lane.b32.xlu0 %v2995, 12
      %v3568 = vpop.permute.xlu0 %3567
      %3569 = vrot.lane.b32.xlu0 %v2997, 12
      %v3570 = vpop.permute.xlu0 %3569
      %3571 = vrot.lane.b32.xlu0 %v2998, 12
      %v3572 = vpop.permute.xlu0 %3571
      %3573 = vrot.lane.b32.xlu0 %v2999, 12
      %v3574 = vpop.permute.xlu0 %3573
      %3575 = vrot.lane.b32.xlu0 %v3001, 12
      %v3576 = vpop.permute.xlu0 %3575
      %3577 = vrot.lane.b32.xlu0 %v3002, 12
      %v3578 = vpop.permute.xlu0 %3577
      %3579 = vrot.lane.b32.xlu0 %v3003, 12
      %v3580 = vpop.permute.xlu0 %3579
      %3581 = vrot.lane.b32.xlu0 %v3005, 12
      %v3582 = vpop.permute.xlu0 %3581
      %3583 = vrot.lane.b32.xlu0 %v3006, 12
      %v3584 = vpop.permute.xlu0 %3583
      %3585 = vrot.lane.b32.xlu0 %v3007, 12
      %v3586 = vpop.permute.xlu0 %3585
      %3587 = vrot.lane.b32.xlu0 %v3009, 12
      %v3588 = vpop.permute.xlu0 %3587
      %3589 = vrot.lane.b32.xlu0 %v3010, 12
      %v3590 = vpop.permute.xlu0 %3589
      %3591 = vrot.lane.b32.xlu0 %v3011, 12
      %v3592 = vpop.permute.xlu0 %3591
      %3593 = vrot.lane.b32.xlu0 %v3013, 12
      %v3594 = vpop.permute.xlu0 %3593
      %3595 = vrot.lane.b32.xlu0 %v3014, 12
      %v3596 = vpop.permute.xlu0 %3595
      %3597 = vrot.lane.b32.xlu0 %v3015, 12
      %v3598 = vpop.permute.xlu0 %3597
      %v3647 = vrot.slane %v3014, 1
      %v3648 = vrot.slane %v3015, 1
      %v3649 = vsel %vm550, %v3647, %v3648
      %3650 = vrot.lane.b32.xlu0 %v3056, 16
      %v3651 = vpop.permute.xlu0 %3650
      %3652 = vrot.lane.b32.xlu0 %v3058, 16
      %v3653 = vpop.permute.xlu0 %3652
      %3654 = vrot.lane.b32.xlu0 %v3057, 16
      %v3655 = vpop.permute.xlu0 %3654
      %3656 = vrot.lane.b32.xlu0 %v3059, 16
      %v3657 = vpop.permute.xlu0 %3656
      %3658 = vrot.lane.b32.xlu0 %v3061, 16
      %v3659 = vpop.permute.xlu0 %3658
      %3660 = vrot.lane.b32.xlu0 %v3060, 16
      %v3661 = vpop.permute.xlu0 %3660
      %3662 = vrot.lane.b32.xlu0 %v3062, 16
      %v3663 = vpop.permute.xlu0 %3662
      %3664 = vrot.lane.b32.xlu0 %v3064, 16
      %v3665 = vpop.permute.xlu0 %3664
      %3666 = vrot.lane.b32.xlu0 %v3063, 16
      %v3667 = vpop.permute.xlu0 %3666
      %3668 = vrot.lane.b32.xlu0 %v3065, 16
      %v3669 = vpop.permute.xlu0 %3668
      %3670 = vrot.lane.b32.xlu0 %v3067, 16
      %v3671 = vpop.permute.xlu0 %3670
      %3672 = vrot.lane.b32.xlu0 %v3066, 16
      %v3673 = vpop.permute.xlu0 %3672
      %3674 = vrot.lane.b32.xlu0 %v3068, 16
      %v3675 = vpop.permute.xlu0 %3674
      %3676 = vrot.lane.b32.xlu0 %v3070, 16
      %v3677 = vpop.permute.xlu0 %3676
      %3678 = vrot.lane.b32.xlu0 %v3069, 16
      %v3679 = vpop.permute.xlu0 %3678
      %3680 = vrot.lane.b32.xlu0 %v3071, 16
      %v3681 = vpop.permute.xlu0 %3680
      %3682 = vrot.lane.b32.xlu0 %v3073, 16
      %v3683 = vpop.permute.xlu0 %3682
      %3684 = vrot.lane.b32.xlu0 %v3072, 16
      %v3685 = vpop.permute.xlu0 %3684
      %3686 = vrot.lane.b32.xlu0 %v3074, 16
      %v3687 = vpop.permute.xlu0 %3686
      %3688 = vrot.lane.b32.xlu0 %v3076, 16
      %v3689 = vpop.permute.xlu0 %3688
      %3690 = vrot.lane.b32.xlu0 %v3075, 16
      %v3691 = vpop.permute.xlu0 %3690
      %3692 = vrot.lane.b32.xlu0 %v3077, 16
      %v3693 = vpop.permute.xlu0 %3692
      %3694 = vrot.lane.b32.xlu0 %v3079, 16
      %v3695 = vpop.permute.xlu0 %3694
      %3696 = vrot.lane.b32.xlu0 %v3078, 16
      %v3697 = vpop.permute.xlu0 %3696
      %3698 = vrot.lane.b32.xlu0 %v3080, 16
      %v3699 = vpop.permute.xlu0 %3698
      %3700 = vrot.lane.b32.xlu0 %v3082, 16
      %v3701 = vpop.permute.xlu0 %3700
      %3702 = vrot.lane.b32.xlu0 %v3081, 16
      %v3703 = vpop.permute.xlu0 %3702
      %3704 = vrot.lane.b32.xlu0 %v3083, 16
      %v3705 = vpop.permute.xlu0 %3704
      %3706 = vrot.lane.b32.xlu0 %v3085, 16
      %v3707 = vpop.permute.xlu0 %3706
      %3708 = vrot.lane.b32.xlu0 %v3084, 16
      %v3709 = vpop.permute.xlu0 %3708
      %3710 = vrot.lane.b32.xlu0 %v3086, 16
      %v3711 = vpop.permute.xlu0 %3710
      %3712 = vrot.lane.b32.xlu0 %v3088, 16
      %v3713 = vpop.permute.xlu0 %3712
      %3714 = vrot.lane.b32.xlu0 %v3087, 16
      %v3715 = vpop.permute.xlu0 %3714
      %3716 = vrot.lane.b32.xlu0 %v3089, 16
      %v3717 = vpop.permute.xlu0 %3716
      %3718 = vrot.lane.b32.xlu0 %v3091, 16
      %v3719 = vpop.permute.xlu0 %3718
      %3720 = vrot.lane.b32.xlu0 %v3090, 16
      %v3721 = vpop.permute.xlu0 %3720
      %3722 = vrot.lane.b32.xlu0 %v3092, 16
      %v3723 = vpop.permute.xlu0 %3722
      %3724 = vrot.lane.b32.xlu0 %v3094, 16
      %v3725 = vpop.permute.xlu0 %3724
      %3726 = vrot.lane.b32.xlu0 %v3093, 16
      %v3727 = vpop.permute.xlu0 %3726
      %3728 = vrot.lane.b32.xlu0 %v3095, 16
      %v3729 = vpop.permute.xlu0 %3728
      %3730 = vrot.lane.b32.xlu0 %v3097, 16
      %v3731 = vpop.permute.xlu0 %3730
      %3732 = vrot.lane.b32.xlu0 %v3096, 16
      %v3733 = vpop.permute.xlu0 %3732
      %3734 = vrot.lane.b32.xlu0 %v3098, 16
      %v3735 = vpop.permute.xlu0 %3734
      %3736 = vrot.lane.b32.xlu0 %v3100, 16
      %v3737 = vpop.permute.xlu0 %3736
      %3738 = vrot.lane.b32.xlu0 %v3099, 16
      %v3739 = vpop.permute.xlu0 %3738
      %3740 = vrot.lane.b32.xlu0 %v3647, 16
      %v3741 = vpop.permute.xlu0 %3740
      %3742 = vrot.lane.b32.xlu0 %v3649, 16
      %v3743 = vpop.permute.xlu0 %3742
      %3744 = vrot.lane.b32.xlu0 %v3648, 16
      %v3745 = vpop.permute.xlu0 %3744
      %v3795 = vrot.slane %v3014, 2
      %v3796 = vrot.slane %v3015, 2
      %v3797 = vsel %vm759, %v3795, %v3796
      %v3798 = vrot.slane %v3016, 2
      %v3799 = vsel %vm759, %v3796, %v3798
      %3800 = vrot.lane.b32.xlu0 %v3266, 20
      %v3801 = vpop.permute.xlu0 %3800
      %3802 = vrot.lane.b32.xlu0 %v3268, 20
      %v3803 = vpop.permute.xlu0 %3802
      %3804 = vrot.lane.b32.xlu0 %v3270, 20
      %v3805 = vpop.permute.xlu0 %3804
      %3806 = vrot.lane.b32.xlu0 %v3271, 20
      %v3807 = vpop.permute.xlu0 %3806
      %3808 = vrot.lane.b32.xlu0 %v3273, 20
      %v3809 = vpop.permute.xlu0 %3808
      %3810 = vrot.lane.b32.xlu0 %v3275, 20
      %v3811 = vpop.permute.xlu0 %3810
      %3812 = vrot.lane.b32.xlu0 %v3276, 20
      %v3813 = vpop.permute.xlu0 %3812
      %3814 = vrot.lane.b32.xlu0 %v3278, 20
      %v3815 = vpop.permute.xlu0 %3814
      %3816 = vrot.lane.b32.xlu0 %v3280, 20
      %v3817 = vpop.permute.xlu0 %3816
      %3818 = vrot.lane.b32.xlu0 %v3281, 20
      %v3819 = vpop.permute.xlu0 %3818
      %3820 = vrot.lane.b32.xlu0 %v3283, 20
      %v3821 = vpop.permute.xlu0 %3820
      %3822 = vrot.lane.b32.xlu0 %v3285, 20
      %v3823 = vpop.permute.xlu0 %3822
      %3824 = vrot.lane.b32.xlu0 %v3286, 20
      %v3825 = vpop.permute.xlu0 %3824
      %3826 = vrot.lane.b32.xlu0 %v3288, 20
      %v3827 = vpop.permute.xlu0 %3826
      %3828 = vrot.lane.b32.xlu0 %v3290, 20
      %v3829 = vpop.permute.xlu0 %3828
      %3830 = vrot.lane.b32.xlu0 %v3291, 20
      %v3831 = vpop.permute.xlu0 %3830
      %3832 = vrot.lane.b32.xlu0 %v3293, 20
      %v3833 = vpop.permute.xlu0 %3832
      %3834 = vrot.lane.b32.xlu0 %v3295, 20
      %v3835 = vpop.permute.xlu0 %3834
      %3836 = vrot.lane.b32.xlu0 %v3296, 20
      %v3837 = vpop.permute.xlu0 %3836
      %3838 = vrot.lane.b32.xlu0 %v3298, 20
      %v3839 = vpop.permute.xlu0 %3838
      %3840 = vrot.lane.b32.xlu0 %v3300, 20
      %v3841 = vpop.permute.xlu0 %3840
      %3842 = vrot.lane.b32.xlu0 %v3301, 20
      %v3843 = vpop.permute.xlu0 %3842
      %3844 = vrot.lane.b32.xlu0 %v3303, 20
      %v3845 = vpop.permute.xlu0 %3844
      %3846 = vrot.lane.b32.xlu0 %v3305, 20
      %v3847 = vpop.permute.xlu0 %3846
      %3848 = vrot.lane.b32.xlu0 %v3306, 20
      %v3849 = vpop.permute.xlu0 %3848
      %3850 = vrot.lane.b32.xlu0 %v3308, 20
      %v3851 = vpop.permute.xlu0 %3850
      %3852 = vrot.lane.b32.xlu0 %v3310, 20
      %v3853 = vpop.permute.xlu0 %3852
      %3854 = vrot.lane.b32.xlu0 %v3311, 20
      %v3855 = vpop.permute.xlu0 %3854
      %3856 = vrot.lane.b32.xlu0 %v3313, 20
      %v3857 = vpop.permute.xlu0 %3856
      %3858 = vrot.lane.b32.xlu0 %v3315, 20
      %v3859 = vpop.permute.xlu0 %3858
      %3860 = vrot.lane.b32.xlu0 %v3316, 20
      %v3861 = vpop.permute.xlu0 %3860
      %3862 = vrot.lane.b32.xlu0 %v3318, 20
      %v3863 = vpop.permute.xlu0 %3862
      %3864 = vrot.lane.b32.xlu0 %v3320, 20
      %v3865 = vpop.permute.xlu0 %3864
      %3866 = vrot.lane.b32.xlu0 %v3321, 20
      %v3867 = vpop.permute.xlu0 %3866
      %3868 = vrot.lane.b32.xlu0 %v3323, 20
      %v3869 = vpop.permute.xlu0 %3868
      %3870 = vrot.lane.b32.xlu0 %v3325, 20
      %v3871 = vpop.permute.xlu0 %3870
      %3872 = vrot.lane.b32.xlu0 %v3326, 20
      %v3873 = vpop.permute.xlu0 %3872
      %3874 = vrot.lane.b32.xlu0 %v3328, 20
      %v3875 = vpop.permute.xlu0 %3874
      %3876 = vrot.lane.b32.xlu0 %v3330, 20
      %v3877 = vpop.permute.xlu0 %3876
      %3878 = vrot.lane.b32.xlu0 %v3331, 20
      %v3879 = vpop.permute.xlu0 %3878
      %3880 = vrot.lane.b32.xlu0 %v3333, 20
      %v3881 = vpop.permute.xlu0 %3880
      %3882 = vrot.lane.b32.xlu0 %v3335, 20
      %v3883 = vpop.permute.xlu0 %3882
      %3884 = vrot.lane.b32.xlu0 %v3336, 20
      %v3885 = vpop.permute.xlu0 %3884
      %3886 = vrot.lane.b32.xlu0 %v3338, 20
      %v3887 = vpop.permute.xlu0 %3886
      %3888 = vrot.lane.b32.xlu0 %v3340, 20
      %v3889 = vpop.permute.xlu0 %3888
      %3890 = vrot.lane.b32.xlu0 %v3795, 20
      %v3891 = vpop.permute.xlu0 %3890
      %3892 = vrot.lane.b32.xlu0 %v3797, 20
      %v3893 = vpop.permute.xlu0 %3892
      %3894 = vrot.lane.b32.xlu0 %v3799, 20
      %v3895 = vpop.permute.xlu0 %3894
      %3947 = vrot.lane.b32.xlu0 %v2957, 24
      %v3948 = vpop.permute.xlu0 %3947
      %3949 = vrot.lane.b32.xlu0 %v2958, 24
      %v3950 = vpop.permute.xlu0 %3949
      %3951 = vrot.lane.b32.xlu0 %v2959, 24
      %v3952 = vpop.permute.xlu0 %3951
      %3953 = vrot.lane.b32.xlu0 %v2961, 24
      %v3954 = vpop.permute.xlu0 %3953
      %3955 = vrot.lane.b32.xlu0 %v2962, 24
      %v3956 = vpop.permute.xlu0 %3955
      %3957 = vrot.lane.b32.xlu0 %v2963, 24
      %v3958 = vpop.permute.xlu0 %3957
      %3959 = vrot.lane.b32.xlu0 %v2965, 24
      %v3960 = vpop.permute.xlu0 %3959
      %3961 = vrot.lane.b32.xlu0 %v2966, 24
      %v3962 = vpop.permute.xlu0 %3961
      %3963 = vrot.lane.b32.xlu0 %v2967, 24
      %v3964 = vpop.permute.xlu0 %3963
      %3965 = vrot.lane.b32.xlu0 %v2969, 24
      %v3966 = vpop.permute.xlu0 %3965
      %3967 = vrot.lane.b32.xlu0 %v2970, 24
      %v3968 = vpop.permute.xlu0 %3967
      %3969 = vrot.lane.b32.xlu0 %v2971, 24
      %v3970 = vpop.permute.xlu0 %3969
      %3971 = vrot.lane.b32.xlu0 %v2973, 24
      %v3972 = vpop.permute.xlu0 %3971
      %3973 = vrot.lane.b32.xlu0 %v2974, 24
      %v3974 = vpop.permute.xlu0 %3973
      %3975 = vrot.lane.b32.xlu0 %v2975, 24
      %v3976 = vpop.permute.xlu0 %3975
      %3977 = vrot.lane.b32.xlu0 %v2977, 24
      %v3978 = vpop.permute.xlu0 %3977
      %3979 = vrot.lane.b32.xlu0 %v2978, 24
      %v3980 = vpop.permute.xlu0 %3979
      %3981 = vrot.lane.b32.xlu0 %v2979, 24
      %v3982 = vpop.permute.xlu0 %3981
      %3983 = vrot.lane.b32.xlu0 %v2981, 24
      %v3984 = vpop.permute.xlu0 %3983
      %3985 = vrot.lane.b32.xlu0 %v2982, 24
      %v3986 = vpop.permute.xlu0 %3985
      %3987 = vrot.lane.b32.xlu0 %v2983, 24
      %v3988 = vpop.permute.xlu0 %3987
      %3989 = vrot.lane.b32.xlu0 %v2985, 24
      %v3990 = vpop.permute.xlu0 %3989
      %3991 = vrot.lane.b32.xlu0 %v2986, 24
      %v3992 = vpop.permute.xlu0 %3991
      %3993 = vrot.lane.b32.xlu0 %v2987, 24
      %v3994 = vpop.permute.xlu0 %3993
      %3995 = vrot.lane.b32.xlu0 %v2989, 24
      %v3996 = vpop.permute.xlu0 %3995
      %3997 = vrot.lane.b32.xlu0 %v2990, 24
      %v3998 = vpop.permute.xlu0 %3997
      %3999 = vrot.lane.b32.xlu0 %v2991, 24
      %v4000 = vpop.permute.xlu0 %3999
      %4001 = vrot.lane.b32.xlu0 %v2993, 24
      %v4002 = vpop.permute.xlu0 %4001
      %4003 = vrot.lane.b32.xlu0 %v2994, 24
      %v4004 = vpop.permute.xlu0 %4003
      %4005 = vrot.lane.b32.xlu0 %v2995, 24
      %v4006 = vpop.permute.xlu0 %4005
      %4007 = vrot.lane.b32.xlu0 %v2997, 24
      %v4008 = vpop.permute.xlu0 %4007
      %4009 = vrot.lane.b32.xlu0 %v2998, 24
      %v4010 = vpop.permute.xlu0 %4009
      %4011 = vrot.lane.b32.xlu0 %v2999, 24
      %v4012 = vpop.permute.xlu0 %4011
      %4013 = vrot.lane.b32.xlu0 %v3001, 24
      %v4014 = vpop.permute.xlu0 %4013
      %4015 = vrot.lane.b32.xlu0 %v3002, 24
      %v4016 = vpop.permute.xlu0 %4015
      %4017 = vrot.lane.b32.xlu0 %v3003, 24
      %v4018 = vpop.permute.xlu0 %4017
      %4019 = vrot.lane.b32.xlu0 %v3005, 24
      %v4020 = vpop.permute.xlu0 %4019
      %4021 = vrot.lane.b32.xlu0 %v3006, 24
      %v4022 = vpop.permute.xlu0 %4021
      %4023 = vrot.lane.b32.xlu0 %v3007, 24
      %v4024 = vpop.permute.xlu0 %4023
      %4025 = vrot.lane.b32.xlu0 %v3009, 24
      %v4026 = vpop.permute.xlu0 %4025
      %4027 = vrot.lane.b32.xlu0 %v3010, 24
      %v4028 = vpop.permute.xlu0 %4027
      %4029 = vrot.lane.b32.xlu0 %v3011, 24
      %v4030 = vpop.permute.xlu0 %4029
      %4031 = vrot.lane.b32.xlu0 %v3013, 24
      %v4032 = vpop.permute.xlu0 %4031
      %4033 = vrot.lane.b32.xlu0 %v3014, 24
      %v4034 = vpop.permute.xlu0 %4033
      %4035 = vrot.lane.b32.xlu0 %v3015, 24
      %v4036 = vpop.permute.xlu0 %4035
      %4037 = vrot.lane.b32.xlu0 %v3017, 24
      %v4038 = vpop.permute.xlu0 %4037
      %4039 = vrot.lane.b32.xlu0 %v3018, 24
      %v4040 = vpop.permute.xlu0 %4039
      %4041 = vrot.lane.b32.xlu0 %v3019, 24
      %v4042 = vpop.permute.xlu0 %4041
      %v4091 = vrot.slane %v3018, 1
      %v4092 = vrot.slane %v3019, 1
      %v4093 = vsel %vm550, %v4091, %v4092
      %4094 = vrot.lane.b32.xlu0 %v3059, 28
      %v4095 = vpop.permute.xlu0 %4094
      %4096 = vrot.lane.b32.xlu0 %v3061, 28
      %v4097 = vpop.permute.xlu0 %4096
      %4098 = vrot.lane.b32.xlu0 %v3060, 28
      %v4099 = vpop.permute.xlu0 %4098
      %4100 = vrot.lane.b32.xlu0 %v3062, 28
      %v4101 = vpop.permute.xlu0 %4100
      %4102 = vrot.lane.b32.xlu0 %v3064, 28
      %v4103 = vpop.permute.xlu0 %4102
      %4104 = vrot.lane.b32.xlu0 %v3063, 28
      %v4105 = vpop.permute.xlu0 %4104
      %4106 = vrot.lane.b32.xlu0 %v3065, 28
      %v4107 = vpop.permute.xlu0 %4106
      %4108 = vrot.lane.b32.xlu0 %v3067, 28
      %v4109 = vpop.permute.xlu0 %4108
      %4110 = vrot.lane.b32.xlu0 %v3066, 28
      %v4111 = vpop.permute.xlu0 %4110
      %4112 = vrot.lane.b32.xlu0 %v3068, 28
      %v4113 = vpop.permute.xlu0 %4112
      %4114 = vrot.lane.b32.xlu0 %v3070, 28
      %v4115 = vpop.permute.xlu0 %4114
      %4116 = vrot.lane.b32.xlu0 %v3069, 28
      %v4117 = vpop.permute.xlu0 %4116
      %4118 = vrot.lane.b32.xlu0 %v3071, 28
      %v4119 = vpop.permute.xlu0 %4118
      %4120 = vrot.lane.b32.xlu0 %v3073, 28
      %v4121 = vpop.permute.xlu0 %4120
      %4122 = vrot.lane.b32.xlu0 %v3072, 28
      %v4123 = vpop.permute.xlu0 %4122
      %4124 = vrot.lane.b32.xlu0 %v3074, 28
      %v4125 = vpop.permute.xlu0 %4124
      %4126 = vrot.lane.b32.xlu0 %v3076, 28
      %v4127 = vpop.permute.xlu0 %4126
      %4128 = vrot.lane.b32.xlu0 %v3075, 28
      %v4129 = vpop.permute.xlu0 %4128
      %4130 = vrot.lane.b32.xlu0 %v3077, 28
      %v4131 = vpop.permute.xlu0 %4130
      %4132 = vrot.lane.b32.xlu0 %v3079, 28
      %v4133 = vpop.permute.xlu0 %4132
      %4134 = vrot.lane.b32.xlu0 %v3078, 28
      %v4135 = vpop.permute.xlu0 %4134
      %4136 = vrot.lane.b32.xlu0 %v3080, 28
      %v4137 = vpop.permute.xlu0 %4136
      %4138 = vrot.lane.b32.xlu0 %v3082, 28
      %v4139 = vpop.permute.xlu0 %4138
      %4140 = vrot.lane.b32.xlu0 %v3081, 28
      %v4141 = vpop.permute.xlu0 %4140
      %4142 = vrot.lane.b32.xlu0 %v3083, 28
      %v4143 = vpop.permute.xlu0 %4142
      %4144 = vrot.lane.b32.xlu0 %v3085, 28
      %v4145 = vpop.permute.xlu0 %4144
      %4146 = vrot.lane.b32.xlu0 %v3084, 28
      %v4147 = vpop.permute.xlu0 %4146
      %4148 = vrot.lane.b32.xlu0 %v3086, 28
      %v4149 = vpop.permute.xlu0 %4148
      %4150 = vrot.lane.b32.xlu0 %v3088, 28
      %v4151 = vpop.permute.xlu0 %4150
      %4152 = vrot.lane.b32.xlu0 %v3087, 28
      %v4153 = vpop.permute.xlu0 %4152
      %4154 = vrot.lane.b32.xlu0 %v3089, 28
      %v4155 = vpop.permute.xlu0 %4154
      %4156 = vrot.lane.b32.xlu0 %v3091, 28
      %v4157 = vpop.permute.xlu0 %4156
      %4158 = vrot.lane.b32.xlu0 %v3090, 28
      %v4159 = vpop.permute.xlu0 %4158
      %4160 = vrot.lane.b32.xlu0 %v3092, 28
      %v4161 = vpop.permute.xlu0 %4160
      %4162 = vrot.lane.b32.xlu0 %v3094, 28
      %v4163 = vpop.permute.xlu0 %4162
      %4164 = vrot.lane.b32.xlu0 %v3093, 28
      %v4165 = vpop.permute.xlu0 %4164
      %4166 = vrot.lane.b32.xlu0 %v3095, 28
      %v4167 = vpop.permute.xlu0 %4166
      %4168 = vrot.lane.b32.xlu0 %v3097, 28
      %v4169 = vpop.permute.xlu0 %4168
      %4170 = vrot.lane.b32.xlu0 %v3096, 28
      %v4171 = vpop.permute.xlu0 %4170
      %4172 = vrot.lane.b32.xlu0 %v3098, 28
      %v4173 = vpop.permute.xlu0 %4172
      %4174 = vrot.lane.b32.xlu0 %v3100, 28
      %v4175 = vpop.permute.xlu0 %4174
      %4176 = vrot.lane.b32.xlu0 %v3099, 28
      %v4177 = vpop.permute.xlu0 %4176
      %4178 = vrot.lane.b32.xlu0 %v3647, 28
      %v4179 = vpop.permute.xlu0 %4178
      %4180 = vrot.lane.b32.xlu0 %v3649, 28
      %v4181 = vpop.permute.xlu0 %4180
      %4182 = vrot.lane.b32.xlu0 %v3648, 28
      %v4183 = vpop.permute.xlu0 %4182
      %4184 = vrot.lane.b32.xlu0 %v4091, 28
      %v4185 = vpop.permute.xlu0 %4184
      %4186 = vrot.lane.b32.xlu0 %v4093, 28
      %v4187 = vpop.permute.xlu0 %4186
      %4188 = vrot.lane.b32.xlu0 %v4092, 28
      %v4189 = vpop.permute.xlu0 %4188
      %v4239 = vrot.slane %v3018, 2
      %v4240 = vrot.slane %v3019, 2
      %v4241 = vsel %vm759, %v4239, %v4240
      %v4242 = vrot.slane %v3020, 2
      %v4243 = vsel %vm759, %v4240, %v4242
      %4244 = vrot.lane.b32.xlu0 %v3271, 32
      %v4245 = vpop.permute.xlu0 %4244
      %4246 = vrot.lane.b32.xlu0 %v3273, 32
      %v4247 = vpop.permute.xlu0 %4246
      %4248 = vrot.lane.b32.xlu0 %v3275, 32
      %v4249 = vpop.permute.xlu0 %4248
      %4250 = vrot.lane.b32.xlu0 %v3276, 32
      %v4251 = vpop.permute.xlu0 %4250
      %4252 = vrot.lane.b32.xlu0 %v3278, 32
      %v4253 = vpop.permute.xlu0 %4252
      %4254 = vrot.lane.b32.xlu0 %v3280, 32
      %v4255 = vpop.permute.xlu0 %4254
      %4256 = vrot.lane.b32.xlu0 %v3281, 32
      %v4257 = vpop.permute.xlu0 %4256
      %4258 = vrot.lane.b32.xlu0 %v3283, 32
      %v4259 = vpop.permute.xlu0 %4258
      %4260 = vrot.lane.b32.xlu0 %v3285, 32
      %v4261 = vpop.permute.xlu0 %4260
      %4262 = vrot.lane.b32.xlu0 %v3286, 32
      %v4263 = vpop.permute.xlu0 %4262
      %4264 = vrot.lane.b32.xlu0 %v3288, 32
      %v4265 = vpop.permute.xlu0 %4264
      %4266 = vrot.lane.b32.xlu0 %v3290, 32
      %v4267 = vpop.permute.xlu0 %4266
      %4268 = vrot.lane.b32.xlu0 %v3291, 32
      %v4269 = vpop.permute.xlu0 %4268
      %4270 = vrot.lane.b32.xlu0 %v3293, 32
      %v4271 = vpop.permute.xlu0 %4270
      %4272 = vrot.lane.b32.xlu0 %v3295, 32
      %v4273 = vpop.permute.xlu0 %4272
      %4274 = vrot.lane.b32.xlu0 %v3296, 32
      %v4275 = vpop.permute.xlu0 %4274
      %4276 = vrot.lane.b32.xlu0 %v3298, 32
      %v4277 = vpop.permute.xlu0 %4276
      %4278 = vrot.lane.b32.xlu0 %v3300, 32
      %v4279 = vpop.permute.xlu0 %4278
      %4280 = vrot.lane.b32.xlu0 %v3301, 32
      %v4281 = vpop.permute.xlu0 %4280
      %4282 = vrot.lane.b32.xlu0 %v3303, 32
      %v4283 = vpop.permute.xlu0 %4282
      %4284 = vrot.lane.b32.xlu0 %v3305, 32
      %v4285 = vpop.permute.xlu0 %4284
      %4286 = vrot.lane.b32.xlu0 %v3306, 32
      %v4287 = vpop.permute.xlu0 %4286
      %4288 = vrot.lane.b32.xlu0 %v3308, 32
      %v4289 = vpop.permute.xlu0 %4288
      %4290 = vrot.lane.b32.xlu0 %v3310, 32
      %v4291 = vpop.permute.xlu0 %4290
      %4292 = vrot.lane.b32.xlu0 %v3311, 32
      %v4293 = vpop.permute.xlu0 %4292
      %4294 = vrot.lane.b32.xlu0 %v3313, 32
      %v4295 = vpop.permute.xlu0 %4294
      %4296 = vrot.lane.b32.xlu0 %v3315, 32
      %v4297 = vpop.permute.xlu0 %4296
      %4298 = vrot.lane.b32.xlu0 %v3316, 32
      %v4299 = vpop.permute.xlu0 %4298
      %4300 = vrot.lane.b32.xlu0 %v3318, 32
      %v4301 = vpop.permute.xlu0 %4300
      %4302 = vrot.lane.b32.xlu0 %v3320, 32
      %v4303 = vpop.permute.xlu0 %4302
      %4304 = vrot.lane.b32.xlu0 %v3321, 32
      %v4305 = vpop.permute.xlu0 %4304
      %4306 = vrot.lane.b32.xlu0 %v3323, 32
      %v4307 = vpop.permute.xlu0 %4306
      %4308 = vrot.lane.b32.xlu0 %v3325, 32
      %v4309 = vpop.permute.xlu0 %4308
      %4310 = vrot.lane.b32.xlu0 %v3326, 32
      %v4311 = vpop.permute.xlu0 %4310
      %4312 = vrot.lane.b32.xlu0 %v3328, 32
      %v4313 = vpop.permute.xlu0 %4312
      %4314 = vrot.lane.b32.xlu0 %v3330, 32
      %v4315 = vpop.permute.xlu0 %4314
      %4316 = vrot.lane.b32.xlu0 %v3331, 32
      %v4317 = vpop.permute.xlu0 %4316
      %4318 = vrot.lane.b32.xlu0 %v3333, 32
      %v4319 = vpop.permute.xlu0 %4318
      %4320 = vrot.lane.b32.xlu0 %v3335, 32
      %v4321 = vpop.permute.xlu0 %4320
      %4322 = vrot.lane.b32.xlu0 %v3336, 32
      %v4323 = vpop.permute.xlu0 %4322
      %4324 = vrot.lane.b32.xlu0 %v3338, 32
      %v4325 = vpop.permute.xlu0 %4324
      %4326 = vrot.lane.b32.xlu0 %v3340, 32
      %v4327 = vpop.permute.xlu0 %4326
      %4328 = vrot.lane.b32.xlu0 %v3795, 32
      %v4329 = vpop.permute.xlu0 %4328
      %4330 = vrot.lane.b32.xlu0 %v3797, 32
      %v4331 = vpop.permute.xlu0 %4330
      %4332 = vrot.lane.b32.xlu0 %v3799, 32
      %v4333 = vpop.permute.xlu0 %4332
      %4334 = vrot.lane.b32.xlu0 %v4239, 32
      %v4335 = vpop.permute.xlu0 %4334
      %4336 = vrot.lane.b32.xlu0 %v4241, 32
      %v4337 = vpop.permute.xlu0 %4336
      %4338 = vrot.lane.b32.xlu0 %v4243, 32
      %v4339 = vpop.permute.xlu0 %4338
      %v4388 = vsel %vm311, %v2949, %v3102
      %v4389 = vsel %vm311, %v2950, %v3104
      %v4390 = vsel %vm311, %v2951, %v3106
      %v4391 = vsel %vm311, %v2953, %v3108
      %v4392 = vsel %vm311, %v2954, %v3110
      %v4393 = vsel %vm311, %v2955, %v3112
      %v4394 = vsel %vm311, %v2957, %v3114
      %v4395 = vsel %vm311, %v2958, %v3116
      %v4396 = vsel %vm311, %v2959, %v3118
      %v4397 = vsel %vm311, %v2961, %v3120
      %v4398 = vsel %vm311, %v2962, %v3122
      %v4399 = vsel %vm311, %v2963, %v3124
      %v4400 = vsel %vm311, %v2965, %v3126
      %v4401 = vsel %vm311, %v2966, %v3128
      %v4402 = vsel %vm311, %v2967, %v3130
      %v4403 = vsel %vm311, %v2969, %v3132
      %v4404 = vsel %vm311, %v2970, %v3134
      %v4405 = vsel %vm311, %v2971, %v3136
      %v4406 = vsel %vm311, %v2973, %v3138
      %v4407 = vsel %vm311, %v2974, %v3140
      %v4408 = vsel %vm311, %v2975, %v3142
      %v4409 = vsel %vm311, %v2977, %v3144
      %v4410 = vsel %vm311, %v2978, %v3146
      %v4411 = vsel %vm311, %v2979, %v3148
      %v4412 = vsel %vm311, %v2981, %v3150
      %v4413 = vsel %vm311, %v2982, %v3152
      %v4414 = vsel %vm311, %v2983, %v3154
      %v4415 = vsel %vm311, %v2985, %v3156
      %v4416 = vsel %vm311, %v2986, %v3158
      %v4417 = vsel %vm311, %v2987, %v3160
      %v4418 = vsel %vm311, %v2989, %v3162
      %v4419 = vsel %vm311, %v2990, %v3164
      %v4420 = vsel %vm311, %v2991, %v3166
      %v4421 = vsel %vm311, %v2993, %v3168
      %v4422 = vsel %vm311, %v2994, %v3170
      %v4423 = vsel %vm311, %v2995, %v3172
      %v4424 = vsel %vm311, %v2997, %v3174
      %v4425 = vsel %vm311, %v2998, %v3176
      %v4426 = vsel %vm311, %v2999, %v3178
      %v4427 = vsel %vm311, %v3001, %v3180
      %v4428 = vsel %vm311, %v3002, %v3182
      %v4429 = vsel %vm311, %v3003, %v3184
      %v4430 = vsel %vm311, %v3005, %v3186
      %v4431 = vsel %vm311, %v3006, %v3188
      %v4432 = vsel %vm311, %v3007, %v3190
      %v4433 = vsel %vm311, %v3009, %v3192
      %v4434 = vsel %vm311, %v3010, %v3194
      %v4435 = vsel %vm311, %v3011, %v3196
      %v4436 = vsel %vm1935, %v4388, %v3342
      %v4437 = vsel %vm1935, %v4389, %v3344
      %v4438 = vsel %vm1935, %v4390, %v3346
      %v4439 = vsel %vm1935, %v4391, %v3348
      %v4440 = vsel %vm1935, %v4392, %v3350
      %v4441 = vsel %vm1935, %v4393, %v3352
      %v4442 = vsel %vm1935, %v4394, %v3354
      %v4443 = vsel %vm1935, %v4395, %v3356
      %v4444 = vsel %vm1935, %v4396, %v3358
      %v4445 = vsel %vm1935, %v4397, %v3360
      %v4446 = vsel %vm1935, %v4398, %v3362
      %v4447 = vsel %vm1935, %v4399, %v3364
      %v4448 = vsel %vm1935, %v4400, %v3366
      %v4449 = vsel %vm1935, %v4401, %v3368
      %v4450 = vsel %vm1935, %v4402, %v3370
      %v4451 = vsel %vm1935, %v4403, %v3372
      %v4452 = vsel %vm1935, %v4404, %v3374
      %v4453 = vsel %vm1935, %v4405, %v3376
      %v4454 = vsel %vm1935, %v4406, %v3378
      %v4455 = vsel %vm1935, %v4407, %v3380
      %v4456 = vsel %vm1935, %v4408, %v3382
      %v4457 = vsel %vm1935, %v4409, %v3384
      %v4458 = vsel %vm1935, %v4410, %v3386
      %v4459 = vsel %vm1935, %v4411, %v3388
      %v4460 = vsel %vm1935, %v4412, %v3390
      %v4461 = vsel %vm1935, %v4413, %v3392
      %v4462 = vsel %vm1935, %v4414, %v3394
      %v4463 = vsel %vm1935, %v4415, %v3396
      %v4464 = vsel %vm1935, %v4416, %v3398
      %v4465 = vsel %vm1935, %v4417, %v3400
      %v4466 = vsel %vm1935, %v4418, %v3402
      %v4467 = vsel %vm1935, %v4419, %v3404
      %v4468 = vsel %vm1935, %v4420, %v3406
      %v4469 = vsel %vm1935, %v4421, %v3408
      %v4470 = vsel %vm1935, %v4422, %v3410
      %v4471 = vsel %vm1935, %v4423, %v3412
      %v4472 = vsel %vm1935, %v4424, %v3414
      %v4473 = vsel %vm1935, %v4425, %v3416
      %v4474 = vsel %vm1935, %v4426, %v3418
      %v4475 = vsel %vm1935, %v4427, %v3420
      %v4476 = vsel %vm1935, %v4428, %v3422
      %v4477 = vsel %vm1935, %v4429, %v3424
      %v4478 = vsel %vm1935, %v4430, %v3426
      %v4479 = vsel %vm1935, %v4431, %v3428
      %v4480 = vsel %vm1935, %v4432, %v3430
      %v4481 = vsel %vm1935, %v4433, %v3432
      %v4482 = vsel %vm1935, %v4434, %v3434
      %v4483 = vsel %vm1935, %v4435, %v3436
      %v4484 = vsel %vm1984, %v4436, %v3504
      %v4485 = vsel %vm1984, %v4437, %v3506
      %v4486 = vsel %vm1984, %v4438, %v3508
      %v4487 = vsel %vm1984, %v4439, %v3510
      %v4488 = vsel %vm1984, %v4440, %v3512
      %v4489 = vsel %vm1984, %v4441, %v3514
      %v4490 = vsel %vm1984, %v4442, %v3516
      %v4491 = vsel %vm1984, %v4443, %v3518
      %v4492 = vsel %vm1984, %v4444, %v3520
      %v4493 = vsel %vm1984, %v4445, %v3522
      %v4494 = vsel %vm1984, %v4446, %v3524
      %v4495 = vsel %vm1984, %v4447, %v3526
      %v4496 = vsel %vm1984, %v4448, %v3528
      %v4497 = vsel %vm1984, %v4449, %v3530
      %v4498 = vsel %vm1984, %v4450, %v3532
      %v4499 = vsel %vm1984, %v4451, %v3534
      %v4500 = vsel %vm1984, %v4452, %v3536
      %v4501 = vsel %vm1984, %v4453, %v3538
      %v4502 = vsel %vm1984, %v4454, %v3540
      %v4503 = vsel %vm1984, %v4455, %v3542
      %v4504 = vsel %vm1984, %v4456, %v3544
      %v4505 = vsel %vm1984, %v4457, %v3546
      %v4506 = vsel %vm1984, %v4458, %v3548
      %v4507 = vsel %vm1984, %v4459, %v3550
      %v4508 = vsel %vm1984, %v4460, %v3552
      %v4509 = vsel %vm1984, %v4461, %v3554
      %v4510 = vsel %vm1984, %v4462, %v3556
      %v4511 = vsel %vm1984, %v4463, %v3558
      %v4512 = vsel %vm1984, %v4464, %v3560
      %v4513 = vsel %vm1984, %v4465, %v3562
      %v4514 = vsel %vm1984, %v4466, %v3564
      %v4515 = vsel %vm1984, %v4467, %v3566
      %v4516 = vsel %vm1984, %v4468, %v3568
      %v4517 = vsel %vm1984, %v4469, %v3570
      %v4518 = vsel %vm1984, %v4470, %v3572
      %v4519 = vsel %vm1984, %v4471, %v3574
      %v4520 = vsel %vm1984, %v4472, %v3576
      %v4521 = vsel %vm1984, %v4473, %v3578
      %v4522 = vsel %vm1984, %v4474, %v3580
      %v4523 = vsel %vm1984, %v4475, %v3582
      %v4524 = vsel %vm1984, %v4476, %v3584
      %v4525 = vsel %vm1984, %v4477, %v3586
      %v4526 = vsel %vm1984, %v4478, %v3588
      %v4527 = vsel %vm1984, %v4479, %v3590
      %v4528 = vsel %vm1984, %v4480, %v3592
      %v4529 = vsel %vm1984, %v4481, %v3594
      %v4530 = vsel %vm1984, %v4482, %v3596
      %v4531 = vsel %vm1984, %v4483, %v3598
      %v4532 = vsel %vm2033, %v4484, %v3651
      %v4533 = vsel %vm2033, %v4485, %v3653
      %v4534 = vsel %vm2033, %v4486, %v3655
      %v4535 = vsel %vm2033, %v4487, %v3657
      %v4536 = vsel %vm2033, %v4488, %v3659
      %v4537 = vsel %vm2033, %v4489, %v3661
      %v4538 = vsel %vm2033, %v4490, %v3663
      %v4539 = vsel %vm2033, %v4491, %v3665
      %v4540 = vsel %vm2033, %v4492, %v3667
      %v4541 = vsel %vm2033, %v4493, %v3669
      %v4542 = vsel %vm2033, %v4494, %v3671
      %v4543 = vsel %vm2033, %v4495, %v3673
      %v4544 = vsel %vm2033, %v4496, %v3675
      %v4545 = vsel %vm2033, %v4497, %v3677
      %v4546 = vsel %vm2033, %v4498, %v3679
      %v4547 = vsel %vm2033, %v4499, %v3681
      %v4548 = vsel %vm2033, %v4500, %v3683
      %v4549 = vsel %vm2033, %v4501, %v3685
      %v4550 = vsel %vm2033, %v4502, %v3687
      %v4551 = vsel %vm2033, %v4503, %v3689
      %v4552 = vsel %vm2033, %v4504, %v3691
      %v4553 = vsel %vm2033, %v4505, %v3693
      %v4554 = vsel %vm2033, %v4506, %v3695
      %v4555 = vsel %vm2033, %v4507, %v3697
      %v4556 = vsel %vm2033, %v4508, %v3699
      %v4557 = vsel %vm2033, %v4509, %v3701
      %v4558 = vsel %vm2033, %v4510, %v3703
      %v4559 = vsel %vm2033, %v4511, %v3705
      %v4560 = vsel %vm2033, %v4512, %v3707
      %v4561 = vsel %vm2033, %v4513, %v3709
      %v4562 = vsel %vm2033, %v4514, %v3711
      %v4563 = vsel %vm2033, %v4515, %v3713
      %v4564 = vsel %vm2033, %v4516, %v3715
      %v4565 = vsel %vm2033, %v4517, %v3717
      %v4566 = vsel %vm2033, %v4518, %v3719
      %v4567 = vsel %vm2033, %v4519, %v3721
      %v4568 = vsel %vm2033, %v4520, %v3723
      %v4569 = vsel %vm2033, %v4521, %v3725
      %v4570 = vsel %vm2033, %v4522, %v3727
      %v4571 = vsel %vm2033, %v4523, %v3729
      %v4572 = vsel %vm2033, %v4524, %v3731
      %v4573 = vsel %vm2033, %v4525, %v3733
      %v4574 = vsel %vm2033, %v4526, %v3735
      %v4575 = vsel %vm2033, %v4527, %v3737
      %v4576 = vsel %vm2033, %v4528, %v3739
      %v4577 = vsel %vm2033, %v4529, %v3741
      %v4578 = vsel %vm2033, %v4530, %v3743
      %v4579 = vsel %vm2033, %v4531, %v3745
      %v4580 = vsel %vm2082, %v4532, %v3801
      %v4581 = vsel %vm2082, %v4533, %v3803
      %v4582 = vsel %vm2082, %v4534, %v3805
      %v4583 = vsel %vm2082, %v4535, %v3807
      %v4584 = vsel %vm2082, %v4536, %v3809
      %v4585 = vsel %vm2082, %v4537, %v3811
      %v4586 = vsel %vm2082, %v4538, %v3813
      %v4587 = vsel %vm2082, %v4539, %v3815
      %v4588 = vsel %vm2082, %v4540, %v3817
      %v4589 = vsel %vm2082, %v4541, %v3819
      %v4590 = vsel %vm2082, %v4542, %v3821
      %v4591 = vsel %vm2082, %v4543, %v3823
      %v4592 = vsel %vm2082, %v4544, %v3825
      %v4593 = vsel %vm2082, %v4545, %v3827
      %v4594 = vsel %vm2082, %v4546, %v3829
      %v4595 = vsel %vm2082, %v4547, %v3831
      %v4596 = vsel %vm2082, %v4548, %v3833
      %v4597 = vsel %vm2082, %v4549, %v3835
      %v4598 = vsel %vm2082, %v4550, %v3837
      %v4599 = vsel %vm2082, %v4551, %v3839
      %v4600 = vsel %vm2082, %v4552, %v3841
      %v4601 = vsel %vm2082, %v4553, %v3843
      %v4602 = vsel %vm2082, %v4554, %v3845
      %v4603 = vsel %vm2082, %v4555, %v3847
      %v4604 = vsel %vm2082, %v4556, %v3849
      %v4605 = vsel %vm2082, %v4557, %v3851
      %v4606 = vsel %vm2082, %v4558, %v3853
      %v4607 = vsel %vm2082, %v4559, %v3855
      %v4608 = vsel %vm2082, %v4560, %v3857
      %v4609 = vsel %vm2082, %v4561, %v3859
      %v4610 = vsel %vm2082, %v4562, %v3861
      %v4611 = vsel %vm2082, %v4563, %v3863
      %v4612 = vsel %vm2082, %v4564, %v3865
      %v4613 = vsel %vm2082, %v4565, %v3867
      %v4614 = vsel %vm2082, %v4566, %v3869
      %v4615 = vsel %vm2082, %v4567, %v3871
      %v4616 = vsel %vm2082, %v4568, %v3873
      %v4617 = vsel %vm2082, %v4569, %v3875
      %v4618 = vsel %vm2082, %v4570, %v3877
      %v4619 = vsel %vm2082, %v4571, %v3879
      %v4620 = vsel %vm2082, %v4572, %v3881
      %v4621 = vsel %vm2082, %v4573, %v3883
      %v4622 = vsel %vm2082, %v4574, %v3885
      %v4623 = vsel %vm2082, %v4575, %v3887
      %v4624 = vsel %vm2082, %v4576, %v3889
      %v4625 = vsel %vm2082, %v4577, %v3891
      %v4626 = vsel %vm2082, %v4578, %v3893
      %v4627 = vsel %vm2082, %v4579, %v3895
      %v4628 = vsel %vm2131, %v4580, %v3948
      %v4629 = vsel %vm2131, %v4581, %v3950
      %v4630 = vsel %vm2131, %v4582, %v3952
      %v4631 = vsel %vm2131, %v4583, %v3954
      %v4632 = vsel %vm2131, %v4584, %v3956
      %v4633 = vsel %vm2131, %v4585, %v3958
      %v4634 = vsel %vm2131, %v4586, %v3960
      %v4635 = vsel %vm2131, %v4587, %v3962
      %v4636 = vsel %vm2131, %v4588, %v3964
      %v4637 = vsel %vm2131, %v4589, %v3966
      %v4638 = vsel %vm2131, %v4590, %v3968
      %v4639 = vsel %vm2131, %v4591, %v3970
      %v4640 = vsel %vm2131, %v4592, %v3972
      %v4641 = vsel %vm2131, %v4593, %v3974
      %v4642 = vsel %vm2131, %v4594, %v3976
      %v4643 = vsel %vm2131, %v4595, %v3978
      %v4644 = vsel %vm2131, %v4596, %v3980
      %v4645 = vsel %vm2131, %v4597, %v3982
      %v4646 = vsel %vm2131, %v4598, %v3984
      %v4647 = vsel %vm2131, %v4599, %v3986
      %v4648 = vsel %vm2131, %v4600, %v3988
      %v4649 = vsel %vm2131, %v4601, %v3990
      %v4650 = vsel %vm2131, %v4602, %v3992
      %v4651 = vsel %vm2131, %v4603, %v3994
      %v4652 = vsel %vm2131, %v4604, %v3996
      %v4653 = vsel %vm2131, %v4605, %v3998
      %v4654 = vsel %vm2131, %v4606, %v4000
      %v4655 = vsel %vm2131, %v4607, %v4002
      %v4656 = vsel %vm2131, %v4608, %v4004
      %v4657 = vsel %vm2131, %v4609, %v4006
      %v4658 = vsel %vm2131, %v4610, %v4008
      %v4659 = vsel %vm2131, %v4611, %v4010
      %v4660 = vsel %vm2131, %v4612, %v4012
      %v4661 = vsel %vm2131, %v4613, %v4014
      %v4662 = vsel %vm2131, %v4614, %v4016
      %v4663 = vsel %vm2131, %v4615, %v4018
      %v4664 = vsel %vm2131, %v4616, %v4020
      %v4665 = vsel %vm2131, %v4617, %v4022
      %v4666 = vsel %vm2131, %v4618, %v4024
      %v4667 = vsel %vm2131, %v4619, %v4026
      %v4668 = vsel %vm2131, %v4620, %v4028
      %v4669 = vsel %vm2131, %v4621, %v4030
      %v4670 = vsel %vm2131, %v4622, %v4032
      %v4671 = vsel %vm2131, %v4623, %v4034
      %v4672 = vsel %vm2131, %v4624, %v4036
      %v4673 = vsel %vm2131, %v4625, %v4038
      %v4674 = vsel %vm2131, %v4626, %v4040
      %v4675 = vsel %vm2131, %v4627, %v4042
      %v4676 = vsel %vm2180, %v4628, %v4095
      %v4677 = vsel %vm2180, %v4629, %v4097
      %v4678 = vsel %vm2180, %v4630, %v4099
      %v4679 = vsel %vm2180, %v4631, %v4101
      %v4680 = vsel %vm2180, %v4632, %v4103
      %v4681 = vsel %vm2180, %v4633, %v4105
      %v4682 = vsel %vm2180, %v4634, %v4107
      %v4683 = vsel %vm2180, %v4635, %v4109
      %v4684 = vsel %vm2180, %v4636, %v4111
      %v4685 = vsel %vm2180, %v4637, %v4113
      %v4686 = vsel %vm2180, %v4638, %v4115
      %v4687 = vsel %vm2180, %v4639, %v4117
      %v4688 = vsel %vm2180, %v4640, %v4119
      %v4689 = vsel %vm2180, %v4641, %v4121
      %v4690 = vsel %vm2180, %v4642, %v4123
      %v4691 = vsel %vm2180, %v4643, %v4125
      %v4692 = vsel %vm2180, %v4644, %v4127
      %v4693 = vsel %vm2180, %v4645, %v4129
      %v4694 = vsel %vm2180, %v4646, %v4131
      %v4695 = vsel %vm2180, %v4647, %v4133
      %v4696 = vsel %vm2180, %v4648, %v4135
      %v4697 = vsel %vm2180, %v4649, %v4137
      %v4698 = vsel %vm2180, %v4650, %v4139
      %v4699 = vsel %vm2180, %v4651, %v4141
      %v4700 = vsel %vm2180, %v4652, %v4143
      %v4701 = vsel %vm2180, %v4653, %v4145
      %v4702 = vsel %vm2180, %v4654, %v4147
      %v4703 = vsel %vm2180, %v4655, %v4149
      %v4704 = vsel %vm2180, %v4656, %v4151
      %v4705 = vsel %vm2180, %v4657, %v4153
      %v4706 = vsel %vm2180, %v4658, %v4155
      %v4707 = vsel %vm2180, %v4659, %v4157
      %v4708 = vsel %vm2180, %v4660, %v4159
      %v4709 = vsel %vm2180, %v4661, %v4161
      %v4710 = vsel %vm2180, %v4662, %v4163
      %v4711 = vsel %vm2180, %v4663, %v4165
      %v4712 = vsel %vm2180, %v4664, %v4167
      %v4713 = vsel %vm2180, %v4665, %v4169
      %v4714 = vsel %vm2180, %v4666, %v4171
      %v4715 = vsel %vm2180, %v4667, %v4173
      %v4716 = vsel %vm2180, %v4668, %v4175
      %v4717 = vsel %vm2180, %v4669, %v4177
      %v4718 = vsel %vm2180, %v4670, %v4179
      %v4719 = vsel %vm2180, %v4671, %v4181
      %v4720 = vsel %vm2180, %v4672, %v4183
      %v4721 = vsel %vm2180, %v4673, %v4185
      %v4722 = vsel %vm2180, %v4674, %v4187
      %v4723 = vsel %vm2180, %v4675, %v4189
      %v4724 = vsel %vm2229, %v4676, %v4245
      %v4725 = vsel %vm2229, %v4677, %v4247
      %v4726 = vsel %vm2229, %v4678, %v4249
      %v4727 = vsel %vm2229, %v4679, %v4251
      %v4728 = vsel %vm2229, %v4680, %v4253
      %v4729 = vsel %vm2229, %v4681, %v4255
      %v4730 = vsel %vm2229, %v4682, %v4257
      %v4731 = vsel %vm2229, %v4683, %v4259
      %v4732 = vsel %vm2229, %v4684, %v4261
      %v4733 = vsel %vm2229, %v4685, %v4263
      %v4734 = vsel %vm2229, %v4686, %v4265
      %v4735 = vsel %vm2229, %v4687, %v4267
      %v4736 = vsel %vm2229, %v4688, %v4269
      %v4737 = vsel %vm2229, %v4689, %v4271
      %v4738 = vsel %vm2229, %v4690, %v4273
      %v4739 = vsel %vm2229, %v4691, %v4275
      %v4740 = vsel %vm2229, %v4692, %v4277
      %v4741 = vsel %vm2229, %v4693, %v4279
      %v4742 = vsel %vm2229, %v4694, %v4281
      %v4743 = vsel %vm2229, %v4695, %v4283
      %v4744 = vsel %vm2229, %v4696, %v4285
      %v4745 = vsel %vm2229, %v4697, %v4287
      %v4746 = vsel %vm2229, %v4698, %v4289
      %v4747 = vsel %vm2229, %v4699, %v4291
      %v4748 = vsel %vm2229, %v4700, %v4293
      %v4749 = vsel %vm2229, %v4701, %v4295
      %v4750 = vsel %vm2229, %v4702, %v4297
      %v4751 = vsel %vm2229, %v4703, %v4299
      %v4752 = vsel %vm2229, %v4704, %v4301
      %v4753 = vsel %vm2229, %v4705, %v4303
      %v4754 = vsel %vm2229, %v4706, %v4305
      %v4755 = vsel %vm2229, %v4707, %v4307
      %v4756 = vsel %vm2229, %v4708, %v4309
      %v4757 = vsel %vm2229, %v4709, %v4311
      %v4758 = vsel %vm2229, %v4710, %v4313
      %v4759 = vsel %vm2229, %v4711, %v4315
      %v4760 = vsel %vm2229, %v4712, %v4317
      %v4761 = vsel %vm2229, %v4713, %v4319
      %v4762 = vsel %vm2229, %v4714, %v4321
      %v4763 = vsel %vm2229, %v4715, %v4323
      %v4764 = vsel %vm2229, %v4716, %v4325
      %v4765 = vsel %vm2229, %v4717, %v4327
      %v4766 = vsel %vm2229, %v4718, %v4329
      %v4767 = vsel %vm2229, %v4719, %v4331
      %v4768 = vsel %vm2229, %v4720, %v4333
      %v4769 = vsel %vm2229, %v4721, %v4335
      %v4770 = vsel %vm2229, %v4722, %v4337
      %v4771 = vsel %vm2229, %v4723, %v4339
      %v4820 = vrot.slane %v4724, 7
      %v4821 = vrot.slane %v4725, 7
      %v4822 = vsel %vm2326, %v4820, %v4821
      %v4823 = vrot.slane %v4726, 7
      %v4824 = vsel %vm2326, %v4821, %v4823
      %v4825 = vrot.slane %v4727, 7
      %v4826 = vrot.slane %v4728, 7
      %v4827 = vsel %vm2326, %v4825, %v4826
      %v4828 = vrot.slane %v4729, 7
      %v4829 = vsel %vm2326, %v4826, %v4828
      %v4830 = vrot.slane %v4730, 7
      %v4831 = vrot.slane %v4731, 7
      %v4832 = vsel %vm2326, %v4830, %v4831
      %v4833 = vrot.slane %v4732, 7
      %v4834 = vsel %vm2326, %v4831, %v4833
      %v4835 = vrot.slane %v4733, 7
      %v4836 = vrot.slane %v4734, 7
      %v4837 = vsel %vm2326, %v4835, %v4836
      %v4838 = vrot.slane %v4735, 7
      %v4839 = vsel %vm2326, %v4836, %v4838
      %v4840 = vrot.slane %v4736, 7
      %v4841 = vrot.slane %v4737, 7
      %v4842 = vsel %vm2326, %v4840, %v4841
      %v4843 = vrot.slane %v4738, 7
      %v4844 = vsel %vm2326, %v4841, %v4843
      %v4845 = vrot.slane %v4739, 7
      %v4846 = vrot.slane %v4740, 7
      %v4847 = vsel %vm2326, %v4845, %v4846
      %v4848 = vrot.slane %v4741, 7
      %v4849 = vsel %vm2326, %v4846, %v4848
      %v4850 = vrot.slane %v4742, 7
      %v4851 = vrot.slane %v4743, 7
      %v4852 = vsel %vm2326, %v4850, %v4851
      %v4853 = vrot.slane %v4744, 7
      %v4854 = vsel %vm2326, %v4851, %v4853
      %v4855 = vrot.slane %v4745, 7
      %v4856 = vrot.slane %v4746, 7
      %v4857 = vsel %vm2326, %v4855, %v4856
      %v4858 = vrot.slane %v4747, 7
      %v4859 = vsel %vm2326, %v4856, %v4858
      %v4860 = vrot.slane %v4748, 7
      %v4861 = vrot.slane %v4749, 7
      %v4862 = vsel %vm2326, %v4860, %v4861
      %v4863 = vrot.slane %v4750, 7
      %v4864 = vsel %vm2326, %v4861, %v4863
      %v4865 = vrot.slane %v4751, 7
      %v4866 = vrot.slane %v4752, 7
      %v4867 = vsel %vm2326, %v4865, %v4866
      %v4868 = vrot.slane %v4753, 7
      %v4869 = vsel %vm2326, %v4866, %v4868
      %v4870 = vrot.slane %v4754, 7
      %v4871 = vrot.slane %v4755, 7
      %v4872 = vsel %vm2326, %v4870, %v4871
      %v4873 = vrot.slane %v4756, 7
      %v4874 = vsel %vm2326, %v4871, %v4873
      %v4875 = vrot.slane %v4757, 7
      %v4876 = vrot.slane %v4758, 7
      %v4877 = vsel %vm2326, %v4875, %v4876
      %v4878 = vrot.slane %v4759, 7
      %v4879 = vsel %vm2326, %v4876, %v4878
      %v4880 = vrot.slane %v4760, 7
      %v4881 = vrot.slane %v4761, 7
      %v4882 = vsel %vm2326, %v4880, %v4881
      %v4883 = vrot.slane %v4762, 7
      %v4884 = vsel %vm2326, %v4881, %v4883
      %v4885 = vrot.slane %v4763, 7
      %v4886 = vrot.slane %v4764, 7
      %v4887 = vsel %vm2326, %v4885, %v4886
      %v4888 = vrot.slane %v4765, 7
      %v4889 = vsel %vm2326, %v4886, %v4888
      %v4890 = vrot.slane %v4766, 7
      %v4891 = vrot.slane %v4767, 7
      %v4892 = vsel %vm2326, %v4890, %v4891
      %v4893 = vrot.slane %v4768, 7
      %v4894 = vsel %vm2326, %v4891, %v4893
      %v4895 = vrot.slane %v4769, 7
      %v4896 = vrot.slane %v4770, 7
      %v4897 = vsel %vm2326, %v4895, %v4896
      %v4898 = vrot.slane %v4771, 7
      %v4899 = vsel %vm2326, %v4896, %v4898
      %v4900 = vld [vmem:[%s4] sm:$0xff]
      %v4901 = vld [vmem:[%s4 + $0x8] sm:$0xff]
      %v4902 = vld [vmem:[%s4 + $0x10] sm:$0xff]
      %v4903 = vld [vmem:[%s4 + $0x18] sm:$0xff]
      %v4904 = vld [vmem:[%s4 + $0x20] sm:$0xf]
      %v4905 = vsel %vm2412, %v4822, 0
      %v4907 = vsel %vm2412, %v4824, 0
      %v4909 = vsel %vm2412, %v4827, 0
      %v4911 = vsel %vm2412, %v4829, 0
      %v4913 = vsel %vm2412, %v4832, 0
      %v4915 = vsel %vm2412, %v4834, 0
      %v4917 = vsel %vm2412, %v4837, 0
      %v4919 = vsel %vm2412, %v4839, 0
      %v4921 = vsel %vm2412, %v4842, 0
      %v4923 = vsel %vm2412, %v4844, 0
      %v4925 = vsel %vm2412, %v4847, 0
      %v4927 = vsel %vm2412, %v4849, 0
      %v4929 = vsel %vm2412, %v4852, 0
      %v4931 = vsel %vm2412, %v4854, 0
      %v4933 = vsel %vm2412, %v4857, 0
      %v4935 = vsel %vm2412, %v4859, 0
      %v4937 = vsel %vm2412, %v4862, 0
      %v4939 = vsel %vm2412, %v4864, 0
      %v4941 = vsel %vm2412, %v4867, 0
      %v4943 = vsel %vm2412, %v4869, 0
      %v4945 = vsel %vm2412, %v4872, 0
      %v4947 = vsel %vm2412, %v4874, 0
      %v4949 = vsel %vm2412, %v4877, 0
      %v4951 = vsel %vm2412, %v4879, 0
      %v4953 = vsel %vm2412, %v4882, 0
      %v4955 = vsel %vm2412, %v4884, 0
      %v4957 = vsel %vm2412, %v4887, 0
      %v4959 = vsel %vm2412, %v4889, 0
      %v4961 = vsel %vm2412, %v4892, 0
      %v4963 = vsel %vm2412, %v4894, 0
      %v4965 = vsel %vm2412, %v4897, 0
      %v4967 = vsel %vm2412, %v4899, 0
      %v4970 = vsel %vm2477, %v4904, 0
      %4972 = vmatprep.subr.mxu0 0.0
      %4973 = vmatpush1.msra.mxu0 0.0
      %4974 = vmatprep.subr.mxu0 0.0
      %4975 = vmatpush1.msra.mxu0 0.0
      %4976 = vmatprep.subr.mxu0 0.0
      %4977 = vmatpush1.msra.mxu0 0.0
      %4978 = vmatprep.subr.mxu0 0.0
      %4979 = vmatpush1.msra.mxu0 0.0
      %4980 = vmatprep.subr.mxu0 0.0
      %4981 = vmatpush1.msra.mxu0 0.0
      %4982 = vmatprep.subr.mxu0 0.0
      %4983 = vmatpush1.msra.mxu0 0.0
      %4984 = vmatprep.subr.mxu0 0.0
      %4985 = vmatpush1.msra.mxu0 0.0
      %4986 = vmatprep.subr.mxu0 0.0
      %4987 = vmatpush1.msra.mxu0 0.0
      %4988 = vmatprep.subr.mxu0 0.0
      %4989 = vmatpush1.msra.mxu0 0.0
      %4990 = vmatprep.subr.mxu0 0.0
      %4991 = vmatpush1.msra.mxu0 0.0
      %4992 = vmatprep.subr.mxu0 0.0
      %4993 = vmatpush1.msra.mxu0 0.0
      %4994 = vmatprep.subr.mxu0 0.0
      %4995 = vmatpush1.msra.mxu0 %v4970
      %4996 = vmatprep.subr.mxu0 0.0
      %4997 = vmatpush1.msra.mxu0 %v4903
      %4998 = vmatprep.subr.mxu0 0.0
      %4999 = vmatpush1.msra.mxu0 %v4902
      %5000 = vmatprep.subr.mxu0 0.0
      %5001 = vmatpush1.msra.mxu0 %v4901
      %5002 = vmatprep.subr.mxu0 0.0
      %5003 = vmatpush1.msra.mxu0 %v4900
      %5004 = vmatprep.subr.mxu0 0.0
      %5005 = vmatpush2.msra.mxu0 0.0
      %5006 = vmatprep.subr.mxu0 0.0
      %5007 = vmatpush2.msra.mxu0 0.0
      %5008 = vmatprep.subr.mxu0 0.0
      %5009 = vmatpush2.msra.mxu0 0.0
      %5010 = vmatprep.subr.mxu0 0.0
      %5011 = vmatpush2.msra.mxu0 0.0
      %5012 = vmatprep.subr.mxu0 0.0
      %5013 = vmatpush2.msra.mxu0 0.0
      %5014 = vmatprep.subr.mxu0 0.0
      %5015 = vmatpush2.msra.mxu0 0.0
      %5016 = vmatprep.subr.mxu0 0.0
      %5017 = vmatpush2.msra.mxu0 0.0
      %5018 = vmatprep.subr.mxu0 0.0
      %5019 = vmatpush2.msra.mxu0 0.0
      %5020 = vmatprep.subr.mxu0 0.0
      %5021 = vmatpush2.msra.mxu0 0.0
      %5022 = vmatprep.subr.mxu0 0.0
      %5023 = vmatpush2.msra.mxu0 0.0
      %5024 = vmatprep.subr.mxu0 0.0
      %5025 = vmatpush2.msra.mxu0 0.0
      %5026 = vmatprep.subr.mxu0 0.0
      %5027 = vmatpush2.msra.mxu0 0.0
      %5028 = vmatprep.subr.mxu0 0.0
      %5029 = vmatpush2.msra.mxu0 0.0
      %5030 = vmatprep.subr.mxu0 0.0
      %5031 = vmatpush2.msra.mxu0 0.0
      %5032 = vmatprep.subr.mxu0 0.0
      %5033 = vmatpush2.msra.mxu0 0.0
      %5034 = vmatprep.subr.mxu0 0.0
      %5035 = vmatpush2.msra.mxu0 0.0
      %5036 = vmatprep.mubr.f32.mxu0 0.0
      %5037 = vmatmul.mubr.f32.gmra.mxu0 %v4905
      %v5038 = vpop.f32.mrf.mxu0
      %v5039 = vadd.f32 0.0, %v5038
      %v5040 = vpop.f32.mrf.mxu0
      %5041 = vmatprep.mubr.f32.mxu0 0.0
      %5042 = vmatmul.mubr.f32.gmra.mxu0 %v4907
      %v5043 = vpop.f32.mrf.mxu0
      %v5044 = vadd.f32 0.0, %v5043
      %v5045 = vpop.f32.mrf.mxu0
      %5046 = vmatprep.mubr.f32.mxu0 0.0
      %5047 = vmatmul.mubr.f32.gmra.mxu0 %v4909
      %v5048 = vpop.f32.mrf.mxu0
      %v5049 = vadd.f32 0.0, %v5048
      %v5050 = vpop.f32.mrf.mxu0
      %5051 = vmatprep.mubr.f32.mxu0 0.0
      %5052 = vmatmul.mubr.f32.gmra.mxu0 %v4911
      %v5053 = vpop.f32.mrf.mxu0
      %v5054 = vadd.f32 0.0, %v5053
      %v5055 = vpop.f32.mrf.mxu0
      %5056 = vmatprep.mubr.f32.mxu0 0.0
      %5057 = vmatmul.mubr.f32.gmra.mxu0 %v4913
      %v5058 = vpop.f32.mrf.mxu0
      %v5059 = vadd.f32 0.0, %v5058
      %v5060 = vpop.f32.mrf.mxu0
      %5061 = vmatprep.mubr.f32.mxu0 0.0
      %5062 = vmatmul.mubr.f32.gmra.mxu0 %v4915
      %v5063 = vpop.f32.mrf.mxu0
      %v5064 = vadd.f32 0.0, %v5063
      %v5065 = vpop.f32.mrf.mxu0
      %5066 = vmatprep.mubr.f32.mxu0 0.0
      %5067 = vmatmul.mubr.f32.gmra.mxu0 %v4917
      %v5068 = vpop.f32.mrf.mxu0
      %v5069 = vadd.f32 0.0, %v5068
      %v5070 = vpop.f32.mrf.mxu0
      %5071 = vmatprep.mubr.f32.mxu0 0.0
      %5072 = vmatmul.mubr.f32.gmra.mxu0 %v4919
      %v5073 = vpop.f32.mrf.mxu0
      %v5074 = vadd.f32 0.0, %v5073
      %v5075 = vpop.f32.mrf.mxu0
      %5076 = vmatprep.mubr.f32.mxu0 0.0
      %5077 = vmatmul.mubr.f32.gmra.mxu0 %v4921
      %v5078 = vpop.f32.mrf.mxu0
      %v5079 = vadd.f32 0.0, %v5078
      %v5080 = vpop.f32.mrf.mxu0
      %5081 = vmatprep.mubr.f32.mxu0 0.0
      %5082 = vmatmul.mubr.f32.gmra.mxu0 %v4923
      %v5083 = vpop.f32.mrf.mxu0
      %v5084 = vadd.f32 0.0, %v5083
      %v5085 = vpop.f32.mrf.mxu0
      %5086 = vmatprep.mubr.f32.mxu0 0.0
      %5087 = vmatmul.mubr.f32.gmra.mxu0 %v4925
      %v5088 = vpop.f32.mrf.mxu0
      %v5089 = vadd.f32 0.0, %v5088
      %v5090 = vpop.f32.mrf.mxu0
      %5091 = vmatprep.mubr.f32.mxu0 0.0
      %5092 = vmatmul.mubr.f32.gmra.mxu0 %v4927
      %v5093 = vpop.f32.mrf.mxu0
      %v5094 = vadd.f32 0.0, %v5093
      %v5095 = vpop.f32.mrf.mxu0
      %5096 = vmatprep.mubr.f32.mxu0 0.0
      %5097 = vmatmul.mubr.f32.gmra.mxu0 %v4929
      %v5098 = vpop.f32.mrf.mxu0
      %v5099 = vadd.f32 0.0, %v5098
      %v5100 = vpop.f32.mrf.mxu0
      %5101 = vmatprep.mubr.f32.mxu0 0.0
      %5102 = vmatmul.mubr.f32.gmra.mxu0 %v4931
      %v5103 = vpop.f32.mrf.mxu0
      %v5104 = vadd.f32 0.0, %v5103
      %v5105 = vpop.f32.mrf.mxu0
      %5106 = vmatprep.mubr.f32.mxu0 0.0
      %5107 = vmatmul.mubr.f32.gmra.mxu0 %v4933
      %v5108 = vpop.f32.mrf.mxu0
      %v5109 = vadd.f32 0.0, %v5108
      %v5110 = vpop.f32.mrf.mxu0
      %5111 = vmatprep.mubr.f32.mxu0 0.0
      %5112 = vmatmul.mubr.f32.gmra.mxu0 %v4935
      %v5113 = vpop.f32.mrf.mxu0
      %v5114 = vadd.f32 0.0, %v5113
      %v5115 = vpop.f32.mrf.mxu0
      %5116 = vmatprep.mubr.f32.mxu0 0.0
      %5117 = vmatmul.mubr.f32.gmra.mxu0 %v4937
      %v5118 = vpop.f32.mrf.mxu0
      %v5119 = vadd.f32 0.0, %v5118
      %v5120 = vpop.f32.mrf.mxu0
      %5121 = vmatprep.mubr.f32.mxu0 0.0
      %5122 = vmatmul.mubr.f32.gmra.mxu0 %v4939
      %v5123 = vpop.f32.mrf.mxu0
      %v5124 = vadd.f32 0.0, %v5123
      %v5125 = vpop.f32.mrf.mxu0
      %5126 = vmatprep.mubr.f32.mxu0 0.0
      %5127 = vmatmul.mubr.f32.gmra.mxu0 %v4941
      %v5128 = vpop.f32.mrf.mxu0
      %v5129 = vadd.f32 0.0, %v5128
      %v5130 = vpop.f32.mrf.mxu0
      %5131 = vmatprep.mubr.f32.mxu0 0.0
      %5132 = vmatmul.mubr.f32.gmra.mxu0 %v4943
      %v5133 = vpop.f32.mrf.mxu0
      %v5134 = vadd.f32 0.0, %v5133
      %v5135 = vpop.f32.mrf.mxu0
      %5136 = vmatprep.mubr.f32.mxu0 0.0
      %5137 = vmatmul.mubr.f32.gmra.mxu0 %v4945
      %v5138 = vpop.f32.mrf.mxu0
      %v5139 = vadd.f32 0.0, %v5138
      %v5140 = vpop.f32.mrf.mxu0
      %5141 = vmatprep.mubr.f32.mxu0 0.0
      %5142 = vmatmul.mubr.f32.gmra.mxu0 %v4947
      %v5143 = vpop.f32.mrf.mxu0
      %v5144 = vadd.f32 0.0, %v5143
      %v5145 = vpop.f32.mrf.mxu0
      %5146 = vmatprep.mubr.f32.mxu0 0.0
      %5147 = vmatmul.mubr.f32.gmra.mxu0 %v4949
      %v5148 = vpop.f32.mrf.mxu0
      %v5149 = vadd.f32 0.0, %v5148
      %v5150 = vpop.f32.mrf.mxu0
      %5151 = vmatprep.mubr.f32.mxu0 0.0
      %5152 = vmatmul.mubr.f32.gmra.mxu0 %v4951
      %v5153 = vpop.f32.mrf.mxu0
      %v5154 = vadd.f32 0.0, %v5153
      %v5155 = vpop.f32.mrf.mxu0
      %5156 = vmatprep.mubr.f32.mxu0 0.0
      %5157 = vmatmul.mubr.f32.gmra.mxu0 %v4953
      %v5158 = vpop.f32.mrf.mxu0
      %v5159 = vadd.f32 0.0, %v5158
      %v5160 = vpop.f32.mrf.mxu0
      %5161 = vmatprep.mubr.f32.mxu0 0.0
      %5162 = vmatmul.mubr.f32.gmra.mxu0 %v4955
      %v5163 = vpop.f32.mrf.mxu0
      %v5164 = vadd.f32 0.0, %v5163
      %v5165 = vpop.f32.mrf.mxu0
      %5166 = vmatprep.mubr.f32.mxu0 0.0
      %5167 = vmatmul.mubr.f32.gmra.mxu0 %v4957
      %v5168 = vpop.f32.mrf.mxu0
      %v5169 = vadd.f32 0.0, %v5168
      %v5170 = vpop.f32.mrf.mxu0
      %5171 = vmatprep.mubr.f32.mxu0 0.0
      %5172 = vmatmul.mubr.f32.gmra.mxu0 %v4959
      %v5173 = vpop.f32.mrf.mxu0
      %v5174 = vadd.f32 0.0, %v5173
      %v5175 = vpop.f32.mrf.mxu0
      %5176 = vmatprep.mubr.f32.mxu0 0.0
      %5177 = vmatmul.mubr.f32.gmra.mxu0 %v4961
      %v5178 = vpop.f32.mrf.mxu0
      %v5179 = vadd.f32 0.0, %v5178
      %v5180 = vpop.f32.mrf.mxu0
      %5181 = vmatprep.mubr.f32.mxu0 0.0
      %5182 = vmatmul.mubr.f32.gmra.mxu0 %v4963
      %v5183 = vpop.f32.mrf.mxu0
      %v5184 = vadd.f32 0.0, %v5183
      %v5185 = vpop.f32.mrf.mxu0
      %5186 = vmatprep.mubr.f32.mxu0 0.0
      %5187 = vmatmul.mubr.f32.gmra.mxu0 %v4965
      %v5188 = vpop.f32.mrf.mxu0
      %v5189 = vadd.f32 0.0, %v5188
      %v5190 = vpop.f32.mrf.mxu0
      %5191 = vmatprep.mubr.f32.mxu0 0.0
      %5192 = vmatmul.mubr.f32.gmra.mxu0 %v4967
      %v5193 = vpop.f32.mrf.mxu0
      %v5194 = vadd.f32 0.0, %v5193
      %v5195 = vpop.f32.mrf.mxu0
      %5196 = vdwg.mxu0
      %v5197 = vld [vmem:[%s5] sm:$0x1]
      %v5199 = vlaneseq
      %v5200 = vshrl.u32 %v5199, 7
      %v5201 = vsub.s32 0, %v5200
      %v5202 = vrot.slane %v5197, %v5201
      %v5204 = vmul.f32 %v5039, %v5202
      %v5205 = vmul.f32 %v5044, %v5202
      %v5206 = vmul.f32 %v5049, %v5202
      %v5207 = vmul.f32 %v5054, %v5202
      %v5208 = vmul.f32 %v5059, %v5202
      %v5209 = vmul.f32 %v5064, %v5202
      %v5210 = vmul.f32 %v5069, %v5202
      %v5211 = vmul.f32 %v5074, %v5202
      %v5212 = vmul.f32 %v5079, %v5202
      %v5213 = vmul.f32 %v5084, %v5202
      %v5214 = vmul.f32 %v5089, %v5202
      %v5215 = vmul.f32 %v5094, %v5202
      %v5216 = vmul.f32 %v5099, %v5202
      %v5217 = vmul.f32 %v5104, %v5202
      %v5218 = vmul.f32 %v5109, %v5202
      %v5219 = vmul.f32 %v5114, %v5202
      %v5220 = vmul.f32 %v5119, %v5202
      %v5221 = vmul.f32 %v5124, %v5202
      %v5222 = vmul.f32 %v5129, %v5202
      %v5223 = vmul.f32 %v5134, %v5202
      %v5224 = vmul.f32 %v5139, %v5202
      %v5225 = vmul.f32 %v5144, %v5202
      %v5226 = vmul.f32 %v5149, %v5202
      %v5227 = vmul.f32 %v5154, %v5202
      %v5228 = vmul.f32 %v5159, %v5202
      %v5229 = vmul.f32 %v5164, %v5202
      %v5230 = vmul.f32 %v5169, %v5202
      %v5231 = vmul.f32 %v5174, %v5202
      %v5232 = vmul.f32 %v5179, %v5202
      %v5233 = vmul.f32 %v5184, %v5202
      %v5234 = vmul.f32 %v5189, %v5202
      %v5235 = vmul.f32 %v5194, %v5202
      %v5236 = vld [vmem:[%s6] sm:$0x1]
      %v5238 = vlaneseq
      %v5239 = vshrl.u32 %v5238, 7
      %v5240 = vsub.s32 0, %v5239
      %v5241 = vrot.slane %v5236, %v5240
      %v5243 = vadd.f32 %v5204, %v5241
      %v5244 = vadd.f32 %v5205, %v5241
      %v5245 = vadd.f32 %v5206, %v5241
      %v5246 = vadd.f32 %v5207, %v5241
      %v5247 = vadd.f32 %v5208, %v5241
      %v5248 = vadd.f32 %v5209, %v5241
      %v5249 = vadd.f32 %v5210, %v5241
      %v5250 = vadd.f32 %v5211, %v5241
      %v5251 = vadd.f32 %v5212, %v5241
      %v5252 = vadd.f32 %v5213, %v5241
      %v5253 = vadd.f32 %v5214, %v5241
      %v5254 = vadd.f32 %v5215, %v5241
      %v5255 = vadd.f32 %v5216, %v5241
      %v5256 = vadd.f32 %v5217, %v5241
      %v5257 = vadd.f32 %v5218, %v5241
      %v5258 = vadd.f32 %v5219, %v5241
      %v5259 = vadd.f32 %v5220, %v5241
      %v5260 = vadd.f32 %v5221, %v5241
      %v5261 = vadd.f32 %v5222, %v5241
      %v5262 = vadd.f32 %v5223, %v5241
      %v5263 = vadd.f32 %v5224, %v5241
      %v5264 = vadd.f32 %v5225, %v5241
      %v5265 = vadd.f32 %v5226, %v5241
      %v5266 = vadd.f32 %v5227, %v5241
      %v5267 = vadd.f32 %v5228, %v5241
      %v5268 = vadd.f32 %v5229, %v5241
      %v5269 = vadd.f32 %v5230, %v5241
      %v5270 = vadd.f32 %v5231, %v5241
      %v5271 = vadd.f32 %v5232, %v5241
      %v5272 = vadd.f32 %v5233, %v5241
      %v5273 = vadd.f32 %v5234, %v5241
      %v5274 = vadd.f32 %v5235, %v5241
      %v5275 = vadd.f32 %v5243, %v279
      %v5276 = vadd.f32 %v5244, %v280
      %v5277 = vadd.f32 %v5245, %v281
      %v5278 = vadd.f32 %v5246, %v282
      %v5279 = vadd.f32 %v5247, %v283
      %v5280 = vadd.f32 %v5248, %v284
      %v5281 = vadd.f32 %v5249, %v285
      %v5282 = vadd.f32 %v5250, %v286
      %v5283 = vadd.f32 %v5251, %v287
      %v5284 = vadd.f32 %v5252, %v288
      %v5285 = vadd.f32 %v5253, %v289
      %v5286 = vadd.f32 %v5254, %v290
      %v5287 = vadd.f32 %v5255, %v291
      %v5288 = vadd.f32 %v5256, %v292
      %v5289 = vadd.f32 %v5257, %v293
      %v5290 = vadd.f32 %v5258, %v294
      %v5291 = vadd.f32 %v5259, %v295
      %v5292 = vadd.f32 %v5260, %v296
      %v5293 = vadd.f32 %v5261, %v297
      %v5294 = vadd.f32 %v5262, %v298
      %v5295 = vadd.f32 %v5263, %v299
      %v5296 = vadd.f32 %v5264, %v300
      %v5297 = vadd.f32 %v5265, %v301
      %v5298 = vadd.f32 %v5266, %v302
      %v5299 = vadd.f32 %v5267, %v303
      %v5300 = vadd.f32 %v5268, %v304
      %v5301 = vadd.f32 %v5269, %v305
      %v5302 = vadd.f32 %v5270, %v306
      %v5303 = vadd.f32 %v5271, %v307
      %v5304 = vadd.f32 %v5272, %v308
      %v5305 = vadd.f32 %v5273, %v309
      %v5306 = vadd.f32 %v5274, %v310
      %v5307 = vmax.f32 %v5275, 0.0
      %v5308 = vmax.f32 %v5276, 0.0
      %v5309 = vmax.f32 %v5277, 0.0
      %v5310 = vmax.f32 %v5278, 0.0
      %v5311 = vmax.f32 %v5279, 0.0
      %v5312 = vmax.f32 %v5280, 0.0
      %v5313 = vmax.f32 %v5281, 0.0
      %v5314 = vmax.f32 %v5282, 0.0
      %v5315 = vmax.f32 %v5283, 0.0
      %v5316 = vmax.f32 %v5284, 0.0
      %v5317 = vmax.f32 %v5285, 0.0
      %v5318 = vmax.f32 %v5286, 0.0
      %v5319 = vmax.f32 %v5287, 0.0
      %v5320 = vmax.f32 %v5288, 0.0
      %v5321 = vmax.f32 %v5289, 0.0
      %v5322 = vmax.f32 %v5290, 0.0
      %v5323 = vmax.f32 %v5291, 0.0
      %v5324 = vmax.f32 %v5292, 0.0
      %v5325 = vmax.f32 %v5293, 0.0
      %v5326 = vmax.f32 %v5294, 0.0
      %v5327 = vmax.f32 %v5295, 0.0
      %v5328 = vmax.f32 %v5296, 0.0
      %v5329 = vmax.f32 %v5297, 0.0
      %v5330 = vmax.f32 %v5298, 0.0
      %v5331 = vmax.f32 %v5299, 0.0
      %v5332 = vmax.f32 %v5300, 0.0
      %v5333 = vmax.f32 %v5301, 0.0
      %v5334 = vmax.f32 %v5302, 0.0
      %v5335 = vmax.f32 %v5303, 0.0
      %v5336 = vmax.f32 %v5304, 0.0
      %v5337 = vmax.f32 %v5305, 0.0
      %v5338 = vmax.f32 %v5306, 0.0
      %5339 = vxpose.xlu0.b32.start [1/16] %v5307, 128
      %5340 = vxpose.xlu0.b32.cont [2/16] %v5308, 128
      %5341 = vxpose.xlu0.b32.cont [3/16] %v5309, 128
      %5342 = vxpose.xlu0.b32.cont [4/16] %v5310, 128
      %5343 = vxpose.xlu0.b32.cont [5/16] %v5311, 128
      %5344 = vxpose.xlu0.b32.cont [6/16] %v5312, 128
      %5345 = vxpose.xlu0.b32.cont [7/16] %v5313, 128
      %5346 = vxpose.xlu0.b32.cont [8/16] %v5314, 128
      %5347 = vxpose.xlu0.b32.cont [9/16] %v5315, 128
      %5348 = vxpose.xlu0.b32.cont [10/16] %v5316, 128
      %5349 = vxpose.xlu0.b32.cont [11/16] %v5317, 128
      %5350 = vxpose.xlu0.b32.cont [12/16] %v5318, 128
      %5351 = vxpose.xlu0.b32.cont [13/16] %v5319, 128
      %5352 = vxpose.xlu0.b32.cont [14/16] %v5320, 128
      %5353 = vxpose.xlu0.b32.cont [15/16] %v5321, 128
      %5354 = vxpose.xlu0.b32.end [16/16] %v5322, 128
      %v5355 = vpop.trf.xlu0
      %v5356 = vpop.trf.xlu0
      %v5357 = vpop.trf.xlu0
      %v5358 = vpop.trf.xlu0
      %v5359 = vpop.trf.xlu0
      %v5360 = vpop.trf.xlu0
      %v5361 = vpop.trf.xlu0
      %v5362 = vpop.trf.xlu0
      %v5363 = vpop.trf.xlu0
      %v5364 = vpop.trf.xlu0
      %v5365 = vpop.trf.xlu0
      %v5366 = vpop.trf.xlu0
      %v5367 = vpop.trf.xlu0
      %v5368 = vpop.trf.xlu0
      %v5369 = vpop.trf.xlu0
      %v5370 = vpop.trf.xlu0
      %5371 = vxpose.xlu0.b32.start [1/16] %v5323, 128
      %5372 = vxpose.xlu0.b32.cont [2/16] %v5324, 128
      %5373 = vxpose.xlu0.b32.cont [3/16] %v5325, 128
      %5374 = vxpose.xlu0.b32.cont [4/16] %v5326, 128
      %5375 = vxpose.xlu0.b32.cont [5/16] %v5327, 128
      %5376 = vxpose.xlu0.b32.cont [6/16] %v5328, 128
      %5377 = vxpose.xlu0.b32.cont [7/16] %v5329, 128
      %5378 = vxpose.xlu0.b32.cont [8/16] %v5330, 128
      %5379 = vxpose.xlu0.b32.cont [9/16] %v5331, 128
      %5380 = vxpose.xlu0.b32.cont [10/16] %v5332, 128
      %5381 = vxpose.xlu0.b32.cont [11/16] %v5333, 128
      %5382 = vxpose.xlu0.b32.cont [12/16] %v5334, 128
      %5383 = vxpose.xlu0.b32.cont [13/16] %v5335, 128
      %5384 = vxpose.xlu0.b32.cont [14/16] %v5336, 128
      %5385 = vxpose.xlu0.b32.cont [15/16] %v5337, 128
      %5386 = vxpose.xlu0.b32.end [16/16] %v5338, 128
      %v5387 = vpop.trf.xlu0
      %v5388 = vpop.trf.xlu0
      %v5389 = vpop.trf.xlu0
      %v5390 = vpop.trf.xlu0
      %v5391 = vpop.trf.xlu0
      %v5392 = vpop.trf.xlu0
      %v5393 = vpop.trf.xlu0
      %v5394 = vpop.trf.xlu0
      %v5395 = vpop.trf.xlu0
      %v5396 = vpop.trf.xlu0
      %v5397 = vpop.trf.xlu0
      %v5398 = vpop.trf.xlu0
      %v5399 = vpop.trf.xlu0
      %v5400 = vpop.trf.xlu0
      %v5401 = vpop.trf.xlu0
      %v5402 = vpop.trf.xlu0
      %v5405 = vcombine.low %v5355, %v5387
      %5407 = vst [vmem:[%s278] sm:$0xff] %v5405
      %p5408 = scmp.lt.s32.totalorder %s18, 1
      %s5409 = scalar_select %p5408, %s18, 1
      %s5410 = smul.addr %s5409, 2
      %s5411 = smul.addr %s5410, 4
      %s5412 = scalar_lea.vmem %s7, %s5411
      // Predicated region
      $region49: #{_basic_block_fwd.1} parent=47 // pred_check
        %p5413 = pneg %p188
      $region50: #{_basic_block_fwd.1} parent=47 // pred_check_branch
        %5415 = sbr.rel (%p5413) target = $region52
      $region51: #{_basic_block_fwd.1} parent=47 // pred_region
        _
      $region52: #{_basic_block_fwd.1} parent=47 // pred_fallthru
        _
    $region48: #{_basic_block_fwd.1} parent=5 // pred_fallthru
      _
    %p5416 = scmp.le.s32.totalorder 2, %s13
    // Predicated region
    $region53: #{_basic_block_fwd.1} parent=5 // pred_check
      %p5417 = pneg %p5416
    $region54: #{_basic_block_fwd.1} parent=5 // pred_check_branch
      %5419 = sbr.rel (%p5417) target = $region56
    $region55: #{_basic_block_fwd.1} parent=5 // pred_region
      %s5420 = ssub.s32 %s13, 2
      // Predicated region
      $region57: #{_basic_block_fwd.1} parent=55 // pred_check
        %p5421 = pneg %p194
      $region58: #{_basic_block_fwd.1} parent=55 // pred_check_branch
        %5423 = sbr.rel (%p5421) target = $region60
      $region59: #{_basic_block_fwd.1} parent=55 // pred_region
        %p5424 = scmp.lt.s32.totalorder %s19, 1
        %s5425 = scalar_select %p5424, %s19, 1
        %s5426 = smul.addr %s5425, 2
        %s5427 = smul.addr %s5426, 4
        %s5428 = scalar_lea.vmem %s7, %s5427
      $region60: #{_basic_block_fwd.1} parent=55 // pred_fallthru
        _
    $region56: #{_basic_block_fwd.1} parent=5 // pred_fallthru
      _
  $region6: #{_basic_block_fwd.1} parent=0 // loop_footer
    %s17 = sadd.s32 1, %s13
  $region7: #{_basic_block_fwd.1} parent=0 // loop_footer_branch
    %12 = sbr.rel target = $region3
  $region8: #{_basic_block_fwd.1} parent=0 // loop_exit
    _

</llo_original>
